<compile_context>
chip_gen: v7x
topology: tpu7x:2x2x1
jax: 0.10.0
libtpu: 0.0.40
codegen_flags: <defaults>
</compile_context>

<pallas_src>
import math
import functools

import jax
import jax.numpy as jnp
from jax import lax
from jax.experimental import pallas as pl
from jax.experimental.pallas import tpu as pltpu


# ----------------------------------------------------------------------------- config

def _vmem_limit_bytes():
    """Per-generation scoped-VMEM budget (v7x has only 64 MiB physical)."""
    try:
        kind = jax.devices()[0].device_kind.lower()
    except Exception:
        kind = ""
    if "v7" in kind:
        return 48 * 1024 * 1024
    return 96 * 1024 * 1024          # v5e / v6e: 128 MiB physical VMEM


def _params_1d():
    return pltpu.CompilerParams(
        dimension_semantics=("parallel",),
        vmem_limit_bytes=_vmem_limit_bytes(),
    )


# ----------------------------------------------------------------------------- helpers

def _ln(x, g, b, eps=1e-5):
    """LayerNorm over the last dim (f32 math).  x (R, D), g/b (1, D)."""
    mu = jnp.mean(x, axis=-1, keepdims=True)
    var = jnp.mean((x - mu) ** 2, axis=-1, keepdims=True)
    return (x - mu) * lax.rsqrt(var + eps) * g + b


def _row_tile(rows):
    """Largest convenient row tile that divides `rows` (sublane multiple)."""
    for t in (256, 128, 64, 32, 16, 8):
        if rows % t == 0:
            return t
    return rows


# ----------------------------------------------------------------------------- FFN

def _ffn_kernel(x_ref, g_ref, be_ref, w1_ref, b1_ref, w2_ref, b2_ref, o_ref, *, scale):
    xv = x_ref[...].astype(jnp.float32)                              # (RT, D)
    y = _ln(xv, g_ref[...], be_ref[...])
    h = jnp.dot(y.astype(jnp.bfloat16), w1_ref[...],
                preferred_element_type=jnp.float32) + b1_ref[...]
    h = h * jax.nn.sigmoid(h)                                        # swish (f32)
    r = jnp.dot(h.astype(jnp.bfloat16), w2_ref[...],
                preferred_element_type=jnp.float32) + b2_ref[...]
    o_ref[...] = (xv + scale * r).astype(o_ref.dtype)


def _ffn_post_ln_kernel(x_ref, g_ref, be_ref, w1_ref, b1_ref, w2_ref, b2_ref,
                        pg_ref, pb_ref, o_ref, *, scale):
    """Macaron FFN with the per-layer final LayerNorm fused in."""
    xv = x_ref[...].astype(jnp.float32)
    y = _ln(xv, g_ref[...], be_ref[...])
    h = jnp.dot(y.astype(jnp.bfloat16), w1_ref[...],
                preferred_element_type=jnp.float32) + b1_ref[...]
    h = h * jax.nn.sigmoid(h)
    r = jnp.dot(h.astype(jnp.bfloat16), w2_ref[...],
                preferred_element_type=jnp.float32) + b2_ref[...]
    o_ref[...] = _ln(xv + scale * r, pg_ref[...], pb_ref[...]).astype(o_ref.dtype)


def ffn_block(x, ln_g, ln_b, w1, b1, w2, b2, post_ln=None, scale=0.5):
    """x + scale * (swish(LN(x) W1 + b1) W2 + b2), optionally followed by a fused LN."""
    B, T, D = x.shape
    F = w1.shape[1]
    R = B * T
    RT = _row_tile(R)
    x2 = x.reshape(R, D)
    in_specs = [
        pl.BlockSpec((RT, D), lambda i: (i, 0)),
        pl.BlockSpec((1, D), lambda i: (0, 0)),
        pl.BlockSpec((1, D), lambda i: (0, 0)),
        pl.BlockSpec((D, F), lambda i: (0, 0)),
        pl.BlockSpec((1, F), lambda i: (0, 0)),
        pl.BlockSpec((F, D), lambda i: (0, 0)),
        pl.BlockSpec((1, D), lambda i: (0, 0)),
    ]
    args = [x2, ln_g, ln_b, w1, b1, w2, b2]
    if post_ln is None:
        kernel = functools.partial(_ffn_kernel, scale=scale)
    else:
        kernel = functools.partial(_ffn_post_ln_kernel, scale=scale)
        in_specs += [pl.BlockSpec((1, D), lambda i: (0, 0)),
                     pl.BlockSpec((1, D), lambda i: (0, 0))]
        args += [post_ln[0], post_ln[1]]
    out = pl.pallas_call(
        kernel,
        out_shape=jax.ShapeDtypeStruct((R, D), jnp.bfloat16),
        grid=(R // RT,),
        in_specs=in_specs,
        out_specs=pl.BlockSpec((RT, D), lambda i: (i, 0)),
        compiler_params=_params_1d(),
    )(*args)
    return out.reshape(B, T, D)


# ----------------------------------------------------------------------------- MHSA

def _attn_kernel(x_ref, m_ref, g_ref, be_ref, wqkv_ref, bqkv_ref, pu_ref, pv_ref,
                 pp_ref, wo_ref, bo_ref, o_ref, attn_ref, ctx_ref, *, heads):
    """Fused rel-pos MHSA block for one batch element."""
    T, D = x_ref.shape[1], x_ref.shape[2]
    Dh = D // heads
    Lp = pp_ref.shape[0]                                # padded 2T-1 (lane multiple)
    scale = 1.0 / math.sqrt(Dh)
    dn = (((1,), (1,)), ((), ()))                       # A @ B^T, no batch dims

    xv = x_ref[0].astype(jnp.float32)                   # (T, D)
    y = _ln(xv, g_ref[...], be_ref[...])
    qkv = jnp.dot(y.astype(jnp.bfloat16), wqkv_ref[...],
                  preferred_element_type=jnp.float32) + bqkv_ref[...]   # (T, 3D)
    q = qkv[:, :D]
    k = qkv[:, D:2 * D].astype(jnp.bfloat16)
    v = qkv[:, 2 * D:3 * D].astype(jnp.bfloat16)
    # 1/sqrt(Dh) folded into both query variants before the bf16 cast (saves per-head
    # (T, T) multiplies on the VPU); key-padding mask becomes one additive bias.
    qu = ((q + pu_ref[...]) * scale).astype(jnp.bfloat16)   # content query
    qv_ = ((q + pv_ref[...]) * scale).astype(jnp.bfloat16)  # positional query
    pp = pp_ref[...]                                          # (Lp, D) bf16
    neg = (m_ref[0] - 1.0) * 1e9                              # (1, T): 0 keep, -1e9 drop

    # relative shift:  bd[i, j] = bdf[i, T-1-i+j]  ==  strided roll on the lane axis,
    # row i rolled by (Lp - (T-1)) + i, then keep the first T lanes.  One XLU op.
    shift = Lp - (T - 1)

    for h in range(heads):                               # static unroll over heads
        sl = slice(h * Dh, (h + 1) * Dh)
        ac = lax.dot_general(qu[:, sl], k[:, sl], dn,
                             preferred_element_type=jnp.float32)      # (T, T)
        bdf = lax.dot_general(qv_[:, sl], pp[:, sl], dn,
                              preferred_element_type=jnp.float32)     # (T, Lp)
        bd = pltpu.roll(bdf, shift, 1, stride=1, stride_axis=0)[:, :T]
        s = ac + bd + neg
        smax = jnp.max(s, axis=-1, keepdims=True)
        e = jnp.exp(s - smax)
        p = e * pl.reciprocal(jnp.sum(e, axis=-1, keepdims=True), approx=True)
        attn_ref[0, h] = p.astype(attn_ref.dtype)                     # bf16 writeback
        # write this head's context straight into the (T, D) VMEM scratch
        ctx_ref[:, sl] = jnp.dot(p.astype(jnp.bfloat16), v[:, sl],
                                 preferred_element_type=jnp.float32)

    out = jnp.dot(ctx_ref[...].astype(jnp.bfloat16), wo_ref[...],
                  preferred_element_type=jnp.float32) + bo_ref[...]
    o_ref[0] = (xv + out).astype(o_ref.dtype)


def attention_block(x, mask, pproj, p, heads):
    B, T, D = x.shape
    Lp = pproj.shape[0]
    return pl.pallas_call(
        functools.partial(_attn_kernel, heads=heads),
        out_shape=(jax.ShapeDtypeStruct((B, T, D), jnp.bfloat16),
                   jax.ShapeDtypeStruct((B, heads, T, T), jnp.bfloat16)),
        grid=(B,),
        in_specs=[
            pl.BlockSpec((1, T, D), lambda b: (b, 0, 0)),        # x (residual input)
            pl.BlockSpec((1, 1, T), lambda b: (b, 0, 0)),        # key-padding mask
            pl.BlockSpec((1, D), lambda b: (0, 0)),              # LN gamma
            pl.BlockSpec((1, D), lambda b: (0, 0)),              # LN beta
            pl.BlockSpec((D, 3 * D), lambda b: (0, 0)),          # fused Wqkv (bf16)
            pl.BlockSpec((1, 3 * D), lambda b: (0, 0)),          # fused bqkv
            pl.BlockSpec((1, D), lambda b: (0, 0)),              # pos_u
            pl.BlockSpec((1, D), lambda b: (0, 0)),              # pos_v
            pl.BlockSpec((Lp, D), lambda b: (0, 0)),             # projected rel PE (bf16)
            pl.BlockSpec((D, D), lambda b: (0, 0)),              # Wo (bf16)
            pl.BlockSpec((1, D), lambda b: (0, 0)),              # bo
        ],
        out_specs=(pl.BlockSpec((1, T, D), lambda b: (b, 0, 0)),
                   pl.BlockSpec((1, heads, T, T), lambda b: (b, 0, 0, 0))),
        scratch_shapes=[pltpu.VMEM((T, D), jnp.float32)],        # per-head ctx scratch
        compiler_params=_params_1d(),
    )(x, mask, p["mha_ln_g"], p["mha_ln_b"], p["wqkv"], p["bqkv"],
      p["pos_u"], p["pos_v"], pproj, p["wo"], p["bo"])


# ----------------------------------------------------------------------------- conv

def _conv_kernel(x_ref, mt_ref, g_ref, be_ref, w1_ref, b1_ref, dw_ref, bns_ref, bnb_ref,
                 w2_ref, b2_ref, o_ref, halo_ref):
    """LN -> pw1 -> GLU -> depthwise conv (halo scratch) -> BN(eval) -> swish -> pw2."""
    T, D = x_ref.shape[1], x_ref.shape[2]
    K = dw_ref.shape[0]
    pad = (K - 1) // 2          # TODO(synk): 'same' padding assumes odd K (usual Conformer)

    xv = x_ref[0].astype(jnp.float32)
    y = _ln(xv, g_ref[...], be_ref[...])
    z = jnp.dot(y.astype(jnp.bfloat16), w1_ref[...],
                preferred_element_type=jnp.float32) + b1_ref[...]    # (T, 2D)
    gact = z[:, :D] * jax.nn.sigmoid(z[:, D:2 * D])                  # GLU (T, D)
    gact = gact * mt_ref[0]                     # zero padded frames (no halo leakage)

    # depthwise conv along time: zero-halo VMEM scratch, shifted ref-slice reads.
    if pad > 0:
        halo_ref[:pad, :] = jnp.zeros((pad, D), jnp.float32)
        halo_ref[pad + T:, :] = jnp.zeros((pad, D), jnp.float32)
    halo_ref[pad:pad + T, :] = gact
    acc = jnp.zeros((T, D), jnp.float32)
    for kk in range(K):                          # static unroll, K is small
        acc = acc + halo_ref[kk:kk + T, :] * dw_ref[kk:kk + 1, :]

    yb = acc * bns_ref[...] + bnb_ref[...]       # folded eval-mode BatchNorm
    yb = yb * jax.nn.sigmoid(yb)                 # swish
    out = jnp.dot(yb.astype(jnp.bfloat16), w2_ref[...],
                  preferred_element_type=jnp.float32) + b2_ref[...]
    o_ref[0] = (xv + out).astype(o_ref.dtype)


def conv_block(x, mask_t, p):
    B, T, D = x.shape
    K = p["dw_w"].shape[0]
    # fold running stats into a scale/bias (eval-mode BatchNorm)
    bn_scale = p["bn_g"] * lax.rsqrt(p["bn_var"] + 1e-5)
    bn_bias = p["bn_b"] - p["bn_mean"] * bn_scale
    return pl.pallas_call(
        _conv_kernel,
        out_shape=jax.ShapeDtypeStruct((B, T, D), jnp.bfloat16),
        grid=(B,),
        in_specs=[
            pl.BlockSpec((1, T, D), lambda b: (b, 0, 0)),
            pl.BlockSpec((1, T, 1), lambda b: (b, 0, 0)),    # time-major frame mask
            pl.BlockSpec((1, D), lambda b: (0, 0)),
            pl.BlockSpec((1, D), lambda b: (0, 0)),
            pl.BlockSpec((D, 2 * D), lambda b: (0, 0)),      # pointwise conv 1 (bf16)
            pl.BlockSpec((1, 2 * D), lambda b: (0, 0)),
            pl.BlockSpec((K, D), lambda b: (0, 0)),          # depthwise kernel
            pl.BlockSpec((1, D), lambda b: (0, 0)),          # folded BN scale
            pl.BlockSpec((1, D), lambda b: (0, 0)),          # folded BN bias
            pl.BlockSpec((D, D), lambda b: (0, 0)),          # pointwise conv 2 (bf16)
            pl.BlockSpec((1, D), lambda b: (0, 0)),
        ],
        out_specs=pl.BlockSpec((1, T, D), lambda b: (b, 0, 0)),
        scratch_shapes=[pltpu.VMEM((T + K - 1, D), jnp.float32)],    # halo buffer
        compiler_params=_params_1d(),
    )(x, mask_t, p["conv_ln_g"], p["conv_ln_b"], p["pw1_w"], p["pw1_b"], p["dw_w"],
      bn_scale, bn_bias, p["pw2_w"], p["pw2_b"])


# ----------------------------------------------------------------------------- LN / PE

def layernorm(x, g, b):
    """Final encoder LayerNorm over the row-flattened view (f32 output)."""
    B, T, D = x.shape
    R = B * T
    RT = _row_tile(R)

    def kernel(x_ref, g_ref, b_ref, o_ref):
        o_ref[...] = _ln(x_ref[...].astype(jnp.float32), g_ref[...], b_ref[...])

    out = pl.pallas_call(
        kernel,
        out_shape=jax.ShapeDtypeStruct((R, D), jnp.float32),
        grid=(R // RT,),
        in_specs=[pl.BlockSpec((RT, D), lambda i: (i, 0)),
                  pl.BlockSpec((1, D), lambda i: (0, 0)),
                  pl.BlockSpec((1, D), lambda i: (0, 0))],
        out_specs=pl.BlockSpec((RT, D), lambda i: (i, 0)),
        compiler_params=_params_1d(),
    )(x.reshape(R, D), g, b)
    return out.reshape(B, T, D)


def project_pe(pe, wp_all):
    """Project the (padded) sinusoidal relative PE once for all layers -> bf16."""
    Nl, D, _ = wp_all.shape
    Lp = pe.shape[0]

    def kernel(pe_ref, wp_ref, o_ref):
        o_ref[0] = jnp.dot(pe_ref[...].astype(jnp.bfloat16), wp_ref[0],
                           preferred_element_type=jnp.float32).astype(jnp.bfloat16)

    return pl.pallas_call(
        kernel,
        out_shape=jax.ShapeDtypeStruct((Nl, Lp, D), jnp.bfloat16),
        grid=(Nl,),
        in_specs=[pl.BlockSpec((Lp, D), lambda n: (0, 0)),
                  pl.BlockSpec((1, D, D), lambda n: (n, 0, 0))],
        out_specs=pl.BlockSpec((1, Lp, D), lambda n: (n, 0, 0)),
        compiler_params=_params_1d(),
    )(pe, wp_all)


def rel_pos_encoding(T, D):
    """Sinusoidal relative PE for positions T-1 .. -(T-1); rows padded to a lane multiple."""
    L = 2 * T - 1
    Lp = ((L + 127) // 128) * 128
    rel = jnp.arange(T - 1, -T, -1, dtype=jnp.float32)
    inv = jnp.exp(-math.log(10000.0) * jnp.arange(0, D, 2, dtype=jnp.float32) / D)
    ang = rel[:, None] * inv[None, :]
    pe = jnp.zeros((Lp, D), jnp.float32)
    pe = pe.at[:L, 0::2].set(jnp.sin(ang)).at[:L, 1::2].set(jnp.cos(ang))
    return pe


# ----------------------------------------------------------------------------- glue

def conformer_layer(x, pproj, mask, mask_t, p, heads):
    """One ConformerEncoderLayer (4 fused pallas_calls)."""
    x = ffn_block(x, p["ff1_ln_g"], p["ff1_ln_b"], p["ff1_w1"], p["ff1_b1"],
                  p["ff1_w2"], p["ff1_b2"])
    x, attn = attention_block(x, mask, pproj, p, heads)
    x = conv_block(x, mask_t, p)
    x = ffn_block(x, p["ff2_ln_g"], p["ff2_ln_b"], p["ff2_w1"], p["ff2_b1"],
                  p["ff2_w2"], p["ff2_b2"],
                  post_ln=(p["final_ln_g"], p["final_ln_b"]))
    return x, attn


def conformer_encoder(src, mask, params, *, num_layers, heads):
    """Matches ConformerEncoder.forward: returns (norm(x), attns_enc, iter_preds)."""
    B, T, D = src.shape
    # RelativePositionalEncoder: x = dropout(x * xscale), xscale=1, eval -> identity
    x = src
    mask_t = jnp.transpose(mask, (0, 2, 1))                          # (B, T, 1)
    pe = rel_pos_encoding(T, D)
    wp_all = jnp.stack([params["layers"][i]["wp"] for i in range(num_layers)], axis=0)
    pproj_all = project_pe(pe, wp_all)                               # (N, Lp, D) bf16

    attns = []
    iter_preds = []  # hp.iter_loss is empty -> no intermediate projections
    for i in range(num_layers):
        x, attn = conformer_layer(x, pproj_all[i], mask, mask_t,
                                  params["layers"][i], heads)
        attns.append(attn)
    attns_enc = jnp.stack(attns, axis=1)          # (B, N, H, T, T), bf16 diagnostics
    x = layernorm(x, params["norm_g"], params["norm_b"])
    return x, attns_enc, iter_preds


# ----------------------------------------------------------------------------- params

def init_params(key, D, H, N, K, ff_mult=4):
    def w(k, shape, s=0.02):
        # matmul weights live in bf16 (MXU-native, half the HBM bytes)
        return (s * jax.random.normal(k, shape, jnp.float32)).astype(jnp.bfloat16)

    layers = []
    for _ in range(N):
        key, *ks = jax.random.split(key, 14)
        F = ff_mult * D
        lp = dict(
            ff1_ln_g=jnp.ones((1, D), jnp.float32), ff1_ln_b=jnp.zeros((1, D), jnp.float32),
            ff1_w1=w(ks[0], (D, F)), ff1_b1=jnp.zeros((1, F), jnp.float32),
            ff1_w2=w(ks[1], (F, D)), ff1_b2=jnp.zeros((1, D), jnp.float32),
            mha_ln_g=jnp.ones((1, D), jnp.float32), mha_ln_b=jnp.zeros((1, D), jnp.float32),
            wqkv=w(ks[2], (D, 3 * D)), bqkv=jnp.zeros((1, 3 * D), jnp.float32),
            wo=w(ks[3], (D, D)), bo=jnp.zeros((1, D), jnp.float32),
            wp=w(ks[4], (D, D)),
            pos_u=0.02 * jax.random.normal(ks[5], (1, D), jnp.float32),
            pos_v=0.02 * jax.random.normal(ks[6], (1, D), jnp.float32),
            conv_ln_g=jnp.ones((1, D), jnp.float32), conv_ln_b=jnp.zeros((1, D), jnp.float32),
            pw1_w=w(ks[7], (D, 2 * D)), pw1_b=jnp.zeros((1, 2 * D), jnp.float32),
            dw_w=0.1 * jax.random.normal(ks[8], (K, D), jnp.float32),
            bn_g=jnp.ones((1, D), jnp.float32), bn_b=jnp.zeros((1, D), jnp.float32),
            bn_mean=jnp.zeros((1, D), jnp.float32), bn_var=jnp.ones((1, D), jnp.float32),
            pw2_w=w(ks[9], (D, D)), pw2_b=jnp.zeros((1, D), jnp.float32),
            ff2_ln_g=jnp.ones((1, D), jnp.float32), ff2_ln_b=jnp.zeros((1, D), jnp.float32),
            ff2_w1=w(ks[10], (D, F)), ff2_b1=jnp.zeros((1, F), jnp.float32),
            ff2_w2=w(ks[11], (F, D)), ff2_b2=jnp.zeros((1, D), jnp.float32),
            final_ln_g=jnp.ones((1, D), jnp.float32), final_ln_b=jnp.zeros((1, D), jnp.float32),
        )
        layers.append(lp)
    return dict(layers=layers,
                norm_g=jnp.ones((1, D), jnp.float32),
                norm_b=jnp.zeros((1, D), jnp.float32))


# ----------------------------------------------------------------------------- main

if __name__ == "__main__":
    # hp: d_model_e=32, N_e=2, heads=4, iter_loss=(), rotary_pos_enc=False, rms_norm=False
    B, T, D, H, N, K = 2, 8, 32, 4, 2, 3

    key = jax.random.PRNGKey(0)
    k_src, k_par = jax.random.split(key)
    src = jax.random.normal(k_src, (B, T, D), jnp.float32)
    mask = jnp.ones((B, 1, T), jnp.float32)          # key-padding mask, 1 = valid

    params = init_params(k_par, D, H, N, K)

    encoder = jax.jit(functools.partial(conformer_encoder, num_layers=N, heads=H))
    out, attns_enc, iter_preds = encoder(src, mask, params)
    jax.block_until_ready(out)
    jax.block_until_ready(attns_enc)

    assert out.shape == (B, T, D)
    assert attns_enc.shape == (B, N, H, T, T)
    assert iter_preds == []
    print("KERNEL_OK")
</pallas_src>

<mosaic_0001>
module attributes {stable_mosaic.version = 11 : i64} {
  func.func @kernel(%arg0: i32, %arg1: memref<128x32xf32, #tpu.memory_space<vmem>>, %arg2: memref<1x32x32xbf16, #tpu.memory_space<vmem>>, %arg3: memref<1x128x32xbf16, #tpu.memory_space<vmem>>) attributes {dimension_semantics = [#tpu.dimension_semantics<parallel>], iteration_bounds = array<i64: 2>, scalar_prefetch = 0 : i64, scratch_operands = 0 : i64, tpu.core_type = #tpu.core_type<tc>, window_params = [{pipeline_mode = #tpu.pipeline_mode<synchronous>, transform_indices = @transform_0, window_bounds = array<i64: 128, 32>}, {transform_indices = @transform_1, window_bounds = array<i64: 1, 32, 32>}, {transform_indices = @transform_2, window_bounds = array<i64: 1, 128, 32>}]} {
    %c0 = arith.constant 0 : index
    %c0_0 = arith.constant 0 : index
    %0 = vector.load %arg1[%c0, %c0_0] : memref<128x32xf32, #tpu.memory_space<vmem>>, vector<128x32xf32>
    %1 = arith.truncf %0 : vector<128x32xf32> to vector<128x32xbf16>
    %c0_1 = arith.constant 0 : index
    %c0_2 = arith.constant 0 : index
    %c0_3 = arith.constant 0 : index
    %2 = vector.load %arg2[%c0_1, %c0_2, %c0_3] : memref<1x32x32xbf16, #tpu.memory_space<vmem>>, vector<1x32x32xbf16>
    %3 = vector.shape_cast %2 : vector<1x32x32xbf16> to vector<32x32xbf16>
    %cst = arith.constant dense<0.000000e+00> : vector<128x32xf32>
    %4 = tpu.matmul %1, %3, %cst {dimension_numbers = #tpu.dot_dimension_numbers<[1], [0], [0], [1], [0, 0, 1, 1], [], []>} : vector<128x32xbf16>, vector<32x32xbf16>, vector<128x32xf32> -> vector<128x32xf32>
    %5 = arith.truncf %4 : vector<128x32xf32> to vector<128x32xbf16>
    %c0_4 = arith.constant 0 : index
    %c0_5 = arith.constant 0 : index
    %c0_6 = arith.constant 0 : index
    %6 = vector.load %arg3[%c0_4, %c0_5, %c0_6] : memref<1x128x32xbf16, #tpu.memory_space<vmem>>, vector<1x128x32xbf16>
    %7 = vector.shape_cast %6 : vector<1x128x32xbf16> to vector<128x32xbf16>
    %8 = vector.shape_cast %5 : vector<128x32xbf16> to vector<1x128x32xbf16>
    tpu.vector_store %arg3[%c0_4, %c0_5, %c0_6], %8 {strides = array<i32>} : memref<1x128x32xbf16, #tpu.memory_space<vmem>>, vector<1x128x32xbf16>,
    return
  }
  func.func @transform_0(%arg0: i32) -> (i32, i32) {
    %c0_i32 = arith.constant 0 : i32
    %c0_i32_0 = arith.constant 0 : i32
    %c0_i32_1 = arith.constant 0 : i32
    return %c0_i32, %c0_i32_0 : i32, i32
  }
  func.func @transform_1(%arg0: i32) -> (i32, i32, i32) {
    %c0_i32 = arith.constant 0 : i32
    %c0_i32_0 = arith.constant 0 : i32
    %c0_i32_1 = arith.constant 0 : i32
    return %arg0, %c0_i32, %c0_i32_0 : i32, i32, i32
  }
  func.func @transform_2(%arg0: i32) -> (i32, i32, i32) {
    %c0_i32 = arith.constant 0 : i32
    %c0_i32_0 = arith.constant 0 : i32
    %c0_i32_1 = arith.constant 0 : i32
    return %arg0, %c0_i32, %c0_i32_0 : i32, i32, i32
  }
}

module attributes {stable_mosaic.version = 11 : i64} {
  func.func @_ffn_kernel(%arg0: i32, %arg1: memref<16x32xf32, #tpu.memory_space<vmem>>, %arg2: memref<1x32xf32, #tpu.memory_space<vmem>>, %arg3: memref<1x32xf32, #tpu.memory_space<vmem>>, %arg4: memref<32x128xbf16, #tpu.memory_space<vmem>>, %arg5: memref<1x128xf32, #tpu.memory_space<vmem>>, %arg6: memref<128x32xbf16, #tpu.memory_space<vmem>>, %arg7: memref<1x32xf32, #tpu.memory_space<vmem>>, %arg8: memref<16x32xbf16, #tpu.memory_space<vmem>>) attributes {dimension_semantics = [#tpu.dimension_semantics<parallel>], iteration_bounds = array<i64: 1>, scalar_prefetch = 0 : i64, scratch_operands = 0 : i64, tpu.core_type = #tpu.core_type<tc>, window_params = [{transform_indices = @transform_0, window_bounds = array<i64: 16, 32>}, {pipeline_mode = #tpu.pipeline_mode<synchronous>, transform_indices = @transform_1, window_bounds = array<i64: 1, 32>}, {pipeline_mode = #tpu.pipeline_mode<synchronous>, transform_indices = @transform_2, window_bounds = array<i64: 1, 32>}, {pipeline_mode = #tpu.pipeline_mode<synchronous>, transform_indices = @transform_3, window_bounds = array<i64: 32, 128>}, {pipeline_mode = #tpu.pipeline_mode<synchronous>, transform_indices = @transform_4, window_bounds = array<i64: 1, 128>}, {pipeline_mode = #tpu.pipeline_mode<synchronous>, transform_indices = @transform_5, window_bounds = array<i64: 128, 32>}, {pipeline_mode = #tpu.pipeline_mode<synchronous>, transform_indices = @transform_6, window_bounds = array<i64: 1, 32>}, {transform_indices = @transform_7, window_bounds = array<i64: 16, 32>}]} {
    %c0 = arith.constant 0 : index
    %c0_0 = arith.constant 0 : index
    %0 = vector.load %arg1[%c0, %c0_0] : memref<16x32xf32, #tpu.memory_space<vmem>>, vector<16x32xf32>
    %c0_1 = arith.constant 0 : index
    %c0_2 = arith.constant 0 : index
    %1 = vector.load %arg2[%c0_1, %c0_2] : memref<1x32xf32, #tpu.memory_space<vmem>>, vector<1x32xf32>
    %c0_3 = arith.constant 0 : index
    %c0_4 = arith.constant 0 : index
    %2 = vector.load %arg3[%c0_3, %c0_4] : memref<1x32xf32, #tpu.memory_space<vmem>>, vector<1x32xf32>
    %cst = arith.constant dense<0.000000e+00> : vector<16xf32>
    %3 = vector.multi_reduction <add>, %0, %cst [1] : vector<16x32xf32> to vector<16xf32>
    %4 = vector.shape_cast %3 : vector<16xf32> to vector<16x1xf32>
    %cst_5 = arith.constant 3.200000e+01 : f32
    %5 = vector.broadcast %cst_5 : f32 to vector<16x1xf32>
    %6 = arith.divf %4, %5 : vector<16x1xf32>
    %7 = vector.broadcast %6 : vector<16x1xf32> to vector<16x32xf32>
    %8 = arith.subf %0, %7 : vector<16x32xf32>
    %9 = arith.mulf %8, %8 : vector<16x32xf32>
    %cst_6 = arith.constant dense<0.000000e+00> : vector<16xf32>
    %10 = vector.multi_reduction <add>, %9, %cst_6 [1] : vector<16x32xf32> to vector<16xf32>
    %11 = vector.shape_cast %10 : vector<16xf32> to vector<16x1xf32>
    %cst_7 = arith.constant 3.200000e+01 : f32
    %12 = vector.broadcast %cst_7 : f32 to vector<16x1xf32>
    %13 = arith.divf %11, %12 : vector<16x1xf32>
    %14 = vector.broadcast %6 : vector<16x1xf32> to vector<16x32xf32>
    %15 = arith.subf %0, %14 : vector<16x32xf32>
    %cst_8 = arith.constant 9.99999974E-6 : f32
    %16 = vector.broadcast %cst_8 : f32 to vector<16x1xf32>
    %17 = arith.addf %13, %16 : vector<16x1xf32>
    %18 = math.rsqrt %17 : vector<16x1xf32>
    %19 = vector.broadcast %18 : vector<16x1xf32> to vector<16x32xf32>
    %20 = arith.mulf %15, %19 : vector<16x32xf32>
    %21 = vector.broadcast %1 : vector<1x32xf32> to vector<16x32xf32>
    %22 = arith.mulf %20, %21 : vector<16x32xf32>
    %23 = vector.broadcast %2 : vector<1x32xf32> to vector<16x32xf32>
    %24 = arith.addf %22, %23 : vector<16x32xf32>
    %25 = arith.truncf %24 : vector<16x32xf32> to vector<16x32xbf16>
    %c0_9 = arith.constant 0 : index
    %c0_10 = arith.constant 0 : index
    %26 = vector.load %arg4[%c0_9, %c0_10] : memref<32x128xbf16, #tpu.memory_space<vmem>>, vector<32x128xbf16>
    %cst_11 = arith.constant dense<0.000000e+00> : vector<16x128xf32>
    %27 = tpu.matmul %25, %26, %cst_11 {dimension_numbers = #tpu.dot_dimension_numbers<[1], [0], [0], [1], [0, 0, 1, 1], [], []>} : vector<16x32xbf16>, vector<32x128xbf16>, vector<16x128xf32> -> vector<16x128xf32>
    %c0_12 = arith.constant 0 : index
    %c0_13 = arith.constant 0 : index
    %28 = vector.load %arg5[%c0_12, %c0_13] : memref<1x128xf32, #tpu.memory_space<vmem>>, vector<1x128xf32>
    %29 = vector.broadcast %28 : vector<1x128xf32> to vector<16x128xf32>
    %30 = arith.addf %27, %29 : vector<16x128xf32>
    %31 = arith.negf %30 : vector<16x128xf32>
    %32 = math.exp %31 : vector<16x128xf32>
    %cst_14 = arith.constant 1.000000e+00 : f32
    %33 = vector.broadcast %cst_14 : f32 to vector<16x128xf32>
    %34 = arith.addf %33, %32 : vector<16x128xf32>
    %35 = arith.divf %33, %34 : vector<16x128xf32>
    %36 = arith.mulf %30, %35 : vector<16x128xf32>
    %37 = arith.truncf %36 : vector<16x128xf32> to vector<16x128xbf16>
    %c0_15 = arith.constant 0 : index
    %c0_16 = arith.constant 0 : index
    %38 = vector.load %arg6[%c0_15, %c0_16] : memref<128x32xbf16, #tpu.memory_space<vmem>>, vector<128x32xbf16>
    %cst_17 = arith.constant dense<0.000000e+00> : vector<16x32xf32>
    %39 = tpu.matmul %37, %38, %cst_17 {dimension_numbers = #tpu.dot_dimension_numbers<[1], [0], [0], [1], [0, 0, 1, 1], [], []>} : vector<16x128xbf16>, vector<128x32xbf16>, vector<16x32xf32> -> vector<16x32xf32>
    %c0_18 = arith.constant 0 : index
    %c0_19 = arith.constant 0 : index
    %40 = vector.load %arg7[%c0_18, %c0_19] : memref<1x32xf32, #tpu.memory_space<vmem>>, vector<1x32xf32>
    %41 = vector.broadcast %40 : vector<1x32xf32> to vector<16x32xf32>
    %42 = arith.addf %39, %41 : vector<16x32xf32>
    %cst_20 = arith.constant 5.000000e-01 : f32
    %43 = vector.broadcast %cst_20 : f32 to vector<16x32xf32>
    %44 = arith.mulf %43, %42 : vector<16x32xf32>
    %45 = arith.addf %0, %44 : vector<16x32xf32>
    %46 = arith.truncf %45 : vector<16x32xf32> to vector<16x32xbf16>
    %c0_21 = arith.constant 0 : index
    %c0_22 = arith.constant 0 : index
    %47 = vector.load %arg8[%c0_21, %c0_22] : memref<16x32xbf16, #tpu.memory_space<vmem>>, vector<16x32xbf16>
    tpu.vector_store %arg8[%c0_21, %c0_22], %46 {strides = array<i32>} : memref<16x32xbf16, #tpu.memory_space<vmem>>, vector<16x32xbf16>,
    return
  }
  func.func @transform_0(%arg0: i32) -> (i32, i32) {
    %c0_i32 = arith.constant 0 : i32
    %c0_i32_0 = arith.constant 0 : i32
    return %arg0, %c0_i32 : i32, i32
  }
  func.func @transform_1(%arg0: i32) -> (i32, i32) {
    %c0_i32 = arith.constant 0 : i32
    %c0_i32_0 = arith.constant 0 : i32
    %c0_i32_1 = arith.constant 0 : i32
    return %c0_i32, %c0_i32_0 : i32, i32
  }
  func.func @transform_2(%arg0: i32) -> (i32, i32) {
    %c0_i32 = arith.constant 0 : i32
    %c0_i32_0 = arith.constant 0 : i32
    %c0_i32_1 = arith.constant 0 : i32
    return %c0_i32, %c0_i32_0 : i32, i32
  }
  func.func @transform_3(%arg0: i32) -> (i32, i32) {
    %c0_i32 = arith.constant 0 : i32
    %c0_i32_0 = arith.constant 0 : i32
    %c0_i32_1 = arith.constant 0 : i32
    return %c0_i32, %c0_i32_0 : i32, i32
  }
  func.func @transform_4(%arg0: i32) -> (i32, i32) {
    %c0_i32 = arith.constant 0 : i32
    %c0_i32_0 = arith.constant 0 : i32
    %c0_i32_1 = arith.constant 0 : i32
    return %c0_i32, %c0_i32_0 : i32, i32
  }
  func.func @transform_5(%arg0: i32) -> (i32, i32) {
    %c0_i32 = arith.constant 0 : i32
    %c0_i32_0 = arith.constant 0 : i32
    %c0_i32_1 = arith.constant 0 : i32
    return %c0_i32, %c0_i32_0 : i32, i32
  }
  func.func @transform_6(%arg0: i32) -> (i32, i32) {
    %c0_i32 = arith.constant 0 : i32
    %c0_i32_0 = arith.constant 0 : i32
    %c0_i32_1 = arith.constant 0 : i32
    return %c0_i32, %c0_i32_0 : i32, i32
  }
  func.func @transform_7(%arg0: i32) -> (i32, i32) {
    %c0_i32 = arith.constant 0 : i32
    %c0_i32_0 = arith.constant 0 : i32
    return %arg0, %c0_i32 : i32, i32
  }
}

module attributes {stable_mosaic.version = 11 : i64} {
  func.func @_attn_kernel(%arg0: i32, %arg1: memref<1x8x32xbf16, #tpu.memory_space<vmem>>, %arg2: memref<1x1x8xf32, #tpu.memory_space<vmem>>, %arg3: memref<1x32xf32, #tpu.memory_space<vmem>>, %arg4: memref<1x32xf32, #tpu.memory_space<vmem>>, %arg5: memref<32x96xbf16, #tpu.memory_space<vmem>>, %arg6: memref<1x96xf32, #tpu.memory_space<vmem>>, %arg7: memref<1x32xf32, #tpu.memory_space<vmem>>, %arg8: memref<1x32xf32, #tpu.memory_space<vmem>>, %arg9: memref<128x32xbf16, #tpu.memory_space<vmem>>, %arg10: memref<32x32xbf16, #tpu.memory_space<vmem>>, %arg11: memref<1x32xf32, #tpu.memory_space<vmem>>, %arg12: memref<1x8x32xbf16, #tpu.memory_space<vmem>>, %arg13: memref<1x4x8x8xbf16, #tpu.memory_space<vmem>>, %arg14: memref<8x32xf32, #tpu.memory_space<vmem>>) attributes {dimension_semantics = [#tpu.dimension_semantics<parallel>], iteration_bounds = array<i64: 2>, scalar_prefetch = 0 : i64, scratch_operands = 1 : i64, tpu.core_type = #tpu.core_type<tc>, window_params = [{transform_indices = @transform_0, window_bounds = array<i64: 1, 8, 32>}, {transform_indices = @transform_1, window_bounds = array<i64: 1, 1, 8>}, {pipeline_mode = #tpu.pipeline_mode<synchronous>, transform_indices = @transform_2, window_bounds = array<i64: 1, 32>}, {pipeline_mode = #tpu.pipeline_mode<synchronous>, transform_indices = @transform_3, window_bounds = array<i64: 1, 32>}, {pipeline_mode = #tpu.pipeline_mode<synchronous>, transform_indices = @transform_4, window_bounds = array<i64: 32, 96>}, {pipeline_mode = #tpu.pipeline_mode<synchronous>, transform_indices = @transform_5, window_bounds = array<i64: 1, 96>}, {pipeline_mode = #tpu.pipeline_mode<synchronous>, transform_indices = @transform_6, window_bounds = array<i64: 1, 32>}, {pipeline_mode = #tpu.pipeline_mode<synchronous>, transform_indices = @transform_7, window_bounds = array<i64: 1, 32>}, {pipeline_mode = #tpu.pipeline_mode<synchronous>, transform_indices = @transform_8, window_bounds = array<i64: 128, 32>}, {pipeline_mode = #tpu.pipeline_mode<synchronous>, transform_indices = @transform_9, window_bounds = array<i64: 32, 32>}, {pipeline_mode = #tpu.pipeline_mode<synchronous>, transform_indices = @transform_10, window_bounds = array<i64: 1, 32>}, {transform_indices = @transform_11, window_bounds = array<i64: 1, 8, 32>}, {transform_indices = @transform_12, window_bounds = array<i64: 1, 4, 8, 8>}]} {
    %c0 = arith.constant 0 : index
    %c0_0 = arith.constant 0 : index
    %c0_1 = arith.constant 0 : index
    %0 = vector.load %arg1[%c0, %c0_0, %c0_1] : memref<1x8x32xbf16, #tpu.memory_space<vmem>>, vector<1x8x32xbf16>
    %1 = vector.shape_cast %0 : vector<1x8x32xbf16> to vector<8x32xbf16>
    %2 = arith.extf %1 : vector<8x32xbf16> to vector<8x32xf32>
    %c0_2 = arith.constant 0 : index
    %c0_3 = arith.constant 0 : index
    %3 = vector.load %arg3[%c0_2, %c0_3] : memref<1x32xf32, #tpu.memory_space<vmem>>, vector<1x32xf32>
    %c0_4 = arith.constant 0 : index
    %c0_5 = arith.constant 0 : index
    %4 = vector.load %arg4[%c0_4, %c0_5] : memref<1x32xf32, #tpu.memory_space<vmem>>, vector<1x32xf32>
    %cst = arith.constant dense<0.000000e+00> : vector<8xf32>
    %5 = vector.multi_reduction <add>, %2, %cst [1] : vector<8x32xf32> to vector<8xf32>
    %6 = vector.shape_cast %5 : vector<8xf32> to vector<8x1xf32>
    %cst_6 = arith.constant 3.200000e+01 : f32
    %7 = vector.broadcast %cst_6 : f32 to vector<8x1xf32>
    %8 = arith.divf %6, %7 : vector<8x1xf32>
    %9 = vector.broadcast %8 : vector<8x1xf32> to vector<8x32xf32>
    %10 = arith.subf %2, %9 : vector<8x32xf32>
    %11 = arith.mulf %10, %10 : vector<8x32xf32>
    %cst_7 = arith.constant dense<0.000000e+00> : vector<8xf32>
    %12 = vector.multi_reduction <add>, %11, %cst_7 [1] : vector<8x32xf32> to vector<8xf32>
    %13 = vector.shape_cast %12 : vector<8xf32> to vector<8x1xf32>
    %cst_8 = arith.constant 3.200000e+01 : f32
    %14 = vector.broadcast %cst_8 : f32 to vector<8x1xf32>
    %15 = arith.divf %13, %14 : vector<8x1xf32>
    %16 = vector.broadcast %8 : vector<8x1xf32> to vector<8x32xf32>
    %17 = arith.subf %2, %16 : vector<8x32xf32>
    %cst_9 = arith.constant 9.99999974E-6 : f32
    %18 = vector.broadcast %cst_9 : f32 to vector<8x1xf32>
    %19 = arith.addf %15, %18 : vector<8x1xf32>
    %20 = math.rsqrt %19 : vector<8x1xf32>
    %21 = vector.broadcast %20 : vector<8x1xf32> to vector<8x32xf32>
    %22 = arith.mulf %17, %21 : vector<8x32xf32>
    %23 = vector.broadcast %3 : vector<1x32xf32> to vector<8x32xf32>
    %24 = arith.mulf %22, %23 : vector<8x32xf32>
    %25 = vector.broadcast %4 : vector<1x32xf32> to vector<8x32xf32>
    %26 = arith.addf %24, %25 : vector<8x32xf32>
    %27 = arith.truncf %26 : vector<8x32xf32> to vector<8x32xbf16>
    %c0_10 = arith.constant 0 : index
    %c0_11 = arith.constant 0 : index
    %28 = vector.load %arg5[%c0_10, %c0_11] : memref<32x96xbf16, #tpu.memory_space<vmem>>, vector<32x96xbf16>
    %cst_12 = arith.constant dense<0.000000e+00> : vector<8x96xf32>
    %29 = tpu.matmul %27, %28, %cst_12 {dimension_numbers = #tpu.dot_dimension_numbers<[1], [0], [0], [1], [0, 0, 1, 1], [], []>} : vector<8x32xbf16>, vector<32x96xbf16>, vector<8x96xf32> -> vector<8x96xf32>
    %c0_13 = arith.constant 0 : index
    %c0_14 = arith.constant 0 : index
    %30 = vector.load %arg6[%c0_13, %c0_14] : memref<1x96xf32, #tpu.memory_space<vmem>>, vector<1x96xf32>
    %31 = vector.broadcast %30 : vector<1x96xf32> to vector<8x96xf32>
    %32 = arith.addf %29, %31 : vector<8x96xf32>
    %33 = vector.extract_strided_slice %32 {offsets = [0, 0], sizes = [8, 32], strides = [1, 1]} : vector<8x96xf32> to vector<8x32xf32>
    %34 = vector.extract_strided_slice %32 {offsets = [0, 32], sizes = [8, 32], strides = [1, 1]} : vector<8x96xf32> to vector<8x32xf32>
    %35 = arith.truncf %34 : vector<8x32xf32> to vector<8x32xbf16>
    %36 = vector.extract_strided_slice %32 {offsets = [0, 64], sizes = [8, 32], strides = [1, 1]} : vector<8x96xf32> to vector<8x32xf32>
    %37 = arith.truncf %36 : vector<8x32xf32> to vector<8x32xbf16>
    %c0_15 = arith.constant 0 : index
    %c0_16 = arith.constant 0 : index
    %38 = vector.load %arg7[%c0_15, %c0_16] : memref<1x32xf32, #tpu.memory_space<vmem>>, vector<1x32xf32>
    %39 = vector.broadcast %38 : vector<1x32xf32> to vector<8x32xf32>
    %40 = arith.addf %33, %39 : vector<8x32xf32>
    %cst_17 = arith.constant 0.353553385 : f32
    %41 = vector.broadcast %cst_17 : f32 to vector<8x32xf32>
    %42 = arith.mulf %40, %41 : vector<8x32xf32>
    %43 = arith.truncf %42 : vector<8x32xf32> to vector<8x32xbf16>
    %c0_18 = arith.constant 0 : index
    %c0_19 = arith.constant 0 : index
    %44 = vector.load %arg8[%c0_18, %c0_19] : memref<1x32xf32, #tpu.memory_space<vmem>>, vector<1x32xf32>
    %45 = vector.broadcast %44 : vector<1x32xf32> to vector<8x32xf32>
    %46 = arith.addf %33, %45 : vector<8x32xf32>
    %cst_20 = arith.constant 0.353553385 : f32
    %47 = vector.broadcast %cst_20 : f32 to vector<8x32xf32>
    %48 = arith.mulf %46, %47 : vector<8x32xf32>
    %49 = arith.truncf %48 : vector<8x32xf32> to vector<8x32xbf16>
    %c0_21 = arith.constant 0 : index
    %c0_22 = arith.constant 0 : index
    %50 = vector.load %arg9[%c0_21, %c0_22] : memref<128x32xbf16, #tpu.memory_space<vmem>>, vector<128x32xbf16>
    %c0_23 = arith.constant 0 : index
    %c0_24 = arith.constant 0 : index
    %c0_25 = arith.constant 0 : index
    %51 = vector.load %arg2[%c0_23, %c0_24, %c0_25] : memref<1x1x8xf32, #tpu.memory_space<vmem>>, vector<1x1x8xf32>
    %52 = vector.shape_cast %51 : vector<1x1x8xf32> to vector<1x8xf32>
    %cst_26 = arith.constant 1.000000e+00 : f32
    %53 = vector.broadcast %cst_26 : f32 to vector<1x8xf32>
    %54 = arith.subf %52, %53 : vector<1x8xf32>
    %cst_27 = arith.constant 1.000000e+09 : f32
    %55 = vector.broadcast %cst_27 : f32 to vector<1x8xf32>
    %56 = arith.mulf %54, %55 : vector<1x8xf32>
    %57 = vector.extract_strided_slice %43 {offsets = [0, 0], sizes = [8, 8], strides = [1, 1]} : vector<8x32xbf16> to vector<8x8xbf16>
    %58 = vector.extract_strided_slice %35 {offsets = [0, 0], sizes = [8, 8], strides = [1, 1]} : vector<8x32xbf16> to vector<8x8xbf16>
    %cst_28 = arith.constant dense<0.000000e+00> : vector<8x8xf32>
    %59 = tpu.matmul %57, %58, %cst_28 {dimension_numbers = #tpu.dot_dimension_numbers<[1], [1], [0], [0], [0, 0, 1, 0], [], []>} : vector<8x8xbf16>, vector<8x8xbf16>, vector<8x8xf32> -> vector<8x8xf32>
    %60 = vector.extract_strided_slice %49 {offsets = [0, 0], sizes = [8, 8], strides = [1, 1]} : vector<8x32xbf16> to vector<8x8xbf16>
    %61 = vector.extract_strided_slice %50 {offsets = [0, 0], sizes = [128, 8], strides = [1, 1]} : vector<128x32xbf16> to vector<128x8xbf16>
    %cst_29 = arith.constant dense<0.000000e+00> : vector<8x128xf32>
    %62 = tpu.matmul %60, %61, %cst_29 {dimension_numbers = #tpu.dot_dimension_numbers<[1], [1], [0], [0], [0, 0, 1, 0], [], []>} : vector<8x8xbf16>, vector<128x8xbf16>, vector<8x128xf32> -> vector<8x128xf32>
    %c121_i32 = arith.constant 121 : i32
    %63 = tpu.dynamic_rotate %62 by %c121_i32 dim 1 {stride = 1 : si32, stride_dimension = 0 : si32} : vector<8x128xf32>, i32 -> vector<8x128xf32>
    %64 = vector.extract_strided_slice %63 {offsets = [0, 0], sizes = [8, 8], strides = [1, 1]} : vector<8x128xf32> to vector<8x8xf32>
    %65 = arith.addf %59, %64 : vector<8x8xf32>
    %66 = vector.broadcast %56 : vector<1x8xf32> to vector<8x8xf32>
    %67 = arith.addf %65, %66 : vector<8x8xf32>
    %cst_30 = arith.constant dense<0xFF800000> : vector<8xf32>
    %68 = vector.multi_reduction <maximumf>, %67, %cst_30 [1] : vector<8x8xf32> to vector<8xf32>
    %69 = vector.shape_cast %68 : vector<8xf32> to vector<8x1xf32>
    %70 = vector.broadcast %69 : vector<8x1xf32> to vector<8x8xf32>
    %71 = arith.subf %67, %70 : vector<8x8xf32>
    %72 = math.exp %71 : vector<8x8xf32>
    %cst_31 = arith.constant dense<0.000000e+00> : vector<8xf32>
    %73 = vector.multi_reduction <add>, %72, %cst_31 [1] : vector<8x8xf32> to vector<8xf32>
    %74 = vector.shape_cast %73 : vector<8xf32> to vector<8x1xf32>
    %75 = tpu.reciprocal %74 {approx = true} : vector<8x1xf32> -> vector<8x1xf32>
    %76 = vector.broadcast %75 : vector<8x1xf32> to vector<8x8xf32>
    %77 = arith.mulf %72, %76 : vector<8x8xf32>
    %78 = arith.truncf %77 : vector<8x8xf32> to vector<8x8xbf16>
    %c0_32 = arith.constant 0 : index
    %c0_33 = arith.constant 0 : index
    %c0_34 = arith.constant 0 : index
    %c0_35 = arith.constant 0 : index
    %79 = vector.load %arg13[%c0_32, %c0_33, %c0_34, %c0_35] : memref<1x4x8x8xbf16, #tpu.memory_space<vmem>>, vector<1x1x8x8xbf16>
    %80 = vector.shape_cast %79 : vector<1x1x8x8xbf16> to vector<8x8xbf16>
    %81 = vector.shape_cast %78 : vector<8x8xbf16> to vector<1x1x8x8xbf16>
    tpu.vector_store %arg13[%c0_32, %c0_33, %c0_34, %c0_35], %81 {strides = array<i32>} : memref<1x4x8x8xbf16, #tpu.memory_space<vmem>>, vector<1x1x8x8xbf16>,
    %82 = arith.truncf %77 : vector<8x8xf32> to vector<8x8xbf16>
    %83 = vector.extract_strided_slice %37 {offsets = [0, 0], sizes = [8, 8], strides = [1, 1]} : vector<8x32xbf16> to vector<8x8xbf16>
    %cst_36 = arith.constant dense<0.000000e+00> : vector<8x8xf32>
    %84 = tpu.matmul %82, %83, %cst_36 {dimension_numbers = #tpu.dot_dimension_numbers<[1], [0], [0], [1], [0, 0, 1, 1], [], []>} : vector<8x8xbf16>, vector<8x8xbf16>, vector<8x8xf32> -> vector<8x8xf32>
    %c0_37 = arith.constant 0 : index
    %c0_38 = arith.constant 0 : index
    %85 = vector.load %arg14[%c0_37, %c0_38] : memref<8x32xf32, #tpu.memory_space<vmem>>, vector<8x8xf32>
    tpu.vector_store %arg14[%c0_37, %c0_38], %84 {strides = array<i32>} : memref<8x32xf32, #tpu.memory_space<vmem>>, vector<8x8xf32>,
    %86 = vector.extract_strided_slice %43 {offsets = [0, 8], sizes = [8, 8], strides = [1, 1]} : vector<8x32xbf16> to vector<8x8xbf16>
    %87 = vector.extract_strided_slice %35 {offsets = [0, 8], sizes = [8, 8], strides = [1, 1]} : vector<8x32xbf16> to vector<8x8xbf16>
    %cst_39 = arith.constant dense<0.000000e+00> : vector<8x8xf32>
    %88 = tpu.matmul %86, %87, %cst_39 {dimension_numbers = #tpu.dot_dimension_numbers<[1], [1], [0], [0], [0, 0, 1, 0], [], []>} : vector<8x8xbf16>, vector<8x8xbf16>, vector<8x8xf32> -> vector<8x8xf32>
    %89 = vector.extract_strided_slice %49 {offsets = [0, 8], sizes = [8, 8], strides = [1, 1]} : vector<8x32xbf16> to vector<8x8xbf16>
    %90 = vector.extract_strided_slice %50 {offsets = [0, 8], sizes = [128, 8], strides = [1, 1]} : vector<128x32xbf16> to vector<128x8xbf16>
    %cst_40 = arith.constant dense<0.000000e+00> : vector<8x128xf32>
    %91 = tpu.matmul %89, %90, %cst_40 {dimension_numbers = #tpu.dot_dimension_numbers<[1], [1], [0], [0], [0, 0, 1, 0], [], []>} : vector<8x8xbf16>, vector<128x8xbf16>, vector<8x128xf32> -> vector<8x128xf32>
    %c121_i32_41 = arith.constant 121 : i32
    %92 = tpu.dynamic_rotate %91 by %c121_i32_41 dim 1 {stride = 1 : si32, stride_dimension = 0 : si32} : vector<8x128xf32>, i32 -> vector<8x128xf32>
    %93 = vector.extract_strided_slice %92 {offsets = [0, 0], sizes = [8, 8], strides = [1, 1]} : vector<8x128xf32> to vector<8x8xf32>
    %94 = arith.addf %88, %93 : vector<8x8xf32>
    %95 = vector.broadcast %56 : vector<1x8xf32> to vector<8x8xf32>
    %96 = arith.addf %94, %95 : vector<8x8xf32>
    %cst_42 = arith.constant dense<0xFF800000> : vector<8xf32>
    %97 = vector.multi_reduction <maximumf>, %96, %cst_42 [1] : vector<8x8xf32> to vector<8xf32>
    %98 = vector.shape_cast %97 : vector<8xf32> to vector<8x1xf32>
    %99 = vector.broadcast %98 : vector<8x1xf32> to vector<8x8xf32>
    %100 = arith.subf %96, %99 : vector<8x8xf32>
    %101 = math.exp %100 : vector<8x8xf32>
    %cst_43 = arith.constant dense<0.000000e+00> : vector<8xf32>
    %102 = vector.multi_reduction <add>, %101, %cst_43 [1] : vector<8x8xf32> to vector<8xf32>
    %103 = vector.shape_cast %102 : vector<8xf32> to vector<8x1xf32>
    %104 = tpu.reciprocal %103 {approx = true} : vector<8x1xf32> -> vector<8x1xf32>
    %105 = vector.broadcast %104 : vector<8x1xf32> to vector<8x8xf32>
    %106 = arith.mulf %101, %105 : vector<8x8xf32>
    %107 = arith.truncf %106 : vector<8x8xf32> to vector<8x8xbf16>
    %c0_44 = arith.constant 0 : index
    %c1 = arith.constant 1 : index
    %c0_45 = arith.constant 0 : index
    %c0_46 = arith.constant 0 : index
    %108 = vector.load %arg13[%c0_44, %c1, %c0_45, %c0_46] : memref<1x4x8x8xbf16, #tpu.memory_space<vmem>>, vector<1x1x8x8xbf16>
    %109 = vector.shape_cast %108 : vector<1x1x8x8xbf16> to vector<8x8xbf16>
    %110 = vector.shape_cast %107 : vector<8x8xbf16> to vector<1x1x8x8xbf16>
    tpu.vector_store %arg13[%c0_44, %c1, %c0_45, %c0_46], %110 {strides = array<i32>} : memref<1x4x8x8xbf16, #tpu.memory_space<vmem>>, vector<1x1x8x8xbf16>,
    %111 = arith.truncf %106 : vector<8x8xf32> to vector<8x8xbf16>
    %112 = vector.extract_strided_slice %37 {offsets = [0, 8], sizes = [8, 8], strides = [1, 1]} : vector<8x32xbf16> to vector<8x8xbf16>
    %cst_47 = arith.constant dense<0.000000e+00> : vector<8x8xf32>
    %113 = tpu.matmul %111, %112, %cst_47 {dimension_numbers = #tpu.dot_dimension_numbers<[1], [0], [0], [1], [0, 0, 1, 1], [], []>} : vector<8x8xbf16>, vector<8x8xbf16>, vector<8x8xf32> -> vector<8x8xf32>
    %c0_48 = arith.constant 0 : index
    %c8 = arith.constant 8 : index
    %114 = vector.load %arg14[%c0_48, %c8] : memref<8x32xf32, #tpu.memory_space<vmem>>, vector<8x8xf32>
    tpu.vector_store %arg14[%c0_48, %c8], %113 {strides = array<i32>} : memref<8x32xf32, #tpu.memory_space<vmem>>, vector<8x8xf32>,
    %115 = vector.extract_strided_slice %43 {offsets = [0, 16], sizes = [8, 8], strides = [1, 1]} : vector<8x32xbf16> to vector<8x8xbf16>
    %116 = vector.extract_strided_slice %35 {offsets = [0, 16], sizes = [8, 8], strides = [1, 1]} : vector<8x32xbf16> to vector<8x8xbf16>
    %cst_49 = arith.constant dense<0.000000e+00> : vector<8x8xf32>
    %117 = tpu.matmul %115, %116, %cst_49 {dimension_numbers = #tpu.dot_dimension_numbers<[1], [1], [0], [0], [0, 0, 1, 0], [], []>} : vector<8x8xbf16>, vector<8x8xbf16>, vector<8x8xf32> -> vector<8x8xf32>
    %118 = vector.extract_strided_slice %49 {offsets = [0, 16], sizes = [8, 8], strides = [1, 1]} : vector<8x32xbf16> to vector<8x8xbf16>
    %119 = vector.extract_strided_slice %50 {offsets = [0, 16], sizes = [128, 8], strides = [1, 1]} : vector<128x32xbf16> to vector<128x8xbf16>
    %cst_50 = arith.constant dense<0.000000e+00> : vector<8x128xf32>
    %120 = tpu.matmul %118, %119, %cst_50 {dimension_numbers = #tpu.dot_dimension_numbers<[1], [1], [0], [0], [0, 0, 1, 0], [], []>} : vector<8x8xbf16>, vector<128x8xbf16>, vector<8x128xf32> -> vector<8x128xf32>
    %c121_i32_51 = arith.constant 121 : i32
    %121 = tpu.dynamic_rotate %120 by %c121_i32_51 dim 1 {stride = 1 : si32, stride_dimension = 0 : si32} : vector<8x128xf32>, i32 -> vector<8x128xf32>
    %122 = vector.extract_strided_slice %121 {offsets = [0, 0], sizes = [8, 8], strides = [1, 1]} : vector<8x128xf32> to vector<8x8xf32>
    %123 = arith.addf %117, %122 : vector<8x8xf32>
    %124 = vector.broadcast %56 : vector<1x8xf32> to vector<8x8xf32>
    %125 = arith.addf %123, %124 : vector<8x8xf32>
    %cst_52 = arith.constant dense<0xFF800000> : vector<8xf32>
    %126 = vector.multi_reduction <maximumf>, %125, %cst_52 [1] : vector<8x8xf32> to vector<8xf32>
    %127 = vector.shape_cast %126 : vector<8xf32> to vector<8x1xf32>
    %128 = vector.broadcast %127 : vector<8x1xf32> to vector<8x8xf32>
    %129 = arith.subf %125, %128 : vector<8x8xf32>
    %130 = math.exp %129 : vector<8x8xf32>
    %cst_53 = arith.constant dense<0.000000e+00> : vector<8xf32>
    %131 = vector.multi_reduction <add>, %130, %cst_53 [1] : vector<8x8xf32> to vector<8xf32>
    %132 = vector.shape_cast %131 : vector<8xf32> to vector<8x1xf32>
    %133 = tpu.reciprocal %132 {approx = true} : vector<8x1xf32> -> vector<8x1xf32>
    %134 = vector.broadcast %133 : vector<8x1xf32> to vector<8x8xf32>
    %135 = arith.mulf %130, %134 : vector<8x8xf32>
    %136 = arith.truncf %135 : vector<8x8xf32> to vector<8x8xbf16>
    %c0_54 = arith.constant 0 : index
    %c2 = arith.constant 2 : index
    %c0_55 = arith.constant 0 : index
    %c0_56 = arith.constant 0 : index
    %137 = vector.load %arg13[%c0_54, %c2, %c0_55, %c0_56] : memref<1x4x8x8xbf16, #tpu.memory_space<vmem>>, vector<1x1x8x8xbf16>
    %138 = vector.shape_cast %137 : vector<1x1x8x8xbf16> to vector<8x8xbf16>
    %139 = vector.shape_cast %136 : vector<8x8xbf16> to vector<1x1x8x8xbf16>
    tpu.vector_store %arg13[%c0_54, %c2, %c0_55, %c0_56], %139 {strides = array<i32>} : memref<1x4x8x8xbf16, #tpu.memory_space<vmem>>, vector<1x1x8x8xbf16>,
    %140 = arith.truncf %135 : vector<8x8xf32> to vector<8x8xbf16>
    %141 = vector.extract_strided_slice %37 {offsets = [0, 16], sizes = [8, 8], strides = [1, 1]} : vector<8x32xbf16> to vector<8x8xbf16>
    %cst_57 = arith.constant dense<0.000000e+00> : vector<8x8xf32>
    %142 = tpu.matmul %140, %141, %cst_57 {dimension_numbers = #tpu.dot_dimension_numbers<[1], [0], [0], [1], [0, 0, 1, 1], [], []>} : vector<8x8xbf16>, vector<8x8xbf16>, vector<8x8xf32> -> vector<8x8xf32>
    %c0_58 = arith.constant 0 : index
    %c16 = arith.constant 16 : index
    %143 = vector.load %arg14[%c0_58, %c16] : memref<8x32xf32, #tpu.memory_space<vmem>>, vector<8x8xf32>
    tpu.vector_store %arg14[%c0_58, %c16], %142 {strides = array<i32>} : memref<8x32xf32, #tpu.memory_space<vmem>>, vector<8x8xf32>,
    %144 = vector.extract_strided_slice %43 {offsets = [0, 24], sizes = [8, 8], strides = [1, 1]} : vector<8x32xbf16> to vector<8x8xbf16>
    %145 = vector.extract_strided_slice %35 {offsets = [0, 24], sizes = [8, 8], strides = [1, 1]} : vector<8x32xbf16> to vector<8x8xbf16>
    %cst_59 = arith.constant dense<0.000000e+00> : vector<8x8xf32>
    %146 = tpu.matmul %144, %145, %cst_59 {dimension_numbers = #tpu.dot_dimension_numbers<[1], [1], [0], [0], [0, 0, 1, 0], [], []>} : vector<8x8xbf16>, vector<8x8xbf16>, vector<8x8xf32> -> vector<8x8xf32>
    %147 = vector.extract_strided_slice %49 {offsets = [0, 24], sizes = [8, 8], strides = [1, 1]} : vector<8x32xbf16> to vector<8x8xbf16>
    %148 = vector.extract_strided_slice %50 {offsets = [0, 24], sizes = [128, 8], strides = [1, 1]} : vector<128x32xbf16> to vector<128x8xbf16>
    %cst_60 = arith.constant dense<0.000000e+00> : vector<8x128xf32>
    %149 = tpu.matmul %147, %148, %cst_60 {dimension_numbers = #tpu.dot_dimension_numbers<[1], [1], [0], [0], [0, 0, 1, 0], [], []>} : vector<8x8xbf16>, vector<128x8xbf16>, vector<8x128xf32> -> vector<8x128xf32>
    %c121_i32_61 = arith.constant 121 : i32
    %150 = tpu.dynamic_rotate %149 by %c121_i32_61 dim 1 {stride = 1 : si32, stride_dimension = 0 : si32} : vector<8x128xf32>, i32 -> vector<8x128xf32>
    %151 = vector.extract_strided_slice %150 {offsets = [0, 0], sizes = [8, 8], strides = [1, 1]} : vector<8x128xf32> to vector<8x8xf32>
    %152 = arith.addf %146, %151 : vector<8x8xf32>
    %153 = vector.broadcast %56 : vector<1x8xf32> to vector<8x8xf32>
    %154 = arith.addf %152, %153 : vector<8x8xf32>
    %cst_62 = arith.constant dense<0xFF800000> : vector<8xf32>
    %155 = vector.multi_reduction <maximumf>, %154, %cst_62 [1] : vector<8x8xf32> to vector<8xf32>
    %156 = vector.shape_cast %155 : vector<8xf32> to vector<8x1xf32>
    %157 = vector.broadcast %156 : vector<8x1xf32> to vector<8x8xf32>
    %158 = arith.subf %154, %157 : vector<8x8xf32>
    %159 = math.exp %158 : vector<8x8xf32>
    %cst_63 = arith.constant dense<0.000000e+00> : vector<8xf32>
    %160 = vector.multi_reduction <add>, %159, %cst_63 [1] : vector<8x8xf32> to vector<8xf32>
    %161 = vector.shape_cast %160 : vector<8xf32> to vector<8x1xf32>
    %162 = tpu.reciprocal %161 {approx = true} : vector<8x1xf32> -> vector<8x1xf32>
    %163 = vector.broadcast %162 : vector<8x1xf32> to vector<8x8xf32>
    %164 = arith.mulf %159, %163 : vector<8x8xf32>
    %165 = arith.truncf %164 : vector<8x8xf32> to vector<8x8xbf16>
    %c0_64 = arith.constant 0 : index
    %c3 = arith.constant 3 : index
    %c0_65 = arith.constant 0 : index
    %c0_66 = arith.constant 0 : index
    %166 = vector.load %arg13[%c0_64, %c3, %c0_65, %c0_66] : memref<1x4x8x8xbf16, #tpu.memory_space<vmem>>, vector<1x1x8x8xbf16>
    %167 = vector.shape_cast %166 : vector<1x1x8x8xbf16> to vector<8x8xbf16>
    %168 = vector.shape_cast %165 : vector<8x8xbf16> to vector<1x1x8x8xbf16>
    tpu.vector_store %arg13[%c0_64, %c3, %c0_65, %c0_66], %168 {strides = array<i32>} : memref<1x4x8x8xbf16, #tpu.memory_space<vmem>>, vector<1x1x8x8xbf16>,
    %169 = arith.truncf %164 : vector<8x8xf32> to vector<8x8xbf16>
    %170 = vector.extract_strided_slice %37 {offsets = [0, 24], sizes = [8, 8], strides = [1, 1]} : vector<8x32xbf16> to vector<8x8xbf16>
    %cst_67 = arith.constant dense<0.000000e+00> : vector<8x8xf32>
    %171 = tpu.matmul %169, %170, %cst_67 {dimension_numbers = #tpu.dot_dimension_numbers<[1], [0], [0], [1], [0, 0, 1, 1], [], []>} : vector<8x8xbf16>, vector<8x8xbf16>, vector<8x8xf32> -> vector<8x8xf32>
    %c0_68 = arith.constant 0 : index
    %c24 = arith.constant 24 : index
    %172 = vector.load %arg14[%c0_68, %c24] : memref<8x32xf32, #tpu.memory_space<vmem>>, vector<8x8xf32>
    tpu.vector_store %arg14[%c0_68, %c24], %171 {strides = array<i32>} : memref<8x32xf32, #tpu.memory_space<vmem>>, vector<8x8xf32>,
    %c0_69 = arith.constant 0 : index
    %c0_70 = arith.constant 0 : index
    %173 = vector.load %arg14[%c0_69, %c0_70] : memref<8x32xf32, #tpu.memory_space<vmem>>, vector<8x32xf32>
    %174 = arith.truncf %173 : vector<8x32xf32> to vector<8x32xbf16>
    %c0_71 = arith.constant 0 : index
    %c0_72 = arith.constant 0 : index
    %175 = vector.load %arg10[%c0_71, %c0_72] : memref<32x32xbf16, #tpu.memory_space<vmem>>, vector<32x32xbf16>
    %cst_73 = arith.constant dense<0.000000e+00> : vector<8x32xf32>
    %176 = tpu.matmul %174, %175, %cst_73 {dimension_numbers = #tpu.dot_dimension_numbers<[1], [0], [0], [1], [0, 0, 1, 1], [], []>} : vector<8x32xbf16>, vector<32x32xbf16>, vector<8x32xf32> -> vector<8x32xf32>
    %c0_74 = arith.constant 0 : index
    %c0_75 = arith.constant 0 : index
    %177 = vector.load %arg11[%c0_74, %c0_75] : memref<1x32xf32, #tpu.memory_space<vmem>>, vector<1x32xf32>
    %178 = vector.broadcast %177 : vector<1x32xf32> to vector<8x32xf32>
    %179 = arith.addf %176, %178 : vector<8x32xf32>
    %180 = arith.addf %2, %179 : vector<8x32xf32>
    %181 = arith.truncf %180 : vector<8x32xf32> to vector<8x32xbf16>
    %c0_76 = arith.constant 0 : index
    %c0_77 = arith.constant 0 : index
    %c0_78 = arith.constant 0 : index
    %182 = vector.load %arg12[%c0_76, %c0_77, %c0_78] : memref<1x8x32xbf16, #tpu.memory_space<vmem>>, vector<1x8x32xbf16>
    %183 = vector.shape_cast %182 : vector<1x8x32xbf16> to vector<8x32xbf16>
    %184 = vector.shape_cast %181 : vector<8x32xbf16> to vector<1x8x32xbf16>
    tpu.vector_store %arg12[%c0_76, %c0_77, %c0_78], %184 {strides = array<i32>} : memref<1x8x32xbf16, #tpu.memory_space<vmem>>, vector<1x8x32xbf16>,
    return
  }
  func.func @transform_0(%arg0: i32) -> (i32, i32, i32) {
    %c0_i32 = arith.constant 0 : i32
    %c0_i32_0 = arith.constant 0 : i32
    %c0_i32_1 = arith.constant 0 : i32
    return %arg0, %c0_i32, %c0_i32_0 : i32, i32, i32
  }
  func.func @transform_1(%arg0: i32) -> (i32, i32, i32) {
    %c0_i32 = arith.constant 0 : i32
    %c0_i32_0 = arith.constant 0 : i32
    %c0_i32_1 = arith.constant 0 : i32
    return %arg0, %c0_i32, %c0_i32_0 : i32, i32, i32
  }
  func.func @transform_2(%arg0: i32) -> (i32, i32) {
    %c0_i32 = arith.constant 0 : i32
    %c0_i32_0 = arith.constant 0 : i32
    %c0_i32_1 = arith.constant 0 : i32
    return %c0_i32, %c0_i32_0 : i32, i32
  }
  func.func @transform_3(%arg0: i32) -> (i32, i32) {
    %c0_i32 = arith.constant 0 : i32
    %c0_i32_0 = arith.constant 0 : i32
    %c0_i32_1 = arith.constant 0 : i32
    return %c0_i32, %c0_i32_0 : i32, i32
  }
  func.func @transform_4(%arg0: i32) -> (i32, i32) {
    %c0_i32 = arith.constant 0 : i32
    %c0_i32_0 = arith.constant 0 : i32
    %c0_i32_1 = arith.constant 0 : i32
    return %c0_i32, %c0_i32_0 : i32, i32
  }
  func.func @transform_5(%arg0: i32) -> (i32, i32) {
    %c0_i32 = arith.constant 0 : i32
    %c0_i32_0 = arith.constant 0 : i32
    %c0_i32_1 = arith.constant 0 : i32
    return %c0_i32, %c0_i32_0 : i32, i32
  }
  func.func @transform_6(%arg0: i32) -> (i32, i32) {
    %c0_i32 = arith.constant 0 : i32
    %c0_i32_0 = arith.constant 0 : i32
    %c0_i32_1 = arith.constant 0 : i32
    return %c0_i32, %c0_i32_0 : i32, i32
  }
  func.func @transform_7(%arg0: i32) -> (i32, i32) {
    %c0_i32 = arith.constant 0 : i32
    %c0_i32_0 = arith.constant 0 : i32
    %c0_i32_1 = arith.constant 0 : i32
    return %c0_i32, %c0_i32_0 : i32, i32
  }
  func.func @transform_8(%arg0: i32) -> (i32, i32) {
    %c0_i32 = arith.constant 0 : i32
    %c0_i32_0 = arith.constant 0 : i32
    %c0_i32_1 = arith.constant 0 : i32
    return %c0_i32, %c0_i32_0 : i32, i32
  }
  func.func @transform_9(%arg0: i32) -> (i32, i32) {
    %c0_i32 = arith.constant 0 : i32
    %c0_i32_0 = arith.constant 0 : i32
    %c0_i32_1 = arith.constant 0 : i32
    return %c0_i32, %c0_i32_0 : i32, i32
  }
  func.func @transform_10(%arg0: i32) -> (i32, i32) {
    %c0_i32 = arith.constant 0 : i32
    %c0_i32_0 = arith.constant 0 : i32
    %c0_i32_1 = arith.constant 0 : i32
    return %c0_i32, %c0_i32_0 : i32, i32
  }
  func.func @transform_11(%arg0: i32) -> (i32, i32, i32) {
    %c0_i32 = arith.constant 0 : i32
    %c0_i32_0 = arith.constant 0 : i32
    %c0_i32_1 = arith.constant 0 : i32
    return %arg0, %c0_i32, %c0_i32_0 : i32, i32, i32
  }
  func.func @transform_12(%arg0: i32) -> (i32, i32, i32, i32) {
    %c0_i32 = arith.constant 0 : i32
    %c0_i32_0 = arith.constant 0 : i32
    %c0_i32_1 = arith.constant 0 : i32
    %c0_i32_2 = arith.constant 0 : i32
    return %arg0, %c0_i32, %c0_i32_0, %c0_i32_1 : i32, i32, i32, i32
  }
}

module attributes {stable_mosaic.version = 11 : i64} {
  func.func @_conv_kernel(%arg0: i32, %arg1: memref<1x8x32xbf16, #tpu.memory_space<vmem>>, %arg2: memref<1x8x1xf32, #tpu.memory_space<vmem>>, %arg3: memref<1x32xf32, #tpu.memory_space<vmem>>, %arg4: memref<1x32xf32, #tpu.memory_space<vmem>>, %arg5: memref<32x64xbf16, #tpu.memory_space<vmem>>, %arg6: memref<1x64xf32, #tpu.memory_space<vmem>>, %arg7: memref<3x32xf32, #tpu.memory_space<vmem>>, %arg8: memref<1x32xf32, #tpu.memory_space<vmem>>, %arg9: memref<1x32xf32, #tpu.memory_space<vmem>>, %arg10: memref<32x32xbf16, #tpu.memory_space<vmem>>, %arg11: memref<1x32xf32, #tpu.memory_space<vmem>>, %arg12: memref<1x8x32xbf16, #tpu.memory_space<vmem>>, %arg13: memref<10x32xf32, #tpu.memory_space<vmem>>) attributes {dimension_semantics = [#tpu.dimension_semantics<parallel>], iteration_bounds = array<i64: 2>, scalar_prefetch = 0 : i64, scratch_operands = 1 : i64, tpu.core_type = #tpu.core_type<tc>, window_params = [{transform_indices = @transform_0, window_bounds = array<i64: 1, 8, 32>}, {transform_indices = @transform_1, window_bounds = array<i64: 1, 8, 1>}, {pipeline_mode = #tpu.pipeline_mode<synchronous>, transform_indices = @transform_2, window_bounds = array<i64: 1, 32>}, {pipeline_mode = #tpu.pipeline_mode<synchronous>, transform_indices = @transform_3, window_bounds = array<i64: 1, 32>}, {pipeline_mode = #tpu.pipeline_mode<synchronous>, transform_indices = @transform_4, window_bounds = array<i64: 32, 64>}, {pipeline_mode = #tpu.pipeline_mode<synchronous>, transform_indices = @transform_5, window_bounds = array<i64: 1, 64>}, {pipeline_mode = #tpu.pipeline_mode<synchronous>, transform_indices = @transform_6, window_bounds = array<i64: 3, 32>}, {pipeline_mode = #tpu.pipeline_mode<synchronous>, transform_indices = @transform_7, window_bounds = array<i64: 1, 32>}, {pipeline_mode = #tpu.pipeline_mode<synchronous>, transform_indices = @transform_8, window_bounds = array<i64: 1, 32>}, {pipeline_mode = #tpu.pipeline_mode<synchronous>, transform_indices = @transform_9, window_bounds = array<i64: 32, 32>}, {pipeline_mode = #tpu.pipeline_mode<synchronous>, transform_indices = @transform_10, window_bounds = array<i64: 1, 32>}, {transform_indices = @transform_11, window_bounds = array<i64: 1, 8, 32>}]} {
    %c0 = arith.constant 0 : index
    %c0_0 = arith.constant 0 : index
    %c0_1 = arith.constant 0 : index
    %0 = vector.load %arg1[%c0, %c0_0, %c0_1] : memref<1x8x32xbf16, #tpu.memory_space<vmem>>, vector<1x8x32xbf16>
    %1 = vector.shape_cast %0 : vector<1x8x32xbf16> to vector<8x32xbf16>
    %2 = arith.extf %1 : vector<8x32xbf16> to vector<8x32xf32>
    %c0_2 = arith.constant 0 : index
    %c0_3 = arith.constant 0 : index
    %3 = vector.load %arg3[%c0_2, %c0_3] : memref<1x32xf32, #tpu.memory_space<vmem>>, vector<1x32xf32>
    %c0_4 = arith.constant 0 : index
    %c0_5 = arith.constant 0 : index
    %4 = vector.load %arg4[%c0_4, %c0_5] : memref<1x32xf32, #tpu.memory_space<vmem>>, vector<1x32xf32>
    %cst = arith.constant dense<0.000000e+00> : vector<8xf32>
    %5 = vector.multi_reduction <add>, %2, %cst [1] : vector<8x32xf32> to vector<8xf32>
    %6 = vector.shape_cast %5 : vector<8xf32> to vector<8x1xf32>
    %cst_6 = arith.constant 3.200000e+01 : f32
    %7 = vector.broadcast %cst_6 : f32 to vector<8x1xf32>
    %8 = arith.divf %6, %7 : vector<8x1xf32>
    %9 = vector.broadcast %8 : vector<8x1xf32> to vector<8x32xf32>
    %10 = arith.subf %2, %9 : vector<8x32xf32>
    %11 = arith.mulf %10, %10 : vector<8x32xf32>
    %cst_7 = arith.constant dense<0.000000e+00> : vector<8xf32>
    %12 = vector.multi_reduction <add>, %11, %cst_7 [1] : vector<8x32xf32> to vector<8xf32>
    %13 = vector.shape_cast %12 : vector<8xf32> to vector<8x1xf32>
    %cst_8 = arith.constant 3.200000e+01 : f32
    %14 = vector.broadcast %cst_8 : f32 to vector<8x1xf32>
    %15 = arith.divf %13, %14 : vector<8x1xf32>
    %16 = vector.broadcast %8 : vector<8x1xf32> to vector<8x32xf32>
    %17 = arith.subf %2, %16 : vector<8x32xf32>
    %cst_9 = arith.constant 9.99999974E-6 : f32
    %18 = vector.broadcast %cst_9 : f32 to vector<8x1xf32>
    %19 = arith.addf %15, %18 : vector<8x1xf32>
    %20 = math.rsqrt %19 : vector<8x1xf32>
    %21 = vector.broadcast %20 : vector<8x1xf32> to vector<8x32xf32>
    %22 = arith.mulf %17, %21 : vector<8x32xf32>
    %23 = vector.broadcast %3 : vector<1x32xf32> to vector<8x32xf32>
    %24 = arith.mulf %22, %23 : vector<8x32xf32>
    %25 = vector.broadcast %4 : vector<1x32xf32> to vector<8x32xf32>
    %26 = arith.addf %24, %25 : vector<8x32xf32>
    %27 = arith.truncf %26 : vector<8x32xf32> to vector<8x32xbf16>
    %c0_10 = arith.constant 0 : index
    %c0_11 = arith.constant 0 : index
    %28 = vector.load %arg5[%c0_10, %c0_11] : memref<32x64xbf16, #tpu.memory_space<vmem>>, vector<32x64xbf16>
    %cst_12 = arith.constant dense<0.000000e+00> : vector<8x64xf32>
    %29 = tpu.matmul %27, %28, %cst_12 {dimension_numbers = #tpu.dot_dimension_numbers<[1], [0], [0], [1], [0, 0, 1, 1], [], []>} : vector<8x32xbf16>, vector<32x64xbf16>, vector<8x64xf32> -> vector<8x64xf32>
    %c0_13 = arith.constant 0 : index
    %c0_14 = arith.constant 0 : index
    %30 = vector.load %arg6[%c0_13, %c0_14] : memref<1x64xf32, #tpu.memory_space<vmem>>, vector<1x64xf32>
    %31 = vector.broadcast %30 : vector<1x64xf32> to vector<8x64xf32>
    %32 = arith.addf %29, %31 : vector<8x64xf32>
    %33 = vector.extract_strided_slice %32 {offsets = [0, 0], sizes = [8, 32], strides = [1, 1]} : vector<8x64xf32> to vector<8x32xf32>
    %34 = vector.extract_strided_slice %32 {offsets = [0, 32], sizes = [8, 32], strides = [1, 1]} : vector<8x64xf32> to vector<8x32xf32>
    %35 = arith.negf %34 : vector<8x32xf32>
    %36 = math.exp %35 : vector<8x32xf32>
    %cst_15 = arith.constant 1.000000e+00 : f32
    %37 = vector.broadcast %cst_15 : f32 to vector<8x32xf32>
    %38 = arith.addf %37, %36 : vector<8x32xf32>
    %39 = arith.divf %37, %38 : vector<8x32xf32>
    %40 = arith.mulf %33, %39 : vector<8x32xf32>
    %c0_16 = arith.constant 0 : index
    %c0_17 = arith.constant 0 : index
    %c0_18 = arith.constant 0 : index
    %41 = vector.load %arg2[%c0_16, %c0_17, %c0_18] : memref<1x8x1xf32, #tpu.memory_space<vmem>>, vector<1x8x1xf32>
    %42 = vector.shape_cast %41 : vector<1x8x1xf32> to vector<8x1xf32>
    %43 = vector.broadcast %42 : vector<8x1xf32> to vector<8x32xf32>
    %44 = arith.mulf %40, %43 : vector<8x32xf32>
    %cst_19 = arith.constant 0.000000e+00 : f32
    %45 = vector.broadcast %cst_19 : f32 to vector<1x32xf32>
    %c0_20 = arith.constant 0 : index
    %c0_21 = arith.constant 0 : index
    %46 = vector.load %arg13[%c0_20, %c0_21] : memref<10x32xf32, #tpu.memory_space<vmem>>, vector<1x32xf32>
    tpu.vector_store %arg13[%c0_20, %c0_21], %45 {strides = array<i32>} : memref<10x32xf32, #tpu.memory_space<vmem>>, vector<1x32xf32>,
    %cst_22 = arith.constant 0.000000e+00 : f32
    %47 = vector.broadcast %cst_22 : f32 to vector<1x32xf32>
    %c9 = arith.constant 9 : index
    %c0_23 = arith.constant 0 : index
    %48 = vector.load %arg13[%c9, %c0_23] : memref<10x32xf32, #tpu.memory_space<vmem>>, vector<1x32xf32>
    tpu.vector_store %arg13[%c9, %c0_23], %47 {strides = array<i32>} : memref<10x32xf32, #tpu.memory_space<vmem>>, vector<1x32xf32>,
    %c1 = arith.constant 1 : index
    %c0_24 = arith.constant 0 : index
    %49 = vector.load %arg13[%c1, %c0_24] : memref<10x32xf32, #tpu.memory_space<vmem>>, vector<8x32xf32>
    tpu.vector_store %arg13[%c1, %c0_24], %44 {strides = array<i32>} : memref<10x32xf32, #tpu.memory_space<vmem>>, vector<8x32xf32>,
    %cst_25 = arith.constant 0.000000e+00 : f32
    %50 = vector.broadcast %cst_25 : f32 to vector<8x32xf32>
    %c0_26 = arith.constant 0 : index
    %c0_27 = arith.constant 0 : index
    %51 = vector.load %arg13[%c0_26, %c0_27] : memref<10x32xf32, #tpu.memory_space<vmem>>, vector<8x32xf32>
    %c0_28 = arith.constant 0 : index
    %c0_29 = arith.constant 0 : index
    %52 = vector.load %arg7[%c0_28, %c0_29] : memref<3x32xf32, #tpu.memory_space<vmem>>, vector<1x32xf32>
    %53 = vector.broadcast %52 : vector<1x32xf32> to vector<8x32xf32>
    %54 = arith.mulf %51, %53 : vector<8x32xf32>
    %55 = arith.addf %50, %54 : vector<8x32xf32>
    %c1_30 = arith.constant 1 : index
    %c0_31 = arith.constant 0 : index
    %56 = vector.load %arg13[%c1_30, %c0_31] : memref<10x32xf32, #tpu.memory_space<vmem>>, vector<8x32xf32>
    %c1_32 = arith.constant 1 : index
    %c0_33 = arith.constant 0 : index
    %57 = vector.load %arg7[%c1_32, %c0_33] : memref<3x32xf32, #tpu.memory_space<vmem>>, vector<1x32xf32>
    %58 = vector.broadcast %57 : vector<1x32xf32> to vector<8x32xf32>
    %59 = arith.mulf %56, %58 : vector<8x32xf32>
    %60 = arith.addf %55, %59 : vector<8x32xf32>
    %c2 = arith.constant 2 : index
    %c0_34 = arith.constant 0 : index
    %61 = vector.load %arg13[%c2, %c0_34] : memref<10x32xf32, #tpu.memory_space<vmem>>, vector<8x32xf32>
    %c2_35 = arith.constant 2 : index
    %c0_36 = arith.constant 0 : index
    %62 = vector.load %arg7[%c2_35, %c0_36] : memref<3x32xf32, #tpu.memory_space<vmem>>, vector<1x32xf32>
    %63 = vector.broadcast %62 : vector<1x32xf32> to vector<8x32xf32>
    %64 = arith.mulf %61, %63 : vector<8x32xf32>
    %65 = arith.addf %60, %64 : vector<8x32xf32>
    %c0_37 = arith.constant 0 : index
    %c0_38 = arith.constant 0 : index
    %66 = vector.load %arg8[%c0_37, %c0_38] : memref<1x32xf32, #tpu.memory_space<vmem>>, vector<1x32xf32>
    %67 = vector.broadcast %66 : vector<1x32xf32> to vector<8x32xf32>
    %68 = arith.mulf %65, %67 : vector<8x32xf32>
    %c0_39 = arith.constant 0 : index
    %c0_40 = arith.constant 0 : index
    %69 = vector.load %arg9[%c0_39, %c0_40] : memref<1x32xf32, #tpu.memory_space<vmem>>, vector<1x32xf32>
    %70 = vector.broadcast %69 : vector<1x32xf32> to vector<8x32xf32>
    %71 = arith.addf %68, %70 : vector<8x32xf32>
    %72 = arith.negf %71 : vector<8x32xf32>
    %73 = math.exp %72 : vector<8x32xf32>
    %cst_41 = arith.constant 1.000000e+00 : f32
    %74 = vector.broadcast %cst_41 : f32 to vector<8x32xf32>
    %75 = arith.addf %74, %73 : vector<8x32xf32>
    %76 = arith.divf %74, %75 : vector<8x32xf32>
    %77 = arith.mulf %71, %76 : vector<8x32xf32>
    %78 = arith.truncf %77 : vector<8x32xf32> to vector<8x32xbf16>
    %c0_42 = arith.constant 0 : index
    %c0_43 = arith.constant 0 : index
    %79 = vector.load %arg10[%c0_42, %c0_43] : memref<32x32xbf16, #tpu.memory_space<vmem>>, vector<32x32xbf16>
    %cst_44 = arith.constant dense<0.000000e+00> : vector<8x32xf32>
    %80 = tpu.matmul %78, %79, %cst_44 {dimension_numbers = #tpu.dot_dimension_numbers<[1], [0], [0], [1], [0, 0, 1, 1], [], []>} : vector<8x32xbf16>, vector<32x32xbf16>, vector<8x32xf32> -> vector<8x32xf32>
    %c0_45 = arith.constant 0 : index
    %c0_46 = arith.constant 0 : index
    %81 = vector.load %arg11[%c0_45, %c0_46] : memref<1x32xf32, #tpu.memory_space<vmem>>, vector<1x32xf32>
    %82 = vector.broadcast %81 : vector<1x32xf32> to vector<8x32xf32>
    %83 = arith.addf %80, %82 : vector<8x32xf32>
    %84 = arith.addf %2, %83 : vector<8x32xf32>
    %85 = arith.truncf %84 : vector<8x32xf32> to vector<8x32xbf16>
    %c0_47 = arith.constant 0 : index
    %c0_48 = arith.constant 0 : index
    %c0_49 = arith.constant 0 : index
    %86 = vector.load %arg12[%c0_47, %c0_48, %c0_49] : memref<1x8x32xbf16, #tpu.memory_space<vmem>>, vector<1x8x32xbf16>
    %87 = vector.shape_cast %86 : vector<1x8x32xbf16> to vector<8x32xbf16>
    %88 = vector.shape_cast %85 : vector<8x32xbf16> to vector<1x8x32xbf16>
    tpu.vector_store %arg12[%c0_47, %c0_48, %c0_49], %88 {strides = array<i32>} : memref<1x8x32xbf16, #tpu.memory_space<vmem>>, vector<1x8x32xbf16>,
    return
  }
  func.func @transform_0(%arg0: i32) -> (i32, i32, i32) {
    %c0_i32 = arith.constant 0 : i32
    %c0_i32_0 = arith.constant 0 : i32
    %c0_i32_1 = arith.constant 0 : i32
    return %arg0, %c0_i32, %c0_i32_0 : i32, i32, i32
  }
  func.func @transform_1(%arg0: i32) -> (i32, i32, i32) {
    %c0_i32 = arith.constant 0 : i32
    %c0_i32_0 = arith.constant 0 : i32
    %c0_i32_1 = arith.constant 0 : i32
    return %arg0, %c0_i32, %c0_i32_0 : i32, i32, i32
  }
  func.func @transform_2(%arg0: i32) -> (i32, i32) {
    %c0_i32 = arith.constant 0 : i32
    %c0_i32_0 = arith.constant 0 : i32
    %c0_i32_1 = arith.constant 0 : i32
    return %c0_i32, %c0_i32_0 : i32, i32
  }
  func.func @transform_3(%arg0: i32) -> (i32, i32) {
    %c0_i32 = arith.constant 0 : i32
    %c0_i32_0 = arith.constant 0 : i32
    %c0_i32_1 = arith.constant 0 : i32
    return %c0_i32, %c0_i32_0 : i32, i32
  }
  func.func @transform_4(%arg0: i32) -> (i32, i32) {
    %c0_i32 = arith.constant 0 : i32
    %c0_i32_0 = arith.constant 0 : i32
    %c0_i32_1 = arith.constant 0 : i32
    return %c0_i32, %c0_i32_0 : i32, i32
  }
  func.func @transform_5(%arg0: i32) -> (i32, i32) {
    %c0_i32 = arith.constant 0 : i32
    %c0_i32_0 = arith.constant 0 : i32
    %c0_i32_1 = arith.constant 0 : i32
    return %c0_i32, %c0_i32_0 : i32, i32
  }
  func.func @transform_6(%arg0: i32) -> (i32, i32) {
    %c0_i32 = arith.constant 0 : i32
    %c0_i32_0 = arith.constant 0 : i32
    %c0_i32_1 = arith.constant 0 : i32
    return %c0_i32, %c0_i32_0 : i32, i32
  }
  func.func @transform_7(%arg0: i32) -> (i32, i32) {
    %c0_i32 = arith.constant 0 : i32
    %c0_i32_0 = arith.constant 0 : i32
    %c0_i32_1 = arith.constant 0 : i32
    return %c0_i32, %c0_i32_0 : i32, i32
  }
  func.func @transform_8(%arg0: i32) -> (i32, i32) {
    %c0_i32 = arith.constant 0 : i32
    %c0_i32_0 = arith.constant 0 : i32
    %c0_i32_1 = arith.constant 0 : i32
    return %c0_i32, %c0_i32_0 : i32, i32
  }
  func.func @transform_9(%arg0: i32) -> (i32, i32) {
    %c0_i32 = arith.constant 0 : i32
    %c0_i32_0 = arith.constant 0 : i32
    %c0_i32_1 = arith.constant 0 : i32
    return %c0_i32, %c0_i32_0 : i32, i32
  }
  func.func @transform_10(%arg0: i32) -> (i32, i32) {
    %c0_i32 = arith.constant 0 : i32
    %c0_i32_0 = arith.constant 0 : i32
    %c0_i32_1 = arith.constant 0 : i32
    return %c0_i32, %c0_i32_0 : i32, i32
  }
  func.func @transform_11(%arg0: i32) -> (i32, i32, i32) {
    %c0_i32 = arith.constant 0 : i32
    %c0_i32_0 = arith.constant 0 : i32
    %c0_i32_1 = arith.constant 0 : i32
    return %arg0, %c0_i32, %c0_i32_0 : i32, i32, i32
  }
}

module attributes {stable_mosaic.version = 11 : i64} {
  func.func @_ffn_post_ln_kernel(%arg0: i32, %arg1: memref<16x32xbf16, #tpu.memory_space<vmem>>, %arg2: memref<1x32xf32, #tpu.memory_space<vmem>>, %arg3: memref<1x32xf32, #tpu.memory_space<vmem>>, %arg4: memref<32x128xbf16, #tpu.memory_space<vmem>>, %arg5: memref<1x128xf32, #tpu.memory_space<vmem>>, %arg6: memref<128x32xbf16, #tpu.memory_space<vmem>>, %arg7: memref<1x32xf32, #tpu.memory_space<vmem>>, %arg8: memref<1x32xf32, #tpu.memory_space<vmem>>, %arg9: memref<1x32xf32, #tpu.memory_space<vmem>>, %arg10: memref<16x32xbf16, #tpu.memory_space<vmem>>) attributes {dimension_semantics = [#tpu.dimension_semantics<parallel>], iteration_bounds = array<i64: 1>, scalar_prefetch = 0 : i64, scratch_operands = 0 : i64, tpu.core_type = #tpu.core_type<tc>, window_params = [{transform_indices = @transform_0, window_bounds = array<i64: 16, 32>}, {pipeline_mode = #tpu.pipeline_mode<synchronous>, transform_indices = @transform_1, window_bounds = array<i64: 1, 32>}, {pipeline_mode = #tpu.pipeline_mode<synchronous>, transform_indices = @transform_2, window_bounds = array<i64: 1, 32>}, {pipeline_mode = #tpu.pipeline_mode<synchronous>, transform_indices = @transform_3, window_bounds = array<i64: 32, 128>}, {pipeline_mode = #tpu.pipeline_mode<synchronous>, transform_indices = @transform_4, window_bounds = array<i64: 1, 128>}, {pipeline_mode = #tpu.pipeline_mode<synchronous>, transform_indices = @transform_5, window_bounds = array<i64: 128, 32>}, {pipeline_mode = #tpu.pipeline_mode<synchronous>, transform_indices = @transform_6, window_bounds = array<i64: 1, 32>}, {pipeline_mode = #tpu.pipeline_mode<synchronous>, transform_indices = @transform_7, window_bounds = array<i64: 1, 32>}, {pipeline_mode = #tpu.pipeline_mode<synchronous>, transform_indices = @transform_8, window_bounds = array<i64: 1, 32>}, {transform_indices = @transform_9, window_bounds = array<i64: 16, 32>}]} {
    %c0 = arith.constant 0 : index
    %c0_0 = arith.constant 0 : index
    %0 = vector.load %arg1[%c0, %c0_0] : memref<16x32xbf16, #tpu.memory_space<vmem>>, vector<16x32xbf16>
    %1 = arith.extf %0 : vector<16x32xbf16> to vector<16x32xf32>
    %c0_1 = arith.constant 0 : index
    %c0_2 = arith.constant 0 : index
    %2 = vector.load %arg2[%c0_1, %c0_2] : memref<1x32xf32, #tpu.memory_space<vmem>>, vector<1x32xf32>
    %c0_3 = arith.constant 0 : index
    %c0_4 = arith.constant 0 : index
    %3 = vector.load %arg3[%c0_3, %c0_4] : memref<1x32xf32, #tpu.memory_space<vmem>>, vector<1x32xf32>
    %cst = arith.constant dense<0.000000e+00> : vector<16xf32>
    %4 = vector.multi_reduction <add>, %1, %cst [1] : vector<16x32xf32> to vector<16xf32>
    %5 = vector.shape_cast %4 : vector<16xf32> to vector<16x1xf32>
    %cst_5 = arith.constant 3.200000e+01 : f32
    %6 = vector.broadcast %cst_5 : f32 to vector<16x1xf32>
    %7 = arith.divf %5, %6 : vector<16x1xf32>
    %8 = vector.broadcast %7 : vector<16x1xf32> to vector<16x32xf32>
    %9 = arith.subf %1, %8 : vector<16x32xf32>
    %10 = arith.mulf %9, %9 : vector<16x32xf32>
    %cst_6 = arith.constant dense<0.000000e+00> : vector<16xf32>
    %11 = vector.multi_reduction <add>, %10, %cst_6 [1] : vector<16x32xf32> to vector<16xf32>
    %12 = vector.shape_cast %11 : vector<16xf32> to vector<16x1xf32>
    %cst_7 = arith.constant 3.200000e+01 : f32
    %13 = vector.broadcast %cst_7 : f32 to vector<16x1xf32>
    %14 = arith.divf %12, %13 : vector<16x1xf32>
    %15 = vector.broadcast %7 : vector<16x1xf32> to vector<16x32xf32>
    %16 = arith.subf %1, %15 : vector<16x32xf32>
    %cst_8 = arith.constant 9.99999974E-6 : f32
    %17 = vector.broadcast %cst_8 : f32 to vector<16x1xf32>
    %18 = arith.addf %14, %17 : vector<16x1xf32>
    %19 = math.rsqrt %18 : vector<16x1xf32>
    %20 = vector.broadcast %19 : vector<16x1xf32> to vector<16x32xf32>
    %21 = arith.mulf %16, %20 : vector<16x32xf32>
    %22 = vector.broadcast %2 : vector<1x32xf32> to vector<16x32xf32>
    %23 = arith.mulf %21, %22 : vector<16x32xf32>
    %24 = vector.broadcast %3 : vector<1x32xf32> to vector<16x32xf32>
    %25 = arith.addf %23, %24 : vector<16x32xf32>
    %26 = arith.truncf %25 : vector<16x32xf32> to vector<16x32xbf16>
    %c0_9 = arith.constant 0 : index
    %c0_10 = arith.constant 0 : index
    %27 = vector.load %arg4[%c0_9, %c0_10] : memref<32x128xbf16, #tpu.memory_space<vmem>>, vector<32x128xbf16>
    %cst_11 = arith.constant dense<0.000000e+00> : vector<16x128xf32>
    %28 = tpu.matmul %26, %27, %cst_11 {dimension_numbers = #tpu.dot_dimension_numbers<[1], [0], [0], [1], [0, 0, 1, 1], [], []>} : vector<16x32xbf16>, vector<32x128xbf16>, vector<16x128xf32> -> vector<16x128xf32>
    %c0_12 = arith.constant 0 : index
    %c0_13 = arith.constant 0 : index
    %29 = vector.load %arg5[%c0_12, %c0_13] : memref<1x128xf32, #tpu.memory_space<vmem>>, vector<1x128xf32>
    %30 = vector.broadcast %29 : vector<1x128xf32> to vector<16x128xf32>
    %31 = arith.addf %28, %30 : vector<16x128xf32>
    %32 = arith.negf %31 : vector<16x128xf32>
    %33 = math.exp %32 : vector<16x128xf32>
    %cst_14 = arith.constant 1.000000e+00 : f32
    %34 = vector.broadcast %cst_14 : f32 to vector<16x128xf32>
    %35 = arith.addf %34, %33 : vector<16x128xf32>
    %36 = arith.divf %34, %35 : vector<16x128xf32>
    %37 = arith.mulf %31, %36 : vector<16x128xf32>
    %38 = arith.truncf %37 : vector<16x128xf32> to vector<16x128xbf16>
    %c0_15 = arith.constant 0 : index
    %c0_16 = arith.constant 0 : index
    %39 = vector.load %arg6[%c0_15, %c0_16] : memref<128x32xbf16, #tpu.memory_space<vmem>>, vector<128x32xbf16>
    %cst_17 = arith.constant dense<0.000000e+00> : vector<16x32xf32>
    %40 = tpu.matmul %38, %39, %cst_17 {dimension_numbers = #tpu.dot_dimension_numbers<[1], [0], [0], [1], [0, 0, 1, 1], [], []>} : vector<16x128xbf16>, vector<128x32xbf16>, vector<16x32xf32> -> vector<16x32xf32>
    %c0_18 = arith.constant 0 : index
    %c0_19 = arith.constant 0 : index
    %41 = vector.load %arg7[%c0_18, %c0_19] : memref<1x32xf32, #tpu.memory_space<vmem>>, vector<1x32xf32>
    %42 = vector.broadcast %41 : vector<1x32xf32> to vector<16x32xf32>
    %43 = arith.addf %40, %42 : vector<16x32xf32>
    %cst_20 = arith.constant 5.000000e-01 : f32
    %44 = vector.broadcast %cst_20 : f32 to vector<16x32xf32>
    %45 = arith.mulf %44, %43 : vector<16x32xf32>
    %46 = arith.addf %1, %45 : vector<16x32xf32>
    %c0_21 = arith.constant 0 : index
    %c0_22 = arith.constant 0 : index
    %47 = vector.load %arg8[%c0_21, %c0_22] : memref<1x32xf32, #tpu.memory_space<vmem>>, vector<1x32xf32>
    %c0_23 = arith.constant 0 : index
    %c0_24 = arith.constant 0 : index
    %48 = vector.load %arg9[%c0_23, %c0_24] : memref<1x32xf32, #tpu.memory_space<vmem>>, vector<1x32xf32>
    %cst_25 = arith.constant dense<0.000000e+00> : vector<16xf32>
    %49 = vector.multi_reduction <add>, %46, %cst_25 [1] : vector<16x32xf32> to vector<16xf32>
    %50 = vector.shape_cast %49 : vector<16xf32> to vector<16x1xf32>
    %cst_26 = arith.constant 3.200000e+01 : f32
    %51 = vector.broadcast %cst_26 : f32 to vector<16x1xf32>
    %52 = arith.divf %50, %51 : vector<16x1xf32>
    %53 = vector.broadcast %52 : vector<16x1xf32> to vector<16x32xf32>
    %54 = arith.subf %46, %53 : vector<16x32xf32>
    %55 = arith.mulf %54, %54 : vector<16x32xf32>
    %cst_27 = arith.constant dense<0.000000e+00> : vector<16xf32>
    %56 = vector.multi_reduction <add>, %55, %cst_27 [1] : vector<16x32xf32> to vector<16xf32>
    %57 = vector.shape_cast %56 : vector<16xf32> to vector<16x1xf32>
    %cst_28 = arith.constant 3.200000e+01 : f32
    %58 = vector.broadcast %cst_28 : f32 to vector<16x1xf32>
    %59 = arith.divf %57, %58 : vector<16x1xf32>
    %60 = vector.broadcast %52 : vector<16x1xf32> to vector<16x32xf32>
    %61 = arith.subf %46, %60 : vector<16x32xf32>
    %cst_29 = arith.constant 9.99999974E-6 : f32
    %62 = vector.broadcast %cst_29 : f32 to vector<16x1xf32>
    %63 = arith.addf %59, %62 : vector<16x1xf32>
    %64 = math.rsqrt %63 : vector<16x1xf32>
    %65 = vector.broadcast %64 : vector<16x1xf32> to vector<16x32xf32>
    %66 = arith.mulf %61, %65 : vector<16x32xf32>
    %67 = vector.broadcast %47 : vector<1x32xf32> to vector<16x32xf32>
    %68 = arith.mulf %66, %67 : vector<16x32xf32>
    %69 = vector.broadcast %48 : vector<1x32xf32> to vector<16x32xf32>
    %70 = arith.addf %68, %69 : vector<16x32xf32>
    %71 = arith.truncf %70 : vector<16x32xf32> to vector<16x32xbf16>
    %c0_30 = arith.constant 0 : index
    %c0_31 = arith.constant 0 : index
    %72 = vector.load %arg10[%c0_30, %c0_31] : memref<16x32xbf16, #tpu.memory_space<vmem>>, vector<16x32xbf16>
    tpu.vector_store %arg10[%c0_30, %c0_31], %71 {strides = array<i32>} : memref<16x32xbf16, #tpu.memory_space<vmem>>, vector<16x32xbf16>,
    return
  }
  func.func @transform_0(%arg0: i32) -> (i32, i32) {
    %c0_i32 = arith.constant 0 : i32
    %c0_i32_0 = arith.constant 0 : i32
    return %arg0, %c0_i32 : i32, i32
  }
  func.func @transform_1(%arg0: i32) -> (i32, i32) {
    %c0_i32 = arith.constant 0 : i32
    %c0_i32_0 = arith.constant 0 : i32
    %c0_i32_1 = arith.constant 0 : i32
    return %c0_i32, %c0_i32_0 : i32, i32
  }
  func.func @transform_2(%arg0: i32) -> (i32, i32) {
    %c0_i32 = arith.constant 0 : i32
    %c0_i32_0 = arith.constant 0 : i32
    %c0_i32_1 = arith.constant 0 : i32
    return %c0_i32, %c0_i32_0 : i32, i32
  }
  func.func @transform_3(%arg0: i32) -> (i32, i32) {
    %c0_i32 = arith.constant 0 : i32
    %c0_i32_0 = arith.constant 0 : i32
    %c0_i32_1 = arith.constant 0 : i32
    return %c0_i32, %c0_i32_0 : i32, i32
  }
  func.func @transform_4(%arg0: i32) -> (i32, i32) {
    %c0_i32 = arith.constant 0 : i32
    %c0_i32_0 = arith.constant 0 : i32
    %c0_i32_1 = arith.constant 0 : i32
    return %c0_i32, %c0_i32_0 : i32, i32
  }
  func.func @transform_5(%arg0: i32) -> (i32, i32) {
    %c0_i32 = arith.constant 0 : i32
    %c0_i32_0 = arith.constant 0 : i32
    %c0_i32_1 = arith.constant 0 : i32
    return %c0_i32, %c0_i32_0 : i32, i32
  }
  func.func @transform_6(%arg0: i32) -> (i32, i32) {
    %c0_i32 = arith.constant 0 : i32
    %c0_i32_0 = arith.constant 0 : i32
    %c0_i32_1 = arith.constant 0 : i32
    return %c0_i32, %c0_i32_0 : i32, i32
  }
  func.func @transform_7(%arg0: i32) -> (i32, i32) {
    %c0_i32 = arith.constant 0 : i32
    %c0_i32_0 = arith.constant 0 : i32
    %c0_i32_1 = arith.constant 0 : i32
    return %c0_i32, %c0_i32_0 : i32, i32
  }
  func.func @transform_8(%arg0: i32) -> (i32, i32) {
    %c0_i32 = arith.constant 0 : i32
    %c0_i32_0 = arith.constant 0 : i32
    %c0_i32_1 = arith.constant 0 : i32
    return %c0_i32, %c0_i32_0 : i32, i32
  }
  func.func @transform_9(%arg0: i32) -> (i32, i32) {
    %c0_i32 = arith.constant 0 : i32
    %c0_i32_0 = arith.constant 0 : i32
    return %arg0, %c0_i32 : i32, i32
  }
}

module attributes {stable_mosaic.version = 11 : i64} {
  func.func @_ffn_kernel(%arg0: i32, %arg1: memref<16x32xbf16, #tpu.memory_space<vmem>>, %arg2: memref<1x32xf32, #tpu.memory_space<vmem>>, %arg3: memref<1x32xf32, #tpu.memory_space<vmem>>, %arg4: memref<32x128xbf16, #tpu.memory_space<vmem>>, %arg5: memref<1x128xf32, #tpu.memory_space<vmem>>, %arg6: memref<128x32xbf16, #tpu.memory_space<vmem>>, %arg7: memref<1x32xf32, #tpu.memory_space<vmem>>, %arg8: memref<16x32xbf16, #tpu.memory_space<vmem>>) attributes {dimension_semantics = [#tpu.dimension_semantics<parallel>], iteration_bounds = array<i64: 1>, scalar_prefetch = 0 : i64, scratch_operands = 0 : i64, tpu.core_type = #tpu.core_type<tc>, window_params = [{transform_indices = @transform_0, window_bounds = array<i64: 16, 32>}, {pipeline_mode = #tpu.pipeline_mode<synchronous>, transform_indices = @transform_1, window_bounds = array<i64: 1, 32>}, {pipeline_mode = #tpu.pipeline_mode<synchronous>, transform_indices = @transform_2, window_bounds = array<i64: 1, 32>}, {pipeline_mode = #tpu.pipeline_mode<synchronous>, transform_indices = @transform_3, window_bounds = array<i64: 32, 128>}, {pipeline_mode = #tpu.pipeline_mode<synchronous>, transform_indices = @transform_4, window_bounds = array<i64: 1, 128>}, {pipeline_mode = #tpu.pipeline_mode<synchronous>, transform_indices = @transform_5, window_bounds = array<i64: 128, 32>}, {pipeline_mode = #tpu.pipeline_mode<synchronous>, transform_indices = @transform_6, window_bounds = array<i64: 1, 32>}, {transform_indices = @transform_7, window_bounds = array<i64: 16, 32>}]} {
    %c0 = arith.constant 0 : index
    %c0_0 = arith.constant 0 : index
    %0 = vector.load %arg1[%c0, %c0_0] : memref<16x32xbf16, #tpu.memory_space<vmem>>, vector<16x32xbf16>
    %1 = arith.extf %0 : vector<16x32xbf16> to vector<16x32xf32>
    %c0_1 = arith.constant 0 : index
    %c0_2 = arith.constant 0 : index
    %2 = vector.load %arg2[%c0_1, %c0_2] : memref<1x32xf32, #tpu.memory_space<vmem>>, vector<1x32xf32>
    %c0_3 = arith.constant 0 : index
    %c0_4 = arith.constant 0 : index
    %3 = vector.load %arg3[%c0_3, %c0_4] : memref<1x32xf32, #tpu.memory_space<vmem>>, vector<1x32xf32>
    %cst = arith.constant dense<0.000000e+00> : vector<16xf32>
    %4 = vector.multi_reduction <add>, %1, %cst [1] : vector<16x32xf32> to vector<16xf32>
    %5 = vector.shape_cast %4 : vector<16xf32> to vector<16x1xf32>
    %cst_5 = arith.constant 3.200000e+01 : f32
    %6 = vector.broadcast %cst_5 : f32 to vector<16x1xf32>
    %7 = arith.divf %5, %6 : vector<16x1xf32>
    %8 = vector.broadcast %7 : vector<16x1xf32> to vector<16x32xf32>
    %9 = arith.subf %1, %8 : vector<16x32xf32>
    %10 = arith.mulf %9, %9 : vector<16x32xf32>
    %cst_6 = arith.constant dense<0.000000e+00> : vector<16xf32>
    %11 = vector.multi_reduction <add>, %10, %cst_6 [1] : vector<16x32xf32> to vector<16xf32>
    %12 = vector.shape_cast %11 : vector<16xf32> to vector<16x1xf32>
    %cst_7 = arith.constant 3.200000e+01 : f32
    %13 = vector.broadcast %cst_7 : f32 to vector<16x1xf32>
    %14 = arith.divf %12, %13 : vector<16x1xf32>
    %15 = vector.broadcast %7 : vector<16x1xf32> to vector<16x32xf32>
    %16 = arith.subf %1, %15 : vector<16x32xf32>
    %cst_8 = arith.constant 9.99999974E-6 : f32
    %17 = vector.broadcast %cst_8 : f32 to vector<16x1xf32>
    %18 = arith.addf %14, %17 : vector<16x1xf32>
    %19 = math.rsqrt %18 : vector<16x1xf32>
    %20 = vector.broadcast %19 : vector<16x1xf32> to vector<16x32xf32>
    %21 = arith.mulf %16, %20 : vector<16x32xf32>
    %22 = vector.broadcast %2 : vector<1x32xf32> to vector<16x32xf32>
    %23 = arith.mulf %21, %22 : vector<16x32xf32>
    %24 = vector.broadcast %3 : vector<1x32xf32> to vector<16x32xf32>
    %25 = arith.addf %23, %24 : vector<16x32xf32>
    %26 = arith.truncf %25 : vector<16x32xf32> to vector<16x32xbf16>
    %c0_9 = arith.constant 0 : index
    %c0_10 = arith.constant 0 : index
    %27 = vector.load %arg4[%c0_9, %c0_10] : memref<32x128xbf16, #tpu.memory_space<vmem>>, vector<32x128xbf16>
    %cst_11 = arith.constant dense<0.000000e+00> : vector<16x128xf32>
    %28 = tpu.matmul %26, %27, %cst_11 {dimension_numbers = #tpu.dot_dimension_numbers<[1], [0], [0], [1], [0, 0, 1, 1], [], []>} : vector<16x32xbf16>, vector<32x128xbf16>, vector<16x128xf32> -> vector<16x128xf32>
    %c0_12 = arith.constant 0 : index
    %c0_13 = arith.constant 0 : index
    %29 = vector.load %arg5[%c0_12, %c0_13] : memref<1x128xf32, #tpu.memory_space<vmem>>, vector<1x128xf32>
    %30 = vector.broadcast %29 : vector<1x128xf32> to vector<16x128xf32>
    %31 = arith.addf %28, %30 : vector<16x128xf32>
    %32 = arith.negf %31 : vector<16x128xf32>
    %33 = math.exp %32 : vector<16x128xf32>
    %cst_14 = arith.constant 1.000000e+00 : f32
    %34 = vector.broadcast %cst_14 : f32 to vector<16x128xf32>
    %35 = arith.addf %34, %33 : vector<16x128xf32>
    %36 = arith.divf %34, %35 : vector<16x128xf32>
    %37 = arith.mulf %31, %36 : vector<16x128xf32>
    %38 = arith.truncf %37 : vector<16x128xf32> to vector<16x128xbf16>
    %c0_15 = arith.constant 0 : index
    %c0_16 = arith.constant 0 : index
    %39 = vector.load %arg6[%c0_15, %c0_16] : memref<128x32xbf16, #tpu.memory_space<vmem>>, vector<128x32xbf16>
    %cst_17 = arith.constant dense<0.000000e+00> : vector<16x32xf32>
    %40 = tpu.matmul %38, %39, %cst_17 {dimension_numbers = #tpu.dot_dimension_numbers<[1], [0], [0], [1], [0, 0, 1, 1], [], []>} : vector<16x128xbf16>, vector<128x32xbf16>, vector<16x32xf32> -> vector<16x32xf32>
    %c0_18 = arith.constant 0 : index
    %c0_19 = arith.constant 0 : index
    %41 = vector.load %arg7[%c0_18, %c0_19] : memref<1x32xf32, #tpu.memory_space<vmem>>, vector<1x32xf32>
    %42 = vector.broadcast %41 : vector<1x32xf32> to vector<16x32xf32>
    %43 = arith.addf %40, %42 : vector<16x32xf32>
    %cst_20 = arith.constant 5.000000e-01 : f32
    %44 = vector.broadcast %cst_20 : f32 to vector<16x32xf32>
    %45 = arith.mulf %44, %43 : vector<16x32xf32>
    %46 = arith.addf %1, %45 : vector<16x32xf32>
    %47 = arith.truncf %46 : vector<16x32xf32> to vector<16x32xbf16>
    %c0_21 = arith.constant 0 : index
    %c0_22 = arith.constant 0 : index
    %48 = vector.load %arg8[%c0_21, %c0_22] : memref<16x32xbf16, #tpu.memory_space<vmem>>, vector<16x32xbf16>
    tpu.vector_store %arg8[%c0_21, %c0_22], %47 {strides = array<i32>} : memref<16x32xbf16, #tpu.memory_space<vmem>>, vector<16x32xbf16>,
    return
  }
  func.func @transform_0(%arg0: i32) -> (i32, i32) {
    %c0_i32 = arith.constant 0 : i32
    %c0_i32_0 = arith.constant 0 : i32
    return %arg0, %c0_i32 : i32, i32
  }
  func.func @transform_1(%arg0: i32) -> (i32, i32) {
    %c0_i32 = arith.constant 0 : i32
    %c0_i32_0 = arith.constant 0 : i32
    %c0_i32_1 = arith.constant 0 : i32
    return %c0_i32, %c0_i32_0 : i32, i32
  }
  func.func @transform_2(%arg0: i32) -> (i32, i32) {
    %c0_i32 = arith.constant 0 : i32
    %c0_i32_0 = arith.constant 0 : i32
    %c0_i32_1 = arith.constant 0 : i32
    return %c0_i32, %c0_i32_0 : i32, i32
  }
  func.func @transform_3(%arg0: i32) -> (i32, i32) {
    %c0_i32 = arith.constant 0 : i32
    %c0_i32_0 = arith.constant 0 : i32
    %c0_i32_1 = arith.constant 0 : i32
    return %c0_i32, %c0_i32_0 : i32, i32
  }
  func.func @transform_4(%arg0: i32) -> (i32, i32) {
    %c0_i32 = arith.constant 0 : i32
    %c0_i32_0 = arith.constant 0 : i32
    %c0_i32_1 = arith.constant 0 : i32
    return %c0_i32, %c0_i32_0 : i32, i32
  }
  func.func @transform_5(%arg0: i32) -> (i32, i32) {
    %c0_i32 = arith.constant 0 : i32
    %c0_i32_0 = arith.constant 0 : i32
    %c0_i32_1 = arith.constant 0 : i32
    return %c0_i32, %c0_i32_0 : i32, i32
  }
  func.func @transform_6(%arg0: i32) -> (i32, i32) {
    %c0_i32 = arith.constant 0 : i32
    %c0_i32_0 = arith.constant 0 : i32
    %c0_i32_1 = arith.constant 0 : i32
    return %c0_i32, %c0_i32_0 : i32, i32
  }
  func.func @transform_7(%arg0: i32) -> (i32, i32) {
    %c0_i32 = arith.constant 0 : i32
    %c0_i32_0 = arith.constant 0 : i32
    return %arg0, %c0_i32 : i32, i32
  }
}

module attributes {stable_mosaic.version = 11 : i64} {
  func.func @kernel(%arg0: i32, %arg1: memref<16x32xbf16, #tpu.memory_space<vmem>>, %arg2: memref<1x32xf32, #tpu.memory_space<vmem>>, %arg3: memref<1x32xf32, #tpu.memory_space<vmem>>, %arg4: memref<16x32xf32, #tpu.memory_space<vmem>>) attributes {dimension_semantics = [#tpu.dimension_semantics<parallel>], iteration_bounds = array<i64: 1>, scalar_prefetch = 0 : i64, scratch_operands = 0 : i64, tpu.core_type = #tpu.core_type<tc>, window_params = [{transform_indices = @transform_0, window_bounds = array<i64: 16, 32>}, {pipeline_mode = #tpu.pipeline_mode<synchronous>, transform_indices = @transform_1, window_bounds = array<i64: 1, 32>}, {pipeline_mode = #tpu.pipeline_mode<synchronous>, transform_indices = @transform_2, window_bounds = array<i64: 1, 32>}, {transform_indices = @transform_3, window_bounds = array<i64: 16, 32>}]} {
    %c0 = arith.constant 0 : index
    %c0_0 = arith.constant 0 : index
    %0 = vector.load %arg1[%c0, %c0_0] : memref<16x32xbf16, #tpu.memory_space<vmem>>, vector<16x32xbf16>
    %1 = arith.extf %0 : vector<16x32xbf16> to vector<16x32xf32>
    %c0_1 = arith.constant 0 : index
    %c0_2 = arith.constant 0 : index
    %2 = vector.load %arg2[%c0_1, %c0_2] : memref<1x32xf32, #tpu.memory_space<vmem>>, vector<1x32xf32>
    %c0_3 = arith.constant 0 : index
    %c0_4 = arith.constant 0 : index
    %3 = vector.load %arg3[%c0_3, %c0_4] : memref<1x32xf32, #tpu.memory_space<vmem>>, vector<1x32xf32>
    %cst = arith.constant dense<0.000000e+00> : vector<16xf32>
    %4 = vector.multi_reduction <add>, %1, %cst [1] : vector<16x32xf32> to vector<16xf32>
    %5 = vector.shape_cast %4 : vector<16xf32> to vector<16x1xf32>
    %cst_5 = arith.constant 3.200000e+01 : f32
    %6 = vector.broadcast %cst_5 : f32 to vector<16x1xf32>
    %7 = arith.divf %5, %6 : vector<16x1xf32>
    %8 = vector.broadcast %7 : vector<16x1xf32> to vector<16x32xf32>
    %9 = arith.subf %1, %8 : vector<16x32xf32>
    %10 = arith.mulf %9, %9 : vector<16x32xf32>
    %cst_6 = arith.constant dense<0.000000e+00> : vector<16xf32>
    %11 = vector.multi_reduction <add>, %10, %cst_6 [1] : vector<16x32xf32> to vector<16xf32>
    %12 = vector.shape_cast %11 : vector<16xf32> to vector<16x1xf32>
    %cst_7 = arith.constant 3.200000e+01 : f32
    %13 = vector.broadcast %cst_7 : f32 to vector<16x1xf32>
    %14 = arith.divf %12, %13 : vector<16x1xf32>
    %15 = vector.broadcast %7 : vector<16x1xf32> to vector<16x32xf32>
    %16 = arith.subf %1, %15 : vector<16x32xf32>
    %cst_8 = arith.constant 9.99999974E-6 : f32
    %17 = vector.broadcast %cst_8 : f32 to vector<16x1xf32>
    %18 = arith.addf %14, %17 : vector<16x1xf32>
    %19 = math.rsqrt %18 : vector<16x1xf32>
    %20 = vector.broadcast %19 : vector<16x1xf32> to vector<16x32xf32>
    %21 = arith.mulf %16, %20 : vector<16x32xf32>
    %22 = vector.broadcast %2 : vector<1x32xf32> to vector<16x32xf32>
    %23 = arith.mulf %21, %22 : vector<16x32xf32>
    %24 = vector.broadcast %3 : vector<1x32xf32> to vector<16x32xf32>
    %25 = arith.addf %23, %24 : vector<16x32xf32>
    %c0_9 = arith.constant 0 : index
    %c0_10 = arith.constant 0 : index
    %26 = vector.load %arg4[%c0_9, %c0_10] : memref<16x32xf32, #tpu.memory_space<vmem>>, vector<16x32xf32>
    tpu.vector_store %arg4[%c0_9, %c0_10], %25 {strides = array<i32>} : memref<16x32xf32, #tpu.memory_space<vmem>>, vector<16x32xf32>,
    return
  }
  func.func @transform_0(%arg0: i32) -> (i32, i32) {
    %c0_i32 = arith.constant 0 : i32
    %c0_i32_0 = arith.constant 0 : i32
    return %arg0, %c0_i32 : i32, i32
  }
  func.func @transform_1(%arg0: i32) -> (i32, i32) {
    %c0_i32 = arith.constant 0 : i32
    %c0_i32_0 = arith.constant 0 : i32
    %c0_i32_1 = arith.constant 0 : i32
    return %c0_i32, %c0_i32_0 : i32, i32
  }
  func.func @transform_2(%arg0: i32) -> (i32, i32) {
    %c0_i32 = arith.constant 0 : i32
    %c0_i32_0 = arith.constant 0 : i32
    %c0_i32_1 = arith.constant 0 : i32
    return %c0_i32, %c0_i32_0 : i32, i32
  }
  func.func @transform_3(%arg0: i32) -> (i32, i32) {
    %c0_i32 = arith.constant 0 : i32
    %c0_i32_0 = arith.constant 0 : i32
    return %arg0, %c0_i32 : i32, i32
  }
}

</mosaic_0001>

<llo_original>
// kernel: conformer_encoder.11
$region0: #{conformer_encoder.11}
  #allocation0 [shape = 'u32[]', space=smem, size = 0x4, offset = 0x4, fixed_abs, tag = 'smem constant byte address 0x4 - core index']
  #allocation1 [shape = 'u32[144,128]{1,0:T(1,128)}', space=vmem, size = 0x12000, scoped, tag = 'internal scratch']
  %s0 = inlined_call_operand.hbm [shape: f32[16,32], index: 0, kind: input, shape index: {}]
  %s1 = inlined_call_operand.hbm [shape: f32[1,32], index: 1, kind: input, shape index: {}]
  %s2 = inlined_call_operand.hbm [shape: f32[1,32], index: 2, kind: input, shape index: {}]
  %s3 = inlined_call_operand.hbm [shape: bf16[32,128], index: 3, kind: input, shape index: {}]
  %s4 = inlined_call_operand.hbm [shape: f32[1,128], index: 4, kind: input, shape index: {}]
  %s5 = inlined_call_operand.hbm [shape: bf16[128,32], index: 5, kind: input, shape index: {}]
  %s6 = inlined_call_operand.hbm [shape: f32[1,32], index: 6, kind: input, shape index: {}]
  %s7 = inlined_call_operand.hbm [shape: bf16[16,32], index: 7, kind: output, shape index: {}]
  %s8 = sld [smem:[#allocation0]]
  $region66: #{conformer_encoder.11} parent=0
    _
  %s10 = ssub.s32 1, %s8
  %s11 = scalar_select 0, %s10, %s8
  $region1: #{conformer_encoder.11} parent=0
    #allocation2 [shape = 'u8[8192]{0}', space=vmem, size = 0x2000, scoped, tag = 'input window, operand 0, single buffered']
    #allocation3 [shape = 's32[1]{0}', space=sflag, size = 0x4, scoped, tag = 'scoped memory for conformer_encoder.11']
    #allocation4 [shape = 's32[1]{0}', space=sflag, size = 0x4, scoped, tag = 'scoped memory for conformer_encoder.11']
    #allocation5 [shape = 'u8[512]{0}', space=vmem, size = 0x400, scoped, tag = 'input window, operand 1, single buffered']
    #allocation6 [shape = 's32[1]{0}', space=sflag, size = 0x4, scoped, tag = 'scoped memory for conformer_encoder.11']
    #allocation7 [shape = 'u8[512]{0}', space=vmem, size = 0x400, scoped, tag = 'input window, operand 2, single buffered']
    #allocation8 [shape = 'u8[8192]{0}', space=vmem, size = 0x2000, scoped, tag = 'input window, operand 3, single buffered']
    #allocation9 [shape = 's32[1]{0}', space=sflag, size = 0x4, scoped, tag = 'scoped memory for conformer_encoder.11']
    #allocation10 [shape = 'u8[512]{0}', space=vmem, size = 0x400, scoped, tag = 'input window, operand 4, single buffered']
    #allocation11 [shape = 'u8[32768]{0}', space=vmem, size = 0x8000, scoped, tag = 'input window, operand 5, single buffered']
    #allocation12 [shape = 's32[1]{0}', space=sflag, size = 0x4, scoped, tag = 'scoped memory for conformer_encoder.11']
    #allocation13 [shape = 'u8[512]{0}', space=vmem, size = 0x400, scoped, tag = 'input window, operand 6, single buffered']
    #allocation14 [shape = 'u8[4096]{0}', space=vmem, size = 0x1000, scoped, tag = 'output window, operand 0, single buffered']
    %12 = vsyncpa [#allocation3], 0
    %13 = vsyncpa [#allocation6], 0
    %14 = vsyncpa [#allocation9], 0
    %15 = vsyncpa [#allocation12], 0
    %16 = vsyncpa [#allocation4], 0
    // Predicated region
    $region2: #{conformer_encoder.11} parent=1 // pred_check
      _
    $region3: #{conformer_encoder.11} parent=1 // pred_check_branch
      %18 = sbr.rel (0) target = $region5
    $region4: #{conformer_encoder.11} parent=1 // pred_region
      %s20 = ssub.s32 256, 256
      %21 = vsyncadd [#allocation3], %s20
      %s22 = sshll.u32 [#allocation2], 4
      %s23 = int_to_ptr.vmem [resolvable:$true] %s22
      %28 = dma.hbm_to_vmem [thread:$0]  %s0, 256, %s23, [#allocation3], 128, 128, 8
    $region5: #{conformer_encoder.11} parent=1 // pred_fallthru
      _
    // Predicated region
    $region6: #{conformer_encoder.11} parent=1 // pred_check
      _
    $region7: #{conformer_encoder.11} parent=1 // pred_check_branch
      %30 = sbr.rel (0) target = $region9
    $region8: #{conformer_encoder.11} parent=1 // pred_region
      %s32 = ssub.s32 16, 16
      %33 = vsyncadd [#allocation6], %s32
      %s35 = sshll.u32 [#allocation5], 4
      %s36 = int_to_ptr.vmem [resolvable:$true] %s35
      %38 = dma.hbm_to_vmem [thread:$0]  %s1, 16, %s36, [#allocation6]
    $region9: #{conformer_encoder.11} parent=1 // pred_fallthru
      _
    // Predicated region
    $region10: #{conformer_encoder.11} parent=1 // pred_check
      _
    $region11: #{conformer_encoder.11} parent=1 // pred_check_branch
      %40 = sbr.rel (0) target = $region13
    $region12: #{conformer_encoder.11} parent=1 // pred_region
      %s42 = ssub.s32 16, 16
      %43 = vsyncadd [#allocation6], %s42
      %s45 = sshll.u32 [#allocation7], 4
      %s46 = int_to_ptr.vmem [resolvable:$true] %s45
      %48 = dma.hbm_to_vmem [thread:$0]  %s2, 16, %s46, [#allocation6]
    $region13: #{conformer_encoder.11} parent=1 // pred_fallthru
      _
    // Predicated region
    $region14: #{conformer_encoder.11} parent=1 // pred_check
      _
    $region15: #{conformer_encoder.11} parent=1 // pred_check_branch
      %50 = sbr.rel (0) target = $region17
    $region16: #{conformer_encoder.11} parent=1 // pred_region
      %s52 = ssub.s32 256, 256
      %53 = vsyncadd [#allocation9], %s52
      %s54 = sshll.u32 [#allocation8], 4
      %s55 = int_to_ptr.vmem [resolvable:$true] %s54
      %60 = dma.hbm_to_vmem [thread:$0]  %s3, 256, %s55, [#allocation9], 64, 64, 4
    $region17: #{conformer_encoder.11} parent=1 // pred_fallthru
      _
    // Predicated region
    $region18: #{conformer_encoder.11} parent=1 // pred_check
      _
    $region19: #{conformer_encoder.11} parent=1 // pred_check_branch
      %62 = sbr.rel (0) target = $region21
    $region20: #{conformer_encoder.11} parent=1 // pred_region
      %s64 = ssub.s32 16, 16
      %65 = vsyncadd [#allocation9], %s64
      %s67 = sshll.u32 [#allocation10], 4
      %s68 = int_to_ptr.vmem [resolvable:$true] %s67
      %70 = dma.hbm_to_vmem [thread:$0]  %s4, 16, %s68, [#allocation9]
    $region21: #{conformer_encoder.11} parent=1 // pred_fallthru
      _
    // Predicated region
    $region22: #{conformer_encoder.11} parent=1 // pred_check
      _
    $region23: #{conformer_encoder.11} parent=1 // pred_check_branch
      %72 = sbr.rel (0) target = $region25
    $region24: #{conformer_encoder.11} parent=1 // pred_region
      %s74 = ssub.s32 1024, 1024
      %75 = vsyncadd [#allocation12], %s74
      %s76 = sshll.u32 [#allocation11], 4
      %s77 = int_to_ptr.vmem [resolvable:$true] %s76
      %82 = dma.hbm_to_vmem [thread:$0]  %s5, 1024, %s77, [#allocation12], 64, 64, 4
    $region25: #{conformer_encoder.11} parent=1 // pred_fallthru
      _
    // Predicated region
    $region26: #{conformer_encoder.11} parent=1 // pred_check
      _
    $region27: #{conformer_encoder.11} parent=1 // pred_check_branch
      %84 = sbr.rel (0) target = $region29
    $region28: #{conformer_encoder.11} parent=1 // pred_region
      %s86 = ssub.s32 16, 16
      %87 = vsyncadd [#allocation12], %s86
      %s89 = sshll.u32 [#allocation13], 4
      %s90 = int_to_ptr.vmem [resolvable:$true] %s89
      %92 = dma.hbm_to_vmem [thread:$0]  %s6, 16, %s90, [#allocation12]
    $region29: #{conformer_encoder.11} parent=1 // pred_fallthru
      _
    // Predicated region
    $region30: #{conformer_encoder.11} parent=1 // pred_check
      _
    $region31: #{conformer_encoder.11} parent=1 // pred_check_branch
      %94 = sbr.rel (0) target = $region33
    $region32: #{conformer_encoder.11} parent=1 // pred_region
      %95 = dma.done [#allocation3], 256
    $region33: #{conformer_encoder.11} parent=1 // pred_fallthru
      _
    // Predicated region
    $region34: #{conformer_encoder.11} parent=1 // pred_check
      _
    $region35: #{conformer_encoder.11} parent=1 // pred_check_branch
      %97 = sbr.rel (0) target = $region37
    $region36: #{conformer_encoder.11} parent=1 // pred_region
      %98 = dma.done [#allocation6], 16
    $region37: #{conformer_encoder.11} parent=1 // pred_fallthru
      _
    // Predicated region
    $region38: #{conformer_encoder.11} parent=1 // pred_check
      _
    $region39: #{conformer_encoder.11} parent=1 // pred_check_branch
      %100 = sbr.rel (0) target = $region41
    $region40: #{conformer_encoder.11} parent=1 // pred_region
      %101 = dma.done [#allocation6], 16
    $region41: #{conformer_encoder.11} parent=1 // pred_fallthru
      _
    // Predicated region
    $region42: #{conformer_encoder.11} parent=1 // pred_check
      _
    $region43: #{conformer_encoder.11} parent=1 // pred_check_branch
      %103 = sbr.rel (0) target = $region45
    $region44: #{conformer_encoder.11} parent=1 // pred_region
      %104 = dma.done [#allocation9], 256
    $region45: #{conformer_encoder.11} parent=1 // pred_fallthru
      _
    // Predicated region
    $region46: #{conformer_encoder.11} parent=1 // pred_check
      _
    $region47: #{conformer_encoder.11} parent=1 // pred_check_branch
      %106 = sbr.rel (0) target = $region49
    $region48: #{conformer_encoder.11} parent=1 // pred_region
      %107 = dma.done [#allocation9], 16
    $region49: #{conformer_encoder.11} parent=1 // pred_fallthru
      _
    // Predicated region
    $region50: #{conformer_encoder.11} parent=1 // pred_check
      _
    $region51: #{conformer_encoder.11} parent=1 // pred_check_branch
      %109 = sbr.rel (0) target = $region53
    $region52: #{conformer_encoder.11} parent=1 // pred_region
      %110 = dma.done [#allocation12], 1024
    $region53: #{conformer_encoder.11} parent=1 // pred_fallthru
      _
    // Predicated region
    $region54: #{conformer_encoder.11} parent=1 // pred_check
      _
    $region55: #{conformer_encoder.11} parent=1 // pred_check_branch
      %112 = sbr.rel (0) target = $region57
    $region56: #{conformer_encoder.11} parent=1 // pred_region
      %113 = dma.done [#allocation12], 16
    $region57: #{conformer_encoder.11} parent=1 // pred_fallthru
      _
    %v115 = vld [vmem:[#allocation2] sm:$0xff]
    %v116 = vld [vmem:[#allocation2 + $0x8] sm:$0xff]
    %v117 = vld [vmem:[#allocation5] sm:$0x1]
    %v118 = vld [vmem:[#allocation7] sm:$0x1]
    %vm119 = vcmask 261120
    %v120 = vsel %vm119, %v115, 0.0
    %121 = vadd.xlane.f32.xlu0 %v120
    %v122 = vpop.xlane.xlu0 %121
    %v123 = vsel %vm119, %v116, 0.0
    %124 = vadd.xlane.f32.xlu0 %v123
    %v125 = vpop.xlane.xlu0 %124
    %v126 = vrcp.pop 32.0
    %v127 = vmul.f32 %v122, %v126
    %v128 = vmul.f32 %v125, %v126
    %v129 = vsub.f32 %v115, %v127
    %v130 = vsub.f32 %v116, %v128
    %v131 = vmul.f32 %v129, %v129
    %v132 = vmul.f32 %v130, %v130
    %v133 = vsel %vm119, %v131, 0.0
    %134 = vadd.xlane.f32.xlu0 %v133
    %v135 = vpop.xlane.xlu0 %134
    %v136 = vsel %vm119, %v132, 0.0
    %137 = vadd.xlane.f32.xlu0 %v136
    %v138 = vpop.xlane.xlu0 %137
    %v139 = vmul.f32 %v135, %v126
    %v140 = vmul.f32 %v138, %v126
    %v141 = vadd.f32 %v139, 1e-05
    %v142 = vadd.f32 %v140, 1e-05
    %v143 = vrsqrt.pop %v141
    %v144 = vrsqrt.pop %v142
    %v145 = vmul.f32 %v129, %v143
    %v146 = vmul.f32 %v130, %v144
    %v148 = vlaneseq
    %v149 = vshrl.u32 %v148, 7
    %v150 = vsub.s32 0, %v149
    %v151 = vrot.slane %v117, %v150
    %v153 = vmul.f32 %v145, %v151
    %v154 = vmul.f32 %v146, %v151
    %v156 = vlaneseq
    %v157 = vshrl.u32 %v156, 7
    %v158 = vsub.s32 0, %v157
    %v159 = vrot.slane %v118, %v158
    %v161 = vadd.f32 %v153, %v159
    %v162 = vadd.f32 %v154, %v159
    %v163 = vpack.c.bf16 %v162, %v161
    %v164 = vld [vmem:[#allocation8] sm:$0xf]
    %v165 = vld [vmem:[#allocation8 + $0x4] sm:$0xf]
    %v166 = vld [vmem:[#allocation8 + $0x8] sm:$0xf]
    %v167 = vld [vmem:[#allocation8 + $0xc] sm:$0xf]
    %v168 = vld [vmem:[#allocation10] sm:$0x1]
    %v170 = vlaneseq
    %v171 = vshrl.u32 %v170, 7
    %v172 = vsub.s32 0, %v171
    %v173 = vrot.slane %v168, %v172
    %v179 = vunpack.c.l.b16 %v164
    %v180 = vunpack.c.l.b16 %v165
    %v181 = vunpack.c.l.b16 %v166
    %v182 = vunpack.c.l.b16 %v167
    %v183 = vpack.c.b16 %v180, %v179
    %v184 = vpack.c.b16 %v182, %v181
    %v188 = vsel %vm119, %v163, 0
    %190 = vmatprep.subr.bf16.mxu0 0
    %191 = vmatpush1.bf16.msra.mxu0 %v183
    %192 = vmatprep.subr.bf16.mxu0 0
    %193 = vmatpush1.bf16.msra.mxu0 %v184
    %194 = vmatprep.subr.bf16.mxu0 0
    %195 = vmatpush1.bf16.msra.mxu0 0
    %196 = vmatprep.subr.bf16.mxu0 0
    %197 = vmatpush1.bf16.msra.mxu0 0
    %198 = vmatprep.subr.bf16.mxu0 0
    %199 = vmatpush1.bf16.msra.mxu0 0
    %200 = vmatprep.subr.bf16.mxu0 0
    %201 = vmatpush1.bf16.msra.mxu0 0
    %202 = vmatprep.subr.bf16.mxu0 0
    %203 = vmatpush1.bf16.msra.mxu0 0
    %204 = vmatprep.subr.bf16.mxu0 0
    %205 = vmatpush1.bf16.msra.mxu0 0
    %206 = vmatprep.subr.bf16.mxu0 0
    %207 = vmatpush1.bf16.msra.mxu0 0
    %208 = vmatprep.subr.bf16.mxu0 0
    %209 = vmatpush1.bf16.msra.mxu0 0
    %210 = vmatprep.subr.bf16.mxu0 0
    %211 = vmatpush1.bf16.msra.mxu0 0
    %212 = vmatprep.subr.bf16.mxu0 0
    %213 = vmatpush1.bf16.msra.mxu0 0
    %214 = vmatprep.subr.bf16.mxu0 0
    %215 = vmatpush1.bf16.msra.mxu0 0
    %216 = vmatprep.subr.bf16.mxu0 0
    %217 = vmatpush1.bf16.msra.mxu0 0
    %218 = vmatprep.subr.bf16.mxu0 0
    %219 = vmatpush1.bf16.msra.mxu0 0
    %220 = vmatprep.subr.bf16.mxu0 0
    %221 = vmatpush1.bf16.msra.mxu0 0
    %222 = vmatprep.mubr.bf16.mxu0 0
    %223 = vmatmul.mubr.bf16.gmra.mrb[0].mxu0 %v188
    %v224 = vpop.f32.mrb[0].mxu0
    %v225 = vadd.f32 %v173, %v224
    %v226 = vpop.f32.mrb[0].mxu0
    %v227 = vpop.f32.mrb[0].mxu0
    %v228 = vadd.f32 %v173, %v227
    %v229 = vpop.f32.mrb[0].mxu0
    %230 = vdwg.mxu0
    %v231 = vxor.u32 %v225, 2147483648
    %v232 = vxor.u32 %v228, 2147483648
    %v233 = vmul.f32 %v231, 1.442695
    %v234 = vpow.pop %v233
    %v235 = vmul.f32 %v232, 1.442695
    %v236 = vpow.pop %v235
    %v237 = vadd.f32 %v234, 1.0
    %v238 = vadd.f32 %v236, 1.0
    %v239 = vrcp.pop %v237
    %v240 = vmul.f32 1.0, %v239
    %v241 = vrcp.pop %v238
    %v242 = vmul.f32 1.0, %v241
    %v243 = vmul.f32 %v225, %v240
    %v244 = vmul.f32 %v228, %v242
    %v245 = vpack.c.bf16 %v244, %v243
    %v246 = vld [vmem:[#allocation11] sm:$0xf]
    %v247 = vld [vmem:[#allocation11 + $0x4] sm:$0xf]
    %v248 = vld [vmem:[#allocation11 + $0x8] sm:$0xf]
    %v249 = vld [vmem:[#allocation11 + $0xc] sm:$0xf]
    %v250 = vld [vmem:[#allocation11 + $0x10] sm:$0xf]
    %v251 = vld [vmem:[#allocation11 + $0x14] sm:$0xf]
    %v252 = vld [vmem:[#allocation11 + $0x18] sm:$0xf]
    %v253 = vld [vmem:[#allocation11 + $0x1c] sm:$0xf]
    %v254 = vld [vmem:[#allocation11 + $0x20] sm:$0xf]
    %v255 = vld [vmem:[#allocation11 + $0x24] sm:$0xf]
    %v256 = vld [vmem:[#allocation11 + $0x28] sm:$0xf]
    %v257 = vld [vmem:[#allocation11 + $0x2c] sm:$0xf]
    %v258 = vld [vmem:[#allocation11 + $0x30] sm:$0xf]
    %v259 = vld [vmem:[#allocation11 + $0x34] sm:$0xf]
    %v260 = vld [vmem:[#allocation11 + $0x38] sm:$0xf]
    %v261 = vld [vmem:[#allocation11 + $0x3c] sm:$0xf]
    %v262 = vld [vmem:[#allocation13] sm:$0x1]
    %v264 = vlaneseq
    %v265 = vshrl.u32 %v264, 7
    %v266 = vsub.s32 0, %v265
    %v267 = vrot.slane %v262, %v266
    %v285 = vunpack.c.l.b16 %v246
    %v286 = vunpack.c.l.b16 %v247
    %v287 = vunpack.c.l.b16 %v248
    %v288 = vunpack.c.l.b16 %v249
    %v289 = vunpack.c.l.b16 %v250
    %v290 = vunpack.c.l.b16 %v251
    %v291 = vunpack.c.l.b16 %v252
    %v292 = vunpack.c.l.b16 %v253
    %v293 = vunpack.c.l.b16 %v254
    %v294 = vunpack.c.l.b16 %v255
    %v295 = vunpack.c.l.b16 %v256
    %v296 = vunpack.c.l.b16 %v257
    %v297 = vunpack.c.l.b16 %v258
    %v298 = vunpack.c.l.b16 %v259
    %v299 = vunpack.c.l.b16 %v260
    %v300 = vunpack.c.l.b16 %v261
    %v301 = vpack.c.b16 %v286, %v285
    %v302 = vpack.c.b16 %v288, %v287
    %v303 = vpack.c.b16 %v290, %v289
    %v304 = vpack.c.b16 %v292, %v291
    %v305 = vpack.c.b16 %v294, %v293
    %v306 = vpack.c.b16 %v296, %v295
    %v307 = vpack.c.b16 %v298, %v297
    %v308 = vpack.c.b16 %v300, %v299
    %317 = vmatprep.subr.bf16.mxu0 0
    %318 = vmatpush1.bf16.msra.mxu0 %v301
    %319 = vmatprep.subr.bf16.mxu0 0
    %320 = vmatpush1.bf16.msra.mxu0 %v302
    %321 = vmatprep.subr.bf16.mxu0 0
    %322 = vmatpush1.bf16.msra.mxu0 %v303
    %323 = vmatprep.subr.bf16.mxu0 0
    %324 = vmatpush1.bf16.msra.mxu0 %v304
    %325 = vmatprep.subr.bf16.mxu0 0
    %326 = vmatpush1.bf16.msra.mxu0 %v305
    %327 = vmatprep.subr.bf16.mxu0 0
    %328 = vmatpush1.bf16.msra.mxu0 %v306
    %329 = vmatprep.subr.bf16.mxu0 0
    %330 = vmatpush1.bf16.msra.mxu0 %v307
    %331 = vmatprep.subr.bf16.mxu0 0
    %332 = vmatpush1.bf16.msra.mxu0 %v308
    %333 = vmatprep.subr.bf16.mxu0 0
    %334 = vmatpush1.bf16.msra.mxu0 0
    %335 = vmatprep.subr.bf16.mxu0 0
    %336 = vmatpush1.bf16.msra.mxu0 0
    %337 = vmatprep.subr.bf16.mxu0 0
    %338 = vmatpush1.bf16.msra.mxu0 0
    %339 = vmatprep.subr.bf16.mxu0 0
    %340 = vmatpush1.bf16.msra.mxu0 0
    %341 = vmatprep.subr.bf16.mxu0 0
    %342 = vmatpush1.bf16.msra.mxu0 0
    %343 = vmatprep.subr.bf16.mxu0 0
    %344 = vmatpush1.bf16.msra.mxu0 0
    %345 = vmatprep.subr.bf16.mxu0 0
    %346 = vmatpush1.bf16.msra.mxu0 0
    %347 = vmatprep.subr.bf16.mxu0 0
    %348 = vmatpush1.bf16.msra.mxu0 0
    %349 = vmatprep.mubr.bf16.mxu0 0
    %350 = vmatmul.mubr.bf16.gmra.mrb[0].mxu0 %v245
    %v351 = vpop.f32.mrb[0].mxu0
    %v352 = vadd.f32 %v267, %v351
    %v353 = vpop.f32.mrb[0].mxu0
    %v354 = vpop.f32.mrb[0].mxu0
    %v355 = vadd.f32 %v267, %v354
    %v356 = vpop.f32.mrb[0].mxu0
    %357 = vdwg.mxu0
    %v358 = vmul.f32 %v352, 0.5
    %v359 = vmul.f32 %v355, 0.5
    %v360 = vadd.f32 %v115, %v358
    %v361 = vadd.f32 %v116, %v359
    %v362 = vpack.c.bf16 %v361, %v360
    %v364 = vunpack.c.l.b16 %v362
    %v365 = vunpack.c.h.b16 %v362
    %v366 = vpack.c.b16 %v364, %v364
    %v367 = vpack.c.b16 %v365, %v365
    %vm370 = vcmask 257024
    %371 = vst.msk [vmem:[#allocation14] sm:$0xf] %vm370, %v366
    %372 = vst.msk [vmem:[#allocation14 + $0x4] sm:$0xf] %vm370, %v367
    // Predicated region
    $region58: #{conformer_encoder.11} parent=1 // pred_check
      _
    $region59: #{conformer_encoder.11} parent=1 // pred_check_branch
      %374 = sbr.rel (0) target = $region61
    $region60: #{conformer_encoder.11} parent=1 // pred_region
      %s376 = ssub.s32 128, 128
      %377 = vsyncadd [#allocation4], %s376
      %s378 = sshll.u32 [#allocation14], 4
      %s379 = int_to_ptr.vmem [resolvable:$true] %s378
      %384 = dma.vmem_to_hbm [thread:$0]  %s379, 128, %s7, [#allocation4], 64, 64, 4
    $region61: #{conformer_encoder.11} parent=1 // pred_fallthru
      _
    // Predicated region
    $region62: #{conformer_encoder.11} parent=1 // pred_check
      _
    $region63: #{conformer_encoder.11} parent=1 // pred_check_branch
      %386 = sbr.rel (0) target = $region65
    $region64: #{conformer_encoder.11} parent=1 // pred_region
      %387 = dma.done [#allocation4], 128
    $region65: #{conformer_encoder.11} parent=1 // pred_fallthru
      _
    %388 = vsyncpa [#allocation3], 1
    %389 = vsyncpa [#allocation6], 1
    %390 = vsyncpa [#allocation9], 1
    %391 = vsyncpa [#allocation12], 1
    %392 = vsyncpa [#allocation4], 1

// kernel: conformer_encoder.10
$region0: #{conformer_encoder.10}
  #allocation0 [shape = 'u32[]', space=smem, size = 0x4, offset = 0x4, fixed_abs, tag = 'smem constant byte address 0x4 - core index']
  #allocation1 [shape = 'u32[144,128]{1,0:T(1,128)}', space=vmem, size = 0x12000, scoped, tag = 'internal scratch']
  %s0 = inlined_call_operand.hbm [shape: f32[128,32], index: 0, kind: input, shape index: {}]
  %s1 = inlined_call_operand.hbm [shape: bf16[2,32,32], index: 1, kind: input, shape index: {}]
  %s2 = inlined_call_operand.hbm [shape: bf16[2,128,32], index: 2, kind: output, shape index: {}]
  %s3 = sld [smem:[#allocation0]]
  $region49: #{conformer_encoder.10} parent=0
    _
  %s5 = ssub.s32 1, %s3
  %s6 = scalar_select 0, %s5, %s3
  $region1: #{conformer_encoder.10} parent=0
    #allocation2 [shape = 'u8[65536]{0}', space=vmem, size = 0x10000, scoped, tag = 'input window, operand 0, single buffered']
    #allocation3 [shape = 's32[2]{0}', space=sflag, size = 0x8, scoped, tag = 'scoped memory for conformer_encoder.10']
    #allocation4 [shape = 's32[2]{0}', space=sflag, size = 0x8, scoped, tag = 'scoped memory for conformer_encoder.10']
    #allocation5 [shape = 'u8[16384]{0}', space=vmem, size = 0x4000, scoped, tag = 'input window, operand 1']
    #allocation6 [shape = 's32[2]{0}', space=sflag, size = 0x8, scoped, tag = 'scoped memory for conformer_encoder.10']
    #allocation7 [shape = 'u8[65536]{0}', space=vmem, size = 0x10000, scoped, tag = 'output window, operand 0']
    %7 = vsyncpa [#allocation3], 0
    %8 = vsyncpa [#allocation6], 0
    %s9 = scalar_lea.sflag [#allocation6], 1
    %10 = vsyncpa %s9, 0
    %11 = vsyncpa [#allocation4], 0
    %s12 = scalar_lea.sflag [#allocation4], 1
    %13 = vsyncpa %s12, 0
    loop: start=0, step=1, limit=4
    $region2: #{conformer_encoder.10} parent=1 // loop_pre_header
      _
    $region3: #{conformer_encoder.10} parent=1 // loop_header
      %s15 = sphi 0, %s19
      %p16 = scmp.ge.s32.totalorder %s15, 4
      %s23 = sphi 0, %s23
      %s25 = sphi 0, %s23
      %s26 = sphi 0, %s25
      %s40 = sphi 0, %s26
      %s46 = sphi 0, %s48
      %s49 = sphi 0, %s46
      %s50 = sphi 0, %s49
      %s66 = sphi 0, %s50
      %s72 = sphi 0, %s74
      %s75 = sphi 0, %s72
      %s76 = sphi 0, %s75
      %s92 = sphi 0, %s76
    $region4: #{conformer_encoder.10} parent=1 // loop_header_branch
      %18 = sbr.rel (%p16) target = $region8
    $region5: #{conformer_encoder.10} parent=1 // loop_body
      %s20 = ssub.s32 %s15, 1
      %s21 = ssub.s32 %s15, 2
      %s22 = sadd.s32 %s15, 1
      %s24 = sadd.s32 %s23, 1
      %p27 = scmp.eq.s32.totalorder %s15, 1
      %p28 = scmp.ne.s32.totalorder %s23, %s25
      %p29 = scmp.eq.s32.totalorder %s15, 0
      %p30 = por %p28, %p29
      %p31 = scmp.ne.s32.totalorder %s23, %s25
      %p32 = scmp.eq.s32.totalorder %s20, 1
      %p33 = por %p31, %p32
      %p34 = scmp.ne.s32.totalorder %s25, %s26
      %p35 = scmp.eq.s32.totalorder %s20, 0
      %p36 = por %p34, %p35
      %p37 = scmp.ne.s32.totalorder %s25, %s26
      %p38 = scmp.eq.s32.totalorder %s21, 1
      %p39 = por %p37, %p38
      %p41 = scmp.ne.s32.totalorder %s26, %s40
      %p42 = scmp.eq.s32.totalorder %s21, 0
      %p43 = por %p41, %p42
      %s44 = ssub.s32 %s15, %s22
      %p45 = scmp.eq.s32.totalorder %s44, 0
      %s47 = sadd.s32 %s46, 1
      %s48 = scalar_select %p45, %s46, %s47
      %p51 = pneg %p45
      %p52 = scmp.eq.s32.totalorder %s15, 1
      %p53 = por %p51, %p52
      %p54 = scmp.ne.s32.totalorder %s46, %s49
      %p55 = scmp.eq.s32.totalorder %s15, 0
      %p56 = por %p54, %p55
      %p57 = scmp.ne.s32.totalorder %s46, %s49
      %p58 = scmp.eq.s32.totalorder %s20, 1
      %p59 = por %p57, %p58
      %p60 = scmp.ne.s32.totalorder %s49, %s50
      %p61 = scmp.eq.s32.totalorder %s20, 0
      %p62 = por %p60, %p61
      %p63 = scmp.ne.s32.totalorder %s49, %s50
      %p64 = scmp.eq.s32.totalorder %s21, 1
      %p65 = por %p63, %p64
      %p67 = scmp.ne.s32.totalorder %s50, %s66
      %p68 = scmp.eq.s32.totalorder %s21, 0
      %p69 = por %p67, %p68
      %s70 = ssub.s32 %s15, %s22
      %p71 = scmp.eq.s32.totalorder %s70, 0
      %s73 = sadd.s32 %s72, 1
      %s74 = scalar_select %p71, %s72, %s73
      %p77 = pneg %p71
      %p78 = scmp.eq.s32.totalorder %s15, 1
      %p79 = por %p77, %p78
      %p80 = scmp.ne.s32.totalorder %s72, %s75
      %p81 = scmp.eq.s32.totalorder %s15, 0
      %p82 = por %p80, %p81
      %p83 = scmp.ne.s32.totalorder %s72, %s75
      %p84 = scmp.eq.s32.totalorder %s20, 1
      %p85 = por %p83, %p84
      %p86 = scmp.ne.s32.totalorder %s75, %s76
      %p87 = scmp.eq.s32.totalorder %s20, 0
      %p88 = por %p86, %p87
      %p89 = scmp.ne.s32.totalorder %s75, %s76
      %p90 = scmp.eq.s32.totalorder %s21, 1
      %p91 = por %p89, %p90
      %p93 = scmp.ne.s32.totalorder %s76, %s92
      %p94 = scmp.eq.s32.totalorder %s21, 0
      %p95 = por %p93, %p94
      %p96 = scmp.le.s32.totalorder 1, %s15
      %p97 = scmp.lt.s32.totalorder %s15, 3
      %p98 = pnand %p96, %p97
      %p99 = pneg %p98
      // Predicated region
      $region9: #{conformer_encoder.10} parent=5 // pred_check
        _
      $region10: #{conformer_encoder.10} parent=5 // pred_check_branch
        %101 = sbr.rel (%p98) target = $region12
      $region11: #{conformer_encoder.10} parent=5 // pred_region
        %s102 = ssub.s32 %s15, 1
        // Predicated region
        $region13: #{conformer_encoder.10} parent=11 // pred_check
          %p103 = pneg %p36
        $region14: #{conformer_encoder.10} parent=11 // pred_check_branch
          %105 = sbr.rel (%p103) target = $region16
        $region15: #{conformer_encoder.10} parent=11 // pred_region
          %s107 = ssub.s32 2048, 2048
          %108 = vsyncadd [#allocation3], %s107
          %s109 = sshll.u32 [#allocation2], 4
          %s110 = int_to_ptr.vmem [resolvable:$true] %s109
          %115 = dma.hbm_to_vmem [thread:$0]  %s0, 2048, %s110, [#allocation3], 128, 128, 8
        $region16: #{conformer_encoder.10} parent=11 // pred_fallthru
          _
      $region12: #{conformer_encoder.10} parent=5 // pred_fallthru
        _
      %p116 = scmp.lt.s32.totalorder %s15, 2
      // Predicated region
      $region17: #{conformer_encoder.10} parent=5 // pred_check
        %p117 = pneg %p116
      $region18: #{conformer_encoder.10} parent=5 // pred_check_branch
        %119 = sbr.rel (%p117) target = $region20
      $region19: #{conformer_encoder.10} parent=5 // pred_region
        // Predicated region
        $region21: #{conformer_encoder.10} parent=19 // pred_check
          %p120 = pneg %p56
        $region22: #{conformer_encoder.10} parent=19 // pred_check_branch
          %122 = sbr.rel (%p120) target = $region24
        $region23: #{conformer_encoder.10} parent=19 // pred_region
          %s123 = sand.u32 %s46, 1
          %s124 = scalar_lea.sflag [#allocation6], %s123
          %s125 = sand.u32 %s46, 1
          %s126 = smul.addr %s125, 16
          %s127 = scalar_lea.vmem [#allocation5], %s126
          %s129 = ssub.s32 256, 256
          %130 = vsyncadd %s124, %s129
          %s131 = smul.addr %s15, 4
          %s132 = smul.addr %s131, 64
          %s133 = scalar_lea.hbm %s1, %s132
          %s134 = sshll.u32 %s127, 4
          %s135 = int_to_ptr.vmem [resolvable:$true] %s134
          %140 = dma.hbm_to_vmem [thread:$0]  %s133, 256, %s135, %s124, 64, 64, 4
        $region24: #{conformer_encoder.10} parent=19 // pred_fallthru
          _
      $region20: #{conformer_encoder.10} parent=5 // pred_fallthru
        _
      %p141 = scmp.le.s32.totalorder 1, %s15
      %p142 = scmp.lt.s32.totalorder %s15, 3
      %p143 = pnand %p141, %p142
      %p144 = pneg %p143
      // Predicated region
      $region25: #{conformer_encoder.10} parent=5 // pred_check
        _
      $region26: #{conformer_encoder.10} parent=5 // pred_check_branch
        %146 = sbr.rel (%p143) target = $region28
      $region27: #{conformer_encoder.10} parent=5 // pred_region
        %s147 = ssub.s32 %s15, 1
        // Predicated region
        $region29: #{conformer_encoder.10} parent=27 // pred_check
          %p148 = pneg %p36
        $region30: #{conformer_encoder.10} parent=27 // pred_check_branch
          %150 = sbr.rel (%p148) target = $region32
        $region31: #{conformer_encoder.10} parent=27 // pred_region
          %151 = dma.done [#allocation3], 2048
        $region32: #{conformer_encoder.10} parent=27 // pred_fallthru
          _
        %s152 = sand.u32 %s49, 1
        %s153 = scalar_lea.sflag [#allocation6], %s152
        %s154 = sand.u32 %s49, 1
        %s155 = smul.addr %s154, 16
        %s156 = scalar_lea.vmem [#allocation5], %s155
        // Predicated region
        $region33: #{conformer_encoder.10} parent=27 // pred_check
          %p157 = pneg %p62
        $region34: #{conformer_encoder.10} parent=27 // pred_check_branch
          %159 = sbr.rel (%p157) target = $region36
        $region35: #{conformer_encoder.10} parent=27 // pred_region
          %160 = dma.done %s153, 256
        $region36: #{conformer_encoder.10} parent=27 // pred_fallthru
          _
        %p161 = pneg %p36
        %p162 = pneg %p33
        %s163 = sand.u32 %s49, 1
        %s164 = scalar_lea.sflag [#allocation6], %s163
        %s165 = sand.u32 %s49, 1
        %s166 = smul.addr %s165, 16
        %s167 = scalar_lea.vmem [#allocation5], %s166
        %p168 = pneg %p62
        %p169 = pneg %p59
        %p170 = pneg %p88
        %p171 = pneg %p85
        %s172 = sand.u32 %s75, 1
        %s173 = scalar_lea.sflag [#allocation4], %s172
        %s174 = sand.u32 %s75, 1
        %s175 = smul.addr %s174, 64
        %s176 = scalar_lea.vmem [#allocation7], %s175
        %v178 = vld [vmem:[#allocation2] sm:$0xff]
        %v179 = vld [vmem:[#allocation2 + $0x8] sm:$0xff]
        %v180 = vld [vmem:[#allocation2 + $0x10] sm:$0xff]
        %v181 = vld [vmem:[#allocation2 + $0x18] sm:$0xff]
        %v182 = vld [vmem:[#allocation2 + $0x20] sm:$0xff]
        %v183 = vld [vmem:[#allocation2 + $0x28] sm:$0xff]
        %v184 = vld [vmem:[#allocation2 + $0x30] sm:$0xff]
        %v185 = vld [vmem:[#allocation2 + $0x38] sm:$0xff]
        %v186 = vld [vmem:[#allocation2 + $0x40] sm:$0xff]
        %v187 = vld [vmem:[#allocation2 + $0x48] sm:$0xff]
        %v188 = vld [vmem:[#allocation2 + $0x50] sm:$0xff]
        %v189 = vld [vmem:[#allocation2 + $0x58] sm:$0xff]
        %v190 = vld [vmem:[#allocation2 + $0x60] sm:$0xff]
        %v191 = vld [vmem:[#allocation2 + $0x68] sm:$0xff]
        %v192 = vld [vmem:[#allocation2 + $0x70] sm:$0xff]
        %v193 = vld [vmem:[#allocation2 + $0x78] sm:$0xff]
        %v194 = vpack.c.bf16 %v179, %v178
        %v195 = vpack.c.bf16 %v181, %v180
        %v196 = vpack.c.bf16 %v183, %v182
        %v197 = vpack.c.bf16 %v185, %v184
        %v198 = vpack.c.bf16 %v187, %v186
        %v199 = vpack.c.bf16 %v189, %v188
        %v200 = vpack.c.bf16 %v191, %v190
        %v201 = vpack.c.bf16 %v193, %v192
        %v202 = vld [vmem:[%s156] sm:$0xf]
        %v203 = vld [vmem:[%s156 + $0x4] sm:$0xf]
        %v204 = vld [vmem:[%s156 + $0x8] sm:$0xf]
        %v205 = vld [vmem:[%s156 + $0xc] sm:$0xf]
        %v210 = vunpack.c.l.b16 %v202
        %v211 = vunpack.c.l.b16 %v203
        %v212 = vunpack.c.l.b16 %v204
        %v213 = vunpack.c.l.b16 %v205
        %v214 = vpack.c.b16 %v211, %v210
        %v215 = vpack.c.b16 %v213, %v212
        %vm218 = vcmask 261120
        %v220 = vsel %vm218, %v194, 0
        %v223 = vsel %vm218, %v195, 0
        %v226 = vsel %vm218, %v196, 0
        %v229 = vsel %vm218, %v197, 0
        %v232 = vsel %vm218, %v198, 0
        %v235 = vsel %vm218, %v199, 0
        %v238 = vsel %vm218, %v200, 0
        %v241 = vsel %vm218, %v201, 0
        %243 = vmatprep.subr.bf16.mxu0 0
        %244 = vmatpush1.bf16.msra.mxu0 %v214
        %245 = vmatprep.subr.bf16.mxu0 0
        %246 = vmatpush1.bf16.msra.mxu0 %v215
        %247 = vmatprep.subr.bf16.mxu0 0
        %248 = vmatpush1.bf16.msra.mxu0 0
        %249 = vmatprep.subr.bf16.mxu0 0
        %250 = vmatpush1.bf16.msra.mxu0 0
        %251 = vmatprep.subr.bf16.mxu0 0
        %252 = vmatpush1.bf16.msra.mxu0 0
        %253 = vmatprep.subr.bf16.mxu0 0
        %254 = vmatpush1.bf16.msra.mxu0 0
        %255 = vmatprep.subr.bf16.mxu0 0
        %256 = vmatpush1.bf16.msra.mxu0 0
        %257 = vmatprep.subr.bf16.mxu0 0
        %258 = vmatpush1.bf16.msra.mxu0 0
        %259 = vmatprep.subr.bf16.mxu0 0
        %260 = vmatpush1.bf16.msra.mxu0 0
        %261 = vmatprep.subr.bf16.mxu0 0
        %262 = vmatpush1.bf16.msra.mxu0 0
        %263 = vmatprep.subr.bf16.mxu0 0
        %264 = vmatpush1.bf16.msra.mxu0 0
        %265 = vmatprep.subr.bf16.mxu0 0
        %266 = vmatpush1.bf16.msra.mxu0 0
        %267 = vmatprep.subr.bf16.mxu0 0
        %268 = vmatpush1.bf16.msra.mxu0 0
        %269 = vmatprep.subr.bf16.mxu0 0
        %270 = vmatpush1.bf16.msra.mxu0 0
        %271 = vmatprep.subr.bf16.mxu0 0
        %272 = vmatpush1.bf16.msra.mxu0 0
        %273 = vmatprep.subr.bf16.mxu0 0
        %274 = vmatpush1.bf16.msra.mxu0 0
        %275 = vmatprep.mubr.bf16.mxu0 0
        %276 = vmatmul.mubr.bf16.gmra.mrb[0].mxu0 %v220
        %v277 = vpop.f32.mrb[0].mxu0
        %v278 = vadd.f32 0.0, %v277
        %v279 = vpop.f32.mrb[0].mxu0
        %v280 = vpop.f32.mrb[0].mxu0
        %v281 = vadd.f32 0.0, %v280
        %v282 = vpop.f32.mrb[0].mxu0
        %283 = vmatprep.mubr.bf16.mxu0 0
        %284 = vmatmul.mubr.bf16.gmra.mrb[0].mxu0 %v223
        %v285 = vpop.f32.mrb[0].mxu0
        %v286 = vadd.f32 0.0, %v285
        %v287 = vpop.f32.mrb[0].mxu0
        %v288 = vpop.f32.mrb[0].mxu0
        %v289 = vadd.f32 0.0, %v288
        %v290 = vpop.f32.mrb[0].mxu0
        %291 = vmatprep.mubr.bf16.mxu0 0
        %292 = vmatmul.mubr.bf16.gmra.mrb[0].mxu0 %v226
        %v293 = vpop.f32.mrb[0].mxu0
        %v294 = vadd.f32 0.0, %v293
        %v295 = vpop.f32.mrb[0].mxu0
        %v296 = vpop.f32.mrb[0].mxu0
        %v297 = vadd.f32 0.0, %v296
        %v298 = vpop.f32.mrb[0].mxu0
        %299 = vmatprep.mubr.bf16.mxu0 0
        %300 = vmatmul.mubr.bf16.gmra.mrb[0].mxu0 %v229
        %v301 = vpop.f32.mrb[0].mxu0
        %v302 = vadd.f32 0.0, %v301
        %v303 = vpop.f32.mrb[0].mxu0
        %v304 = vpop.f32.mrb[0].mxu0
        %v305 = vadd.f32 0.0, %v304
        %v306 = vpop.f32.mrb[0].mxu0
        %307 = vmatprep.mubr.bf16.mxu0 0
        %308 = vmatmul.mubr.bf16.gmra.mrb[0].mxu0 %v232
        %v309 = vpop.f32.mrb[0].mxu0
        %v310 = vadd.f32 0.0, %v309
        %v311 = vpop.f32.mrb[0].mxu0
        %v312 = vpop.f32.mrb[0].mxu0
        %v313 = vadd.f32 0.0, %v312
        %v314 = vpop.f32.mrb[0].mxu0
        %315 = vmatprep.mubr.bf16.mxu0 0
        %316 = vmatmul.mubr.bf16.gmra.mrb[0].mxu0 %v235
        %v317 = vpop.f32.mrb[0].mxu0
        %v318 = vadd.f32 0.0, %v317
        %v319 = vpop.f32.mrb[0].mxu0
        %v320 = vpop.f32.mrb[0].mxu0
        %v321 = vadd.f32 0.0, %v320
        %v322 = vpop.f32.mrb[0].mxu0
        %323 = vmatprep.mubr.bf16.mxu0 0
        %324 = vmatmul.mubr.bf16.gmra.mrb[0].mxu0 %v238
        %v325 = vpop.f32.mrb[0].mxu0
        %v326 = vadd.f32 0.0, %v325
        %v327 = vpop.f32.mrb[0].mxu0
        %v328 = vpop.f32.mrb[0].mxu0
        %v329 = vadd.f32 0.0, %v328
        %v330 = vpop.f32.mrb[0].mxu0
        %331 = vmatprep.mubr.bf16.mxu0 0
        %332 = vmatmul.mubr.bf16.gmra.mrb[0].mxu0 %v241
        %v333 = vpop.f32.mrb[0].mxu0
        %v334 = vadd.f32 0.0, %v333
        %v335 = vpop.f32.mrb[0].mxu0
        %v336 = vpop.f32.mrb[0].mxu0
        %v337 = vadd.f32 0.0, %v336
        %v338 = vpop.f32.mrb[0].mxu0
        %339 = vdwg.mxu0
        %v340 = vpack.c.bf16 %v281, %v278
        %v341 = vpack.c.bf16 %v289, %v286
        %v342 = vpack.c.bf16 %v297, %v294
        %v343 = vpack.c.bf16 %v305, %v302
        %v344 = vpack.c.bf16 %v313, %v310
        %v345 = vpack.c.bf16 %v321, %v318
        %v346 = vpack.c.bf16 %v329, %v326
        %v347 = vpack.c.bf16 %v337, %v334
        %v356 = vunpack.c.l.b16 %v340
        %v357 = vunpack.c.h.b16 %v340
        %v358 = vunpack.c.l.b16 %v341
        %v359 = vunpack.c.h.b16 %v341
        %v360 = vunpack.c.l.b16 %v342
        %v361 = vunpack.c.h.b16 %v342
        %v362 = vunpack.c.l.b16 %v343
        %v363 = vunpack.c.h.b16 %v343
        %v364 = vunpack.c.l.b16 %v344
        %v365 = vunpack.c.h.b16 %v344
        %v366 = vunpack.c.l.b16 %v345
        %v367 = vunpack.c.h.b16 %v345
        %v368 = vunpack.c.l.b16 %v346
        %v369 = vunpack.c.h.b16 %v346
        %v370 = vunpack.c.l.b16 %v347
        %v371 = vunpack.c.h.b16 %v347
        %v372 = vpack.c.b16 %v356, %v356
        %v373 = vpack.c.b16 %v357, %v357
        %v374 = vpack.c.b16 %v358, %v358
        %v375 = vpack.c.b16 %v359, %v359
        %v376 = vpack.c.b16 %v360, %v360
        %v377 = vpack.c.b16 %v361, %v361
        %v378 = vpack.c.b16 %v362, %v362
        %v379 = vpack.c.b16 %v363, %v363
        %v380 = vpack.c.b16 %v364, %v364
        %v381 = vpack.c.b16 %v365, %v365
        %v382 = vpack.c.b16 %v366, %v366
        %v383 = vpack.c.b16 %v367, %v367
        %v384 = vpack.c.b16 %v368, %v368
        %v385 = vpack.c.b16 %v369, %v369
        %v386 = vpack.c.b16 %v370, %v370
        %v387 = vpack.c.b16 %v371, %v371
        %vm404 = vcmask 257024
        %405 = vst.msk [vmem:[%s176] sm:$0xf] %vm404, %v372
        %406 = vst.msk [vmem:[%s176 + $0x4] sm:$0xf] %vm404, %v373
        %407 = vst.msk [vmem:[%s176 + $0x8] sm:$0xf] %vm404, %v374
        %408 = vst.msk [vmem:[%s176 + $0xc] sm:$0xf] %vm404, %v375
        %409 = vst.msk [vmem:[%s176 + $0x10] sm:$0xf] %vm404, %v376
        %410 = vst.msk [vmem:[%s176 + $0x14] sm:$0xf] %vm404, %v377
        %411 = vst.msk [vmem:[%s176 + $0x18] sm:$0xf] %vm404, %v378
        %412 = vst.msk [vmem:[%s176 + $0x1c] sm:$0xf] %vm404, %v379
        %413 = vst.msk [vmem:[%s176 + $0x20] sm:$0xf] %vm404, %v380
        %414 = vst.msk [vmem:[%s176 + $0x24] sm:$0xf] %vm404, %v381
        %415 = vst.msk [vmem:[%s176 + $0x28] sm:$0xf] %vm404, %v382
        %416 = vst.msk [vmem:[%s176 + $0x2c] sm:$0xf] %vm404, %v383
        %417 = vst.msk [vmem:[%s176 + $0x30] sm:$0xf] %vm404, %v384
        %418 = vst.msk [vmem:[%s176 + $0x34] sm:$0xf] %vm404, %v385
        %419 = vst.msk [vmem:[%s176 + $0x38] sm:$0xf] %vm404, %v386
        %420 = vst.msk [vmem:[%s176 + $0x3c] sm:$0xf] %vm404, %v387
        %s421 = sand.u32 %s75, 1
        %s422 = scalar_lea.sflag [#allocation4], %s421
        %s423 = sand.u32 %s75, 1
        %s424 = smul.addr %s423, 64
        %s425 = scalar_lea.vmem [#allocation7], %s424
        // Predicated region
        $region37: #{conformer_encoder.10} parent=27 // pred_check
          %p426 = pneg %p85
        $region38: #{conformer_encoder.10} parent=27 // pred_check_branch
          %428 = sbr.rel (%p426) target = $region40
        $region39: #{conformer_encoder.10} parent=27 // pred_region
          %s430 = ssub.s32 1024, 1024
          %431 = vsyncadd %s422, %s430
          %s432 = smul.addr %s20, 16
          %s433 = smul.addr %s432, 64
          %s434 = scalar_lea.hbm %s2, %s433
          %s435 = sshll.u32 %s425, 4
          %s436 = int_to_ptr.vmem [resolvable:$true] %s435
          %441 = dma.vmem_to_hbm [thread:$0]  %s436, 1024, %s434, %s422, 64, 64, 4
        $region40: #{conformer_encoder.10} parent=27 // pred_fallthru
          _
      $region28: #{conformer_encoder.10} parent=5 // pred_fallthru
        _
      %p442 = scmp.le.s32.totalorder 2, %s15
      // Predicated region
      $region41: #{conformer_encoder.10} parent=5 // pred_check
        %p443 = pneg %p442
      $region42: #{conformer_encoder.10} parent=5 // pred_check_branch
        %445 = sbr.rel (%p443) target = $region44
      $region43: #{conformer_encoder.10} parent=5 // pred_region
        %s446 = ssub.s32 %s15, 2
        // Predicated region
        $region45: #{conformer_encoder.10} parent=43 // pred_check
          %p447 = pneg %p91
        $region46: #{conformer_encoder.10} parent=43 // pred_check_branch
          %449 = sbr.rel (%p447) target = $region48
        $region47: #{conformer_encoder.10} parent=43 // pred_region
          %s450 = sand.u32 %s76, 1
          %s451 = scalar_lea.sflag [#allocation4], %s450
          %s452 = sand.u32 %s76, 1
          %s453 = smul.addr %s452, 64
          %s454 = scalar_lea.vmem [#allocation7], %s453
          %455 = dma.done %s451, 1024
        $region48: #{conformer_encoder.10} parent=43 // pred_fallthru
          _
      $region44: #{conformer_encoder.10} parent=5 // pred_fallthru
        _
    $region6: #{conformer_encoder.10} parent=1 // loop_footer
      %s19 = sadd.s32 1, %s15
    $region7: #{conformer_encoder.10} parent=1 // loop_footer_branch
      %14 = sbr.rel target = $region3
    $region8: #{conformer_encoder.10} parent=1 // loop_exit
      _
    %456 = vsyncpa [#allocation3], 1
    %s457 = scalar_lea.sflag [#allocation3], 1
    %458 = vsyncpa %s457, 1
    %459 = vsyncpa [#allocation6], 1
    %s460 = scalar_lea.sflag [#allocation6], 1
    %461 = vsyncpa %s460, 1
    %462 = vsyncpa [#allocation4], 1
    %s463 = scalar_lea.sflag [#allocation4], 1
    %464 = vsyncpa %s463, 1

// kernel: conformer_encoder.12
$region0: #{conformer_encoder.12}
  #allocation0 [shape = 'u32[]', space=smem, size = 0x4, offset = 0x4, fixed_abs, tag = 'smem constant byte address 0x4 - core index']
  #allocation1 [shape = 'u32[144,128]{1,0:T(1,128)}', space=vmem, size = 0x12000, scoped, tag = 'internal scratch']
  #allocation2 [shape = 'f32[8,32]{1,0:T(8,128)}', space=vmem, size = 0x1000, scoped, tag = 'scratch operand']
  %s0 = inlined_call_operand.hbm [shape: bf16[2,8,32], index: 0, kind: input, shape index: {}]
  %s1 = inlined_call_operand.hbm [shape: f32[2,1,8], index: 1, kind: input, shape index: {}]
  %s2 = inlined_call_operand.hbm [shape: f32[1,32], index: 2, kind: input, shape index: {}]
  %s3 = inlined_call_operand.hbm [shape: f32[1,32], index: 3, kind: input, shape index: {}]
  %s4 = inlined_call_operand.hbm [shape: bf16[32,96], index: 4, kind: input, shape index: {}]
  %s5 = inlined_call_operand.hbm [shape: f32[1,96], index: 5, kind: input, shape index: {}]
  %s6 = inlined_call_operand.hbm [shape: f32[1,32], index: 6, kind: input, shape index: {}]
  %s7 = inlined_call_operand.hbm [shape: f32[1,32], index: 7, kind: input, shape index: {}]
  %s8 = inlined_call_operand.hbm [shape: bf16[128,32], index: 8, kind: input, shape index: {}]
  %s9 = inlined_call_operand.hbm [shape: bf16[32,32], index: 9, kind: input, shape index: {}]
  %s10 = inlined_call_operand.hbm [shape: f32[1,32], index: 10, kind: input, shape index: {}]
  %s11 = inlined_call_operand.hbm [shape: bf16[2,8,32], index: 11, kind: output, shape index: {0}]
  %s12 = inlined_call_operand.hbm [shape: bf16[2,4,8,8], index: 12, kind: output, shape index: {1}]
  %13 = xla_tuple %s11, %s12
  %s14 = sld [smem:[#allocation0]]
  $region129: #{conformer_encoder.12} parent=0
    _
  %s16 = ssub.s32 1, %s14
  %s17 = scalar_select 0, %s16, %s14
  $region1: #{conformer_encoder.12} parent=0
    #allocation3 [shape = 'u8[4096]{0}', space=vmem, size = 0x1000, scoped, tag = 'input window, operand 0']
    #allocation4 [shape = 's32[2]{0}', space=sflag, size = 0x8, scoped, tag = 'scoped memory for conformer_encoder.12']
    #allocation5 [shape = 's32[2]{0}', space=sflag, size = 0x8, scoped, tag = 'scoped memory for conformer_encoder.12']
    #allocation6 [shape = 'u8[1024]{0}', space=vmem, size = 0x400, scoped, tag = 'input window, operand 1']
    #allocation7 [shape = 's32[2]{0}', space=sflag, size = 0x8, scoped, tag = 'scoped memory for conformer_encoder.12']
    #allocation8 [shape = 'u8[512]{0}', space=vmem, size = 0x400, scoped, tag = 'input window, operand 2, single buffered']
    #allocation9 [shape = 'u8[512]{0}', space=vmem, size = 0x400, scoped, tag = 'input window, operand 3, single buffered']
    #allocation10 [shape = 's32[1]{0}', space=sflag, size = 0x4, scoped, tag = 'scoped memory for conformer_encoder.12']
    #allocation11 [shape = 'u8[8192]{0}', space=vmem, size = 0x2000, scoped, tag = 'input window, operand 4, single buffered']
    #allocation12 [shape = 'u8[512]{0}', space=vmem, size = 0x400, scoped, tag = 'input window, operand 5, single buffered']
    #allocation13 [shape = 's32[1]{0}', space=sflag, size = 0x4, scoped, tag = 'scoped memory for conformer_encoder.12']
    #allocation14 [shape = 'u8[512]{0}', space=vmem, size = 0x400, scoped, tag = 'input window, operand 6, single buffered']
    #allocation15 [shape = 'u8[512]{0}', space=vmem, size = 0x400, scoped, tag = 'input window, operand 7, single buffered']
    #allocation16 [shape = 's32[1]{0}', space=sflag, size = 0x4, scoped, tag = 'scoped memory for conformer_encoder.12']
    #allocation17 [shape = 'u8[32768]{0}', space=vmem, size = 0x8000, scoped, tag = 'input window, operand 8, single buffered']
    #allocation18 [shape = 'u8[8192]{0}', space=vmem, size = 0x2000, scoped, tag = 'input window, operand 9, single buffered']
    #allocation19 [shape = 's32[1]{0}', space=sflag, size = 0x4, scoped, tag = 'scoped memory for conformer_encoder.12']
    #allocation20 [shape = 'u8[512]{0}', space=vmem, size = 0x400, scoped, tag = 'input window, operand 10, single buffered']
    #allocation21 [shape = 'u8[4096]{0}', space=vmem, size = 0x1000, scoped, tag = 'output window, operand 0']
    #allocation22 [shape = 'u8[16384]{0}', space=vmem, size = 0x4000, scoped, tag = 'output window, operand 1']
    #allocation23 [shape = 's32[2]{0}', space=sflag, size = 0x8, scoped, tag = 'scoped memory for conformer_encoder.12']
    %18 = vsyncpa [#allocation4], 0
    %s19 = scalar_lea.sflag [#allocation4], 1
    %20 = vsyncpa %s19, 0
    %21 = vsyncpa [#allocation7], 0
    %s22 = scalar_lea.sflag [#allocation7], 1
    %23 = vsyncpa %s22, 0
    %24 = vsyncpa [#allocation10], 0
    %25 = vsyncpa [#allocation13], 0
    %26 = vsyncpa [#allocation16], 0
    %27 = vsyncpa [#allocation19], 0
    %28 = vsyncpa [#allocation5], 0
    %s29 = scalar_lea.sflag [#allocation5], 1
    %30 = vsyncpa %s29, 0
    %31 = vsyncpa [#allocation23], 0
    %s32 = scalar_lea.sflag [#allocation23], 1
    %33 = vsyncpa %s32, 0
    loop: start=0, step=1, limit=4
    $region2: #{conformer_encoder.12} parent=1 // loop_pre_header
      _
    $region3: #{conformer_encoder.12} parent=1 // loop_header
      %s35 = sphi 0, %s39
      %p36 = scmp.ge.s32.totalorder %s35, 4
      %s45 = sphi 0, %s47
      %s48 = sphi 0, %s45
      %s49 = sphi 0, %s48
      %s65 = sphi 0, %s49
      %s71 = sphi 0, %s73
      %s74 = sphi 0, %s71
      %s75 = sphi 0, %s74
      %s91 = sphi 0, %s75
      %s95 = sphi 0, %s95
      %s97 = sphi 0, %s95
      %s98 = sphi 0, %s97
      %s112 = sphi 0, %s98
      %s116 = sphi 0, %s116
      %s118 = sphi 0, %s116
      %s119 = sphi 0, %s118
      %s133 = sphi 0, %s119
      %s137 = sphi 0, %s137
      %s139 = sphi 0, %s137
      %s140 = sphi 0, %s139
      %s154 = sphi 0, %s140
      %s158 = sphi 0, %s158
      %s160 = sphi 0, %s158
      %s161 = sphi 0, %s160
      %s175 = sphi 0, %s161
      %s179 = sphi 0, %s179
      %s181 = sphi 0, %s179
      %s182 = sphi 0, %s181
      %s196 = sphi 0, %s182
      %s200 = sphi 0, %s200
      %s202 = sphi 0, %s200
      %s203 = sphi 0, %s202
      %s217 = sphi 0, %s203
      %s221 = sphi 0, %s221
      %s223 = sphi 0, %s221
      %s224 = sphi 0, %s223
      %s238 = sphi 0, %s224
      %s242 = sphi 0, %s242
      %s244 = sphi 0, %s242
      %s245 = sphi 0, %s244
      %s259 = sphi 0, %s245
      %s263 = sphi 0, %s263
      %s265 = sphi 0, %s263
      %s266 = sphi 0, %s265
      %s280 = sphi 0, %s266
      %s286 = sphi 0, %s288
      %s289 = sphi 0, %s286
      %s290 = sphi 0, %s289
      %s306 = sphi 0, %s290
      %s312 = sphi 0, %s314
      %s315 = sphi 0, %s312
      %s316 = sphi 0, %s315
      %s332 = sphi 0, %s316
    $region4: #{conformer_encoder.12} parent=1 // loop_header_branch
      %38 = sbr.rel (%p36) target = $region8
    $region5: #{conformer_encoder.12} parent=1 // loop_body
      %s40 = ssub.s32 %s35, 1
      %s41 = ssub.s32 %s35, 2
      %s42 = sadd.s32 %s35, 1
      %s43 = ssub.s32 %s35, %s42
      %p44 = scmp.eq.s32.totalorder %s43, 0
      %s46 = sadd.s32 %s45, 1
      %s47 = scalar_select %p44, %s45, %s46
      %p50 = pneg %p44
      %p51 = scmp.eq.s32.totalorder %s35, 1
      %p52 = por %p50, %p51
      %p53 = scmp.ne.s32.totalorder %s45, %s48
      %p54 = scmp.eq.s32.totalorder %s35, 0
      %p55 = por %p53, %p54
      %p56 = scmp.ne.s32.totalorder %s45, %s48
      %p57 = scmp.eq.s32.totalorder %s40, 1
      %p58 = por %p56, %p57
      %p59 = scmp.ne.s32.totalorder %s48, %s49
      %p60 = scmp.eq.s32.totalorder %s40, 0
      %p61 = por %p59, %p60
      %p62 = scmp.ne.s32.totalorder %s48, %s49
      %p63 = scmp.eq.s32.totalorder %s41, 1
      %p64 = por %p62, %p63
      %p66 = scmp.ne.s32.totalorder %s49, %s65
      %p67 = scmp.eq.s32.totalorder %s41, 0
      %p68 = por %p66, %p67
      %s69 = ssub.s32 %s35, %s42
      %p70 = scmp.eq.s32.totalorder %s69, 0
      %s72 = sadd.s32 %s71, 1
      %s73 = scalar_select %p70, %s71, %s72
      %p76 = pneg %p70
      %p77 = scmp.eq.s32.totalorder %s35, 1
      %p78 = por %p76, %p77
      %p79 = scmp.ne.s32.totalorder %s71, %s74
      %p80 = scmp.eq.s32.totalorder %s35, 0
      %p81 = por %p79, %p80
      %p82 = scmp.ne.s32.totalorder %s71, %s74
      %p83 = scmp.eq.s32.totalorder %s40, 1
      %p84 = por %p82, %p83
      %p85 = scmp.ne.s32.totalorder %s74, %s75
      %p86 = scmp.eq.s32.totalorder %s40, 0
      %p87 = por %p85, %p86
      %p88 = scmp.ne.s32.totalorder %s74, %s75
      %p89 = scmp.eq.s32.totalorder %s41, 1
      %p90 = por %p88, %p89
      %p92 = scmp.ne.s32.totalorder %s75, %s91
      %p93 = scmp.eq.s32.totalorder %s41, 0
      %p94 = por %p92, %p93
      %s96 = sadd.s32 %s95, 1
      %p99 = scmp.eq.s32.totalorder %s35, 1
      %p100 = scmp.ne.s32.totalorder %s95, %s97
      %p101 = scmp.eq.s32.totalorder %s35, 0
      %p102 = por %p100, %p101
      %p103 = scmp.ne.s32.totalorder %s95, %s97
      %p104 = scmp.eq.s32.totalorder %s40, 1
      %p105 = por %p103, %p104
      %p106 = scmp.ne.s32.totalorder %s97, %s98
      %p107 = scmp.eq.s32.totalorder %s40, 0
      %p108 = por %p106, %p107
      %p109 = scmp.ne.s32.totalorder %s97, %s98
      %p110 = scmp.eq.s32.totalorder %s41, 1
      %p111 = por %p109, %p110
      %p113 = scmp.ne.s32.totalorder %s98, %s112
      %p114 = scmp.eq.s32.totalorder %s41, 0
      %p115 = por %p113, %p114
      %s117 = sadd.s32 %s116, 1
      %p120 = scmp.eq.s32.totalorder %s35, 1
      %p121 = scmp.ne.s32.totalorder %s116, %s118
      %p122 = scmp.eq.s32.totalorder %s35, 0
      %p123 = por %p121, %p122
      %p124 = scmp.ne.s32.totalorder %s116, %s118
      %p125 = scmp.eq.s32.totalorder %s40, 1
      %p126 = por %p124, %p125
      %p127 = scmp.ne.s32.totalorder %s118, %s119
      %p128 = scmp.eq.s32.totalorder %s40, 0
      %p129 = por %p127, %p128
      %p130 = scmp.ne.s32.totalorder %s118, %s119
      %p131 = scmp.eq.s32.totalorder %s41, 1
      %p132 = por %p130, %p131
      %p134 = scmp.ne.s32.totalorder %s119, %s133
      %p135 = scmp.eq.s32.totalorder %s41, 0
      %p136 = por %p134, %p135
      %s138 = sadd.s32 %s137, 1
      %p141 = scmp.eq.s32.totalorder %s35, 1
      %p142 = scmp.ne.s32.totalorder %s137, %s139
      %p143 = scmp.eq.s32.totalorder %s35, 0
      %p144 = por %p142, %p143
      %p145 = scmp.ne.s32.totalorder %s137, %s139
      %p146 = scmp.eq.s32.totalorder %s40, 1
      %p147 = por %p145, %p146
      %p148 = scmp.ne.s32.totalorder %s139, %s140
      %p149 = scmp.eq.s32.totalorder %s40, 0
      %p150 = por %p148, %p149
      %p151 = scmp.ne.s32.totalorder %s139, %s140
      %p152 = scmp.eq.s32.totalorder %s41, 1
      %p153 = por %p151, %p152
      %p155 = scmp.ne.s32.totalorder %s140, %s154
      %p156 = scmp.eq.s32.totalorder %s41, 0
      %p157 = por %p155, %p156
      %s159 = sadd.s32 %s158, 1
      %p162 = scmp.eq.s32.totalorder %s35, 1
      %p163 = scmp.ne.s32.totalorder %s158, %s160
      %p164 = scmp.eq.s32.totalorder %s35, 0
      %p165 = por %p163, %p164
      %p166 = scmp.ne.s32.totalorder %s158, %s160
      %p167 = scmp.eq.s32.totalorder %s40, 1
      %p168 = por %p166, %p167
      %p169 = scmp.ne.s32.totalorder %s160, %s161
      %p170 = scmp.eq.s32.totalorder %s40, 0
      %p171 = por %p169, %p170
      %p172 = scmp.ne.s32.totalorder %s160, %s161
      %p173 = scmp.eq.s32.totalorder %s41, 1
      %p174 = por %p172, %p173
      %p176 = scmp.ne.s32.totalorder %s161, %s175
      %p177 = scmp.eq.s32.totalorder %s41, 0
      %p178 = por %p176, %p177
      %s180 = sadd.s32 %s179, 1
      %p183 = scmp.eq.s32.totalorder %s35, 1
      %p184 = scmp.ne.s32.totalorder %s179, %s181
      %p185 = scmp.eq.s32.totalorder %s35, 0
      %p186 = por %p184, %p185
      %p187 = scmp.ne.s32.totalorder %s179, %s181
      %p188 = scmp.eq.s32.totalorder %s40, 1
      %p189 = por %p187, %p188
      %p190 = scmp.ne.s32.totalorder %s181, %s182
      %p191 = scmp.eq.s32.totalorder %s40, 0
      %p192 = por %p190, %p191
      %p193 = scmp.ne.s32.totalorder %s181, %s182
      %p194 = scmp.eq.s32.totalorder %s41, 1
      %p195 = por %p193, %p194
      %p197 = scmp.ne.s32.totalorder %s182, %s196
      %p198 = scmp.eq.s32.totalorder %s41, 0
      %p199 = por %p197, %p198
      %s201 = sadd.s32 %s200, 1
      %p204 = scmp.eq.s32.totalorder %s35, 1
      %p205 = scmp.ne.s32.totalorder %s200, %s202
      %p206 = scmp.eq.s32.totalorder %s35, 0
      %p207 = por %p205, %p206
      %p208 = scmp.ne.s32.totalorder %s200, %s202
      %p209 = scmp.eq.s32.totalorder %s40, 1
      %p210 = por %p208, %p209
      %p211 = scmp.ne.s32.totalorder %s202, %s203
      %p212 = scmp.eq.s32.totalorder %s40, 0
      %p213 = por %p211, %p212
      %p214 = scmp.ne.s32.totalorder %s202, %s203
      %p215 = scmp.eq.s32.totalorder %s41, 1
      %p216 = por %p214, %p215
      %p218 = scmp.ne.s32.totalorder %s203, %s217
      %p219 = scmp.eq.s32.totalorder %s41, 0
      %p220 = por %p218, %p219
      %s222 = sadd.s32 %s221, 1
      %p225 = scmp.eq.s32.totalorder %s35, 1
      %p226 = scmp.ne.s32.totalorder %s221, %s223
      %p227 = scmp.eq.s32.totalorder %s35, 0
      %p228 = por %p226, %p227
      %p229 = scmp.ne.s32.totalorder %s221, %s223
      %p230 = scmp.eq.s32.totalorder %s40, 1
      %p231 = por %p229, %p230
      %p232 = scmp.ne.s32.totalorder %s223, %s224
      %p233 = scmp.eq.s32.totalorder %s40, 0
      %p234 = por %p232, %p233
      %p235 = scmp.ne.s32.totalorder %s223, %s224
      %p236 = scmp.eq.s32.totalorder %s41, 1
      %p237 = por %p235, %p236
      %p239 = scmp.ne.s32.totalorder %s224, %s238
      %p240 = scmp.eq.s32.totalorder %s41, 0
      %p241 = por %p239, %p240
      %s243 = sadd.s32 %s242, 1
      %p246 = scmp.eq.s32.totalorder %s35, 1
      %p247 = scmp.ne.s32.totalorder %s242, %s244
      %p248 = scmp.eq.s32.totalorder %s35, 0
      %p249 = por %p247, %p248
      %p250 = scmp.ne.s32.totalorder %s242, %s244
      %p251 = scmp.eq.s32.totalorder %s40, 1
      %p252 = por %p250, %p251
      %p253 = scmp.ne.s32.totalorder %s244, %s245
      %p254 = scmp.eq.s32.totalorder %s40, 0
      %p255 = por %p253, %p254
      %p256 = scmp.ne.s32.totalorder %s244, %s245
      %p257 = scmp.eq.s32.totalorder %s41, 1
      %p258 = por %p256, %p257
      %p260 = scmp.ne.s32.totalorder %s245, %s259
      %p261 = scmp.eq.s32.totalorder %s41, 0
      %p262 = por %p260, %p261
      %s264 = sadd.s32 %s263, 1
      %p267 = scmp.eq.s32.totalorder %s35, 1
      %p268 = scmp.ne.s32.totalorder %s263, %s265
      %p269 = scmp.eq.s32.totalorder %s35, 0
      %p270 = por %p268, %p269
      %p271 = scmp.ne.s32.totalorder %s263, %s265
      %p272 = scmp.eq.s32.totalorder %s40, 1
      %p273 = por %p271, %p272
      %p274 = scmp.ne.s32.totalorder %s265, %s266
      %p275 = scmp.eq.s32.totalorder %s40, 0
      %p276 = por %p274, %p275
      %p277 = scmp.ne.s32.totalorder %s265, %s266
      %p278 = scmp.eq.s32.totalorder %s41, 1
      %p279 = por %p277, %p278
      %p281 = scmp.ne.s32.totalorder %s266, %s280
      %p282 = scmp.eq.s32.totalorder %s41, 0
      %p283 = por %p281, %p282
      %s284 = ssub.s32 %s35, %s42
      %p285 = scmp.eq.s32.totalorder %s284, 0
      %s287 = sadd.s32 %s286, 1
      %s288 = scalar_select %p285, %s286, %s287
      %p291 = pneg %p285
      %p292 = scmp.eq.s32.totalorder %s35, 1
      %p293 = por %p291, %p292
      %p294 = scmp.ne.s32.totalorder %s286, %s289
      %p295 = scmp.eq.s32.totalorder %s35, 0
      %p296 = por %p294, %p295
      %p297 = scmp.ne.s32.totalorder %s286, %s289
      %p298 = scmp.eq.s32.totalorder %s40, 1
      %p299 = por %p297, %p298
      %p300 = scmp.ne.s32.totalorder %s289, %s290
      %p301 = scmp.eq.s32.totalorder %s40, 0
      %p302 = por %p300, %p301
      %p303 = scmp.ne.s32.totalorder %s289, %s290
      %p304 = scmp.eq.s32.totalorder %s41, 1
      %p305 = por %p303, %p304
      %p307 = scmp.ne.s32.totalorder %s290, %s306
      %p308 = scmp.eq.s32.totalorder %s41, 0
      %p309 = por %p307, %p308
      %s310 = ssub.s32 %s35, %s42
      %p311 = scmp.eq.s32.totalorder %s310, 0
      %s313 = sadd.s32 %s312, 1
      %s314 = scalar_select %p311, %s312, %s313
      %p317 = pneg %p311
      %p318 = scmp.eq.s32.totalorder %s35, 1
      %p319 = por %p317, %p318
      %p320 = scmp.ne.s32.totalorder %s312, %s315
      %p321 = scmp.eq.s32.totalorder %s35, 0
      %p322 = por %p320, %p321
      %p323 = scmp.ne.s32.totalorder %s312, %s315
      %p324 = scmp.eq.s32.totalorder %s40, 1
      %p325 = por %p323, %p324
      %p326 = scmp.ne.s32.totalorder %s315, %s316
      %p327 = scmp.eq.s32.totalorder %s40, 0
      %p328 = por %p326, %p327
      %p329 = scmp.ne.s32.totalorder %s315, %s316
      %p330 = scmp.eq.s32.totalorder %s41, 1
      %p331 = por %p329, %p330
      %p333 = scmp.ne.s32.totalorder %s316, %s332
      %p334 = scmp.eq.s32.totalorder %s41, 0
      %p335 = por %p333, %p334
      %p336 = scmp.le.s32.totalorder 1, %s35
      %p337 = scmp.lt.s32.totalorder %s35, 3
      %p338 = pnand %p336, %p337
      %p339 = pneg %p338
      // Predicated region
      $region9: #{conformer_encoder.12} parent=5 // pred_check
        _
      $region10: #{conformer_encoder.12} parent=5 // pred_check_branch
        %341 = sbr.rel (%p338) target = $region12
      $region11: #{conformer_encoder.12} parent=5 // pred_region
        %s342 = ssub.s32 %s35, 1
        // Predicated region
        $region13: #{conformer_encoder.12} parent=11 // pred_check
          %p343 = pneg %p108
        $region14: #{conformer_encoder.12} parent=11 // pred_check_branch
          %345 = sbr.rel (%p343) target = $region16
        $region15: #{conformer_encoder.12} parent=11 // pred_region
          %s347 = ssub.s32 16, 16
          %348 = vsyncadd [#allocation7], %s347
          %s350 = sshll.u32 [#allocation8], 4
          %s351 = int_to_ptr.vmem [resolvable:$true] %s350
          %353 = dma.hbm_to_vmem [thread:$0]  %s2, 16, %s351, [#allocation7]
        $region16: #{conformer_encoder.12} parent=11 // pred_fallthru
          _
        // Predicated region
        $region17: #{conformer_encoder.12} parent=11 // pred_check
          %p354 = pneg %p129
        $region18: #{conformer_encoder.12} parent=11 // pred_check_branch
          %356 = sbr.rel (%p354) target = $region20
        $region19: #{conformer_encoder.12} parent=11 // pred_region
          %s358 = ssub.s32 16, 16
          %359 = vsyncadd [#allocation10], %s358
          %s361 = sshll.u32 [#allocation9], 4
          %s362 = int_to_ptr.vmem [resolvable:$true] %s361
          %364 = dma.hbm_to_vmem [thread:$0]  %s3, 16, %s362, [#allocation10]
        $region20: #{conformer_encoder.12} parent=11 // pred_fallthru
          _
        // Predicated region
        $region21: #{conformer_encoder.12} parent=11 // pred_check
          %p365 = pneg %p150
        $region22: #{conformer_encoder.12} parent=11 // pred_check_branch
          %367 = sbr.rel (%p365) target = $region24
        $region23: #{conformer_encoder.12} parent=11 // pred_region
          %s369 = ssub.s32 256, 256
          %370 = vsyncadd [#allocation10], %s369
          %s371 = sshll.u32 [#allocation11], 4
          %s372 = int_to_ptr.vmem [resolvable:$true] %s371
          %377 = dma.hbm_to_vmem [thread:$0]  %s4, 256, %s372, [#allocation10], 64, 64, 4
        $region24: #{conformer_encoder.12} parent=11 // pred_fallthru
          _
        // Predicated region
        $region25: #{conformer_encoder.12} parent=11 // pred_check
          %p378 = pneg %p171
        $region26: #{conformer_encoder.12} parent=11 // pred_check_branch
          %380 = sbr.rel (%p378) target = $region28
        $region27: #{conformer_encoder.12} parent=11 // pred_region
          %s382 = ssub.s32 16, 16
          %383 = vsyncadd [#allocation13], %s382
          %s385 = sshll.u32 [#allocation12], 4
          %s386 = int_to_ptr.vmem [resolvable:$true] %s385
          %388 = dma.hbm_to_vmem [thread:$0]  %s5, 16, %s386, [#allocation13]
        $region28: #{conformer_encoder.12} parent=11 // pred_fallthru
          _
        // Predicated region
        $region29: #{conformer_encoder.12} parent=11 // pred_check
          %p389 = pneg %p192
        $region30: #{conformer_encoder.12} parent=11 // pred_check_branch
          %391 = sbr.rel (%p389) target = $region32
        $region31: #{conformer_encoder.12} parent=11 // pred_region
          %s393 = ssub.s32 16, 16
          %394 = vsyncadd [#allocation13], %s393
          %s396 = sshll.u32 [#allocation14], 4
          %s397 = int_to_ptr.vmem [resolvable:$true] %s396
          %399 = dma.hbm_to_vmem [thread:$0]  %s6, 16, %s397, [#allocation13]
        $region32: #{conformer_encoder.12} parent=11 // pred_fallthru
          _
        // Predicated region
        $region33: #{conformer_encoder.12} parent=11 // pred_check
          %p400 = pneg %p213
        $region34: #{conformer_encoder.12} parent=11 // pred_check_branch
          %402 = sbr.rel (%p400) target = $region36
        $region35: #{conformer_encoder.12} parent=11 // pred_region
          %s404 = ssub.s32 16, 16
          %405 = vsyncadd [#allocation16], %s404
          %s407 = sshll.u32 [#allocation15], 4
          %s408 = int_to_ptr.vmem [resolvable:$true] %s407
          %410 = dma.hbm_to_vmem [thread:$0]  %s7, 16, %s408, [#allocation16]
        $region36: #{conformer_encoder.12} parent=11 // pred_fallthru
          _
        // Predicated region
        $region37: #{conformer_encoder.12} parent=11 // pred_check
          %p411 = pneg %p234
        $region38: #{conformer_encoder.12} parent=11 // pred_check_branch
          %413 = sbr.rel (%p411) target = $region40
        $region39: #{conformer_encoder.12} parent=11 // pred_region
          %s415 = ssub.s32 1024, 1024
          %416 = vsyncadd [#allocation16], %s415
          %s417 = sshll.u32 [#allocation17], 4
          %s418 = int_to_ptr.vmem [resolvable:$true] %s417
          %423 = dma.hbm_to_vmem [thread:$0]  %s8, 1024, %s418, [#allocation16], 64, 64, 4
        $region40: #{conformer_encoder.12} parent=11 // pred_fallthru
          _
        // Predicated region
        $region41: #{conformer_encoder.12} parent=11 // pred_check
          %p424 = pneg %p255
        $region42: #{conformer_encoder.12} parent=11 // pred_check_branch
          %426 = sbr.rel (%p424) target = $region44
        $region43: #{conformer_encoder.12} parent=11 // pred_region
          %s428 = ssub.s32 256, 256
          %429 = vsyncadd [#allocation19], %s428
          %s430 = sshll.u32 [#allocation18], 4
          %s431 = int_to_ptr.vmem [resolvable:$true] %s430
          %436 = dma.hbm_to_vmem [thread:$0]  %s9, 256, %s431, [#allocation19], 64, 64, 4
        $region44: #{conformer_encoder.12} parent=11 // pred_fallthru
          _
        // Predicated region
        $region45: #{conformer_encoder.12} parent=11 // pred_check
          %p437 = pneg %p276
        $region46: #{conformer_encoder.12} parent=11 // pred_check_branch
          %439 = sbr.rel (%p437) target = $region48
        $region47: #{conformer_encoder.12} parent=11 // pred_region
          %s441 = ssub.s32 16, 16
          %442 = vsyncadd [#allocation19], %s441
          %s444 = sshll.u32 [#allocation20], 4
          %s445 = int_to_ptr.vmem [resolvable:$true] %s444
          %447 = dma.hbm_to_vmem [thread:$0]  %s10, 16, %s445, [#allocation19]
        $region48: #{conformer_encoder.12} parent=11 // pred_fallthru
          _
      $region12: #{conformer_encoder.12} parent=5 // pred_fallthru
        _
      %p448 = scmp.lt.s32.totalorder %s35, 2
      // Predicated region
      $region49: #{conformer_encoder.12} parent=5 // pred_check
        %p449 = pneg %p448
      $region50: #{conformer_encoder.12} parent=5 // pred_check_branch
        %451 = sbr.rel (%p449) target = $region52
      $region51: #{conformer_encoder.12} parent=5 // pred_region
        // Predicated region
        $region53: #{conformer_encoder.12} parent=51 // pred_check
          %p452 = pneg %p55
        $region54: #{conformer_encoder.12} parent=51 // pred_check_branch
          %454 = sbr.rel (%p452) target = $region56
        $region55: #{conformer_encoder.12} parent=51 // pred_region
          %s455 = sand.u32 %s45, 1
          %s456 = scalar_lea.sflag [#allocation4], %s455
          %s457 = sand.u32 %s45, 1
          %s458 = smul.addr %s457, 4
          %s459 = scalar_lea.vmem [#allocation3], %s458
          %s461 = ssub.s32 64, 64
          %462 = vsyncadd %s456, %s461
          %s463 = smul.addr %s35, 64
          %s464 = scalar_lea.hbm %s0, %s463
          %s466 = sshll.u32 %s459, 4
          %s467 = int_to_ptr.vmem [resolvable:$true] %s466
          %469 = dma.hbm_to_vmem [thread:$0]  %s464, 64, %s467, %s456
        $region56: #{conformer_encoder.12} parent=51 // pred_fallthru
          _
        // Predicated region
        $region57: #{conformer_encoder.12} parent=51 // pred_check
          %p470 = pneg %p81
        $region58: #{conformer_encoder.12} parent=51 // pred_check_branch
          %472 = sbr.rel (%p470) target = $region60
        $region59: #{conformer_encoder.12} parent=51 // pred_region
          %s473 = sand.u32 %s35, 1
          %s474 = scalar_lea.sflag [#allocation7], %s473
          %s475 = sand.u32 %s71, 1
          %s476 = scalar_lea.vmem [#allocation6], %s475
          %s478 = ssub.s32 16, 16
          %479 = vsyncadd %s474, %s478
          %s480 = smul.addr %s35, 16
          %s481 = scalar_lea.hbm %s1, %s480
          %s483 = sshll.u32 %s476, 4
          %s484 = int_to_ptr.vmem [resolvable:$true] %s483
          %486 = dma.hbm_to_vmem [thread:$0]  %s481, 16, %s484, %s474
        $region60: #{conformer_encoder.12} parent=51 // pred_fallthru
          _
      $region52: #{conformer_encoder.12} parent=5 // pred_fallthru
        _
      %p487 = scmp.le.s32.totalorder 1, %s35
      %p488 = scmp.lt.s32.totalorder %s35, 3
      %p489 = pnand %p487, %p488
      %p490 = pneg %p489
      // Predicated region
      $region61: #{conformer_encoder.12} parent=5 // pred_check
        _
      $region62: #{conformer_encoder.12} parent=5 // pred_check_branch
        %492 = sbr.rel (%p489) target = $region64
      $region63: #{conformer_encoder.12} parent=5 // pred_region
        %s493 = ssub.s32 %s35, 1
        %s494 = sand.u32 %s48, 1
        %s495 = scalar_lea.sflag [#allocation4], %s494
        %s496 = sand.u32 %s48, 1
        %s497 = smul.addr %s496, 4
        %s498 = scalar_lea.vmem [#allocation3], %s497
        // Predicated region
        $region65: #{conformer_encoder.12} parent=63 // pred_check
          %p499 = pneg %p61
        $region66: #{conformer_encoder.12} parent=63 // pred_check_branch
          %501 = sbr.rel (%p499) target = $region68
        $region67: #{conformer_encoder.12} parent=63 // pred_region
          %502 = dma.done %s495, 64
        $region68: #{conformer_encoder.12} parent=63 // pred_fallthru
          _
        %s503 = sand.u32 %s40, 1
        %s504 = scalar_lea.sflag [#allocation7], %s503
        %s505 = sand.u32 %s74, 1
        %s506 = scalar_lea.vmem [#allocation6], %s505
        // Predicated region
        $region69: #{conformer_encoder.12} parent=63 // pred_check
          %p507 = pneg %p87
        $region70: #{conformer_encoder.12} parent=63 // pred_check_branch
          %509 = sbr.rel (%p507) target = $region72
        $region71: #{conformer_encoder.12} parent=63 // pred_region
          %510 = dma.done %s504, 16
        $region72: #{conformer_encoder.12} parent=63 // pred_fallthru
          _
        // Predicated region
        $region73: #{conformer_encoder.12} parent=63 // pred_check
          %p511 = pneg %p108
        $region74: #{conformer_encoder.12} parent=63 // pred_check_branch
          %513 = sbr.rel (%p511) target = $region76
        $region75: #{conformer_encoder.12} parent=63 // pred_region
          %514 = dma.done [#allocation7], 16
        $region76: #{conformer_encoder.12} parent=63 // pred_fallthru
          _
        // Predicated region
        $region77: #{conformer_encoder.12} parent=63 // pred_check
          %p515 = pneg %p129
        $region78: #{conformer_encoder.12} parent=63 // pred_check_branch
          %517 = sbr.rel (%p515) target = $region80
        $region79: #{conformer_encoder.12} parent=63 // pred_region
          %518 = dma.done [#allocation10], 16
        $region80: #{conformer_encoder.12} parent=63 // pred_fallthru
          _
        // Predicated region
        $region81: #{conformer_encoder.12} parent=63 // pred_check
          %p519 = pneg %p150
        $region82: #{conformer_encoder.12} parent=63 // pred_check_branch
          %521 = sbr.rel (%p519) target = $region84
        $region83: #{conformer_encoder.12} parent=63 // pred_region
          %522 = dma.done [#allocation10], 256
        $region84: #{conformer_encoder.12} parent=63 // pred_fallthru
          _
        // Predicated region
        $region85: #{conformer_encoder.12} parent=63 // pred_check
          %p523 = pneg %p171
        $region86: #{conformer_encoder.12} parent=63 // pred_check_branch
          %525 = sbr.rel (%p523) target = $region88
        $region87: #{conformer_encoder.12} parent=63 // pred_region
          %526 = dma.done [#allocation13], 16
        $region88: #{conformer_encoder.12} parent=63 // pred_fallthru
          _
        // Predicated region
        $region89: #{conformer_encoder.12} parent=63 // pred_check
          %p527 = pneg %p192
        $region90: #{conformer_encoder.12} parent=63 // pred_check_branch
          %529 = sbr.rel (%p527) target = $region92
        $region91: #{conformer_encoder.12} parent=63 // pred_region
          %530 = dma.done [#allocation13], 16
        $region92: #{conformer_encoder.12} parent=63 // pred_fallthru
          _
        // Predicated region
        $region93: #{conformer_encoder.12} parent=63 // pred_check
          %p531 = pneg %p213
        $region94: #{conformer_encoder.12} parent=63 // pred_check_branch
          %533 = sbr.rel (%p531) target = $region96
        $region95: #{conformer_encoder.12} parent=63 // pred_region
          %534 = dma.done [#allocation16], 16
        $region96: #{conformer_encoder.12} parent=63 // pred_fallthru
          _
        // Predicated region
        $region97: #{conformer_encoder.12} parent=63 // pred_check
          %p535 = pneg %p234
        $region98: #{conformer_encoder.12} parent=63 // pred_check_branch
          %537 = sbr.rel (%p535) target = $region100
        $region99: #{conformer_encoder.12} parent=63 // pred_region
          %538 = dma.done [#allocation16], 1024
        $region100: #{conformer_encoder.12} parent=63 // pred_fallthru
          _
        // Predicated region
        $region101: #{conformer_encoder.12} parent=63 // pred_check
          %p539 = pneg %p255
        $region102: #{conformer_encoder.12} parent=63 // pred_check_branch
          %541 = sbr.rel (%p539) target = $region104
        $region103: #{conformer_encoder.12} parent=63 // pred_region
          %542 = dma.done [#allocation19], 256
        $region104: #{conformer_encoder.12} parent=63 // pred_fallthru
          _
        // Predicated region
        $region105: #{conformer_encoder.12} parent=63 // pred_check
          %p543 = pneg %p276
        $region106: #{conformer_encoder.12} parent=63 // pred_check_branch
          %545 = sbr.rel (%p543) target = $region108
        $region107: #{conformer_encoder.12} parent=63 // pred_region
          %546 = dma.done [#allocation19], 16
        $region108: #{conformer_encoder.12} parent=63 // pred_fallthru
          _
        %s547 = sand.u32 %s48, 1
        %s548 = scalar_lea.sflag [#allocation4], %s547
        %s549 = sand.u32 %s48, 1
        %s550 = smul.addr %s549, 4
        %s551 = scalar_lea.vmem [#allocation3], %s550
        %p552 = pneg %p61
        %p553 = pneg %p58
        %s554 = sand.u32 %s40, 1
        %s555 = scalar_lea.sflag [#allocation7], %s554
        %s556 = sand.u32 %s74, 1
        %s557 = scalar_lea.vmem [#allocation6], %s556
        %p558 = pneg %p87
        %p559 = pneg %p84
        %p560 = pneg %p108
        %p561 = pneg %p105
        %p562 = pneg %p129
        %p563 = pneg %p126
        %p564 = pneg %p150
        %p565 = pneg %p147
        %p566 = pneg %p171
        %p567 = pneg %p168
        %p568 = pneg %p192
        %p569 = pneg %p189
        %p570 = pneg %p213
        %p571 = pneg %p210
        %p572 = pneg %p234
        %p573 = pneg %p231
        %p574 = pneg %p255
        %p575 = pneg %p252
        %p576 = pneg %p276
        %p577 = pneg %p273
        %p578 = pneg %p302
        %p579 = pneg %p299
        %s580 = sand.u32 %s289, 1
        %s581 = scalar_lea.sflag [#allocation5], %s580
        %s582 = sand.u32 %s289, 1
        %s583 = smul.addr %s582, 4
        %s584 = scalar_lea.vmem [#allocation21], %s583
        %p585 = pneg %p328
        %p586 = pneg %p325
        %s587 = sand.u32 %s315, 1
        %s588 = scalar_lea.sflag [#allocation23], %s587
        %s589 = sand.u32 %s315, 1
        %s590 = smul.addr %s589, 16
        %s591 = scalar_lea.vmem [#allocation22], %s590
        %v593 = vld [vmem:[%s498] sm:$0xf]
        %v594 = vunpack.c.l.bf16 %v593
        %v595 = vld [vmem:[#allocation8] sm:$0x1]
        %v596 = vld [vmem:[#allocation9] sm:$0x1]
        %vm597 = vcmask 261120
        %v598 = vsel %vm597, %v594, 0.0
        %599 = vadd.xlane.f32.xlu0 %v598
        %v600 = vpop.xlane.xlu0 %599
        %v601 = vrcp.pop 32.0
        %v602 = vmul.f32 %v600, %v601
        %v603 = vsub.f32 %v594, %v602
        %v604 = vmul.f32 %v603, %v603
        %v605 = vsel %vm597, %v604, 0.0
        %606 = vadd.xlane.f32.xlu0 %v605
        %v607 = vpop.xlane.xlu0 %606
        %v608 = vmul.f32 %v607, %v601
        %v609 = vadd.f32 %v608, 1e-05
        %v610 = vrsqrt.pop %v609
        %v611 = vmul.f32 %v603, %v610
        %v613 = vlaneseq
        %v614 = vshrl.u32 %v613, 7
        %v615 = vsub.s32 0, %v614
        %v616 = vrot.slane %v595, %v615
        %v618 = vmul.f32 %v611, %v616
        %v620 = vlaneseq
        %v621 = vshrl.u32 %v620, 7
        %v622 = vsub.s32 0, %v621
        %v623 = vrot.slane %v596, %v622
        %v625 = vadd.f32 %v618, %v623
        %v626 = vpack.c.bf16 %v625, %v625
        %v627 = vld [vmem:[#allocation11] sm:$0xf]
        %v628 = vld [vmem:[#allocation11 + $0x4] sm:$0xf]
        %v629 = vld [vmem:[#allocation11 + $0x8] sm:$0xf]
        %v630 = vld [vmem:[#allocation11 + $0xc] sm:$0xf]
        %v631 = vld [vmem:[#allocation12] sm:$0x1]
        %v633 = vlaneseq
        %v634 = vshrl.u32 %v633, 7
        %v635 = vsub.s32 0, %v634
        %v636 = vrot.slane %v631, %v635
        %v642 = vunpack.c.l.b16 %v627
        %v643 = vunpack.c.l.b16 %v628
        %v644 = vunpack.c.l.b16 %v629
        %v645 = vunpack.c.l.b16 %v630
        %v646 = vpack.c.b16 %v643, %v642
        %v647 = vpack.c.b16 %v645, %v644
        %v651 = vsel %vm597, %v626, 0
        %653 = vmatprep.subr.bf16.mxu0 0
        %654 = vmatpush1.bf16.msra.mxu0 %v646
        %655 = vmatprep.subr.bf16.mxu0 0
        %656 = vmatpush1.bf16.msra.mxu0 %v647
        %657 = vmatprep.subr.bf16.mxu0 0
        %658 = vmatpush1.bf16.msra.mxu0 0
        %659 = vmatprep.subr.bf16.mxu0 0
        %660 = vmatpush1.bf16.msra.mxu0 0
        %661 = vmatprep.subr.bf16.mxu0 0
        %662 = vmatpush1.bf16.msra.mxu0 0
        %663 = vmatprep.subr.bf16.mxu0 0
        %664 = vmatpush1.bf16.msra.mxu0 0
        %665 = vmatprep.subr.bf16.mxu0 0
        %666 = vmatpush1.bf16.msra.mxu0 0
        %667 = vmatprep.subr.bf16.mxu0 0
        %668 = vmatpush1.bf16.msra.mxu0 0
        %669 = vmatprep.subr.bf16.mxu0 0
        %670 = vmatpush1.bf16.msra.mxu0 0
        %671 = vmatprep.subr.bf16.mxu0 0
        %672 = vmatpush1.bf16.msra.mxu0 0
        %673 = vmatprep.subr.bf16.mxu0 0
        %674 = vmatpush1.bf16.msra.mxu0 0
        %675 = vmatprep.subr.bf16.mxu0 0
        %676 = vmatpush1.bf16.msra.mxu0 0
        %677 = vmatprep.subr.bf16.mxu0 0
        %678 = vmatpush1.bf16.msra.mxu0 0
        %679 = vmatprep.subr.bf16.mxu0 0
        %680 = vmatpush1.bf16.msra.mxu0 0
        %681 = vmatprep.subr.bf16.mxu0 0
        %682 = vmatpush1.bf16.msra.mxu0 0
        %683 = vmatprep.subr.bf16.mxu0 0
        %684 = vmatpush1.bf16.msra.mxu0 0
        %685 = vmatprep.mubr.bf16.mxu0 0
        %686 = vmatmul.mubr.bf16.gmra.mrb[0].mxu0 %v651
        %v687 = vpop.f32.mrb[0].mxu0
        %v688 = vadd.f32 %v636, %v687
        %v689 = vpop.f32.mrb[0].mxu0
        %v690 = vpop.f32.mrb[0].mxu0
        %v691 = vpop.f32.mrb[0].mxu0
        %692 = vdwg.mxu0
        %v693 = vpack.c.bf16 %v688, %v688
        %v694 = vld [vmem:[#allocation14] sm:$0x1]
        %v696 = vlaneseq
        %v697 = vshrl.u32 %v696, 7
        %v698 = vsub.s32 0, %v697
        %v699 = vrot.slane %v694, %v698
        %v701 = vadd.f32 %v688, %v699
        %v702 = vmul.f32 %v701, 0.35355338
        %v703 = vpack.c.bf16 %v702, %v702
        %v704 = vld [vmem:[#allocation15] sm:$0x1]
        %v706 = vlaneseq
        %v707 = vshrl.u32 %v706, 7
        %v708 = vsub.s32 0, %v707
        %v709 = vrot.slane %v704, %v708
        %v711 = vadd.f32 %v688, %v709
        %v712 = vmul.f32 %v711, 0.35355338
        %v713 = vpack.c.bf16 %v712, %v712
        %v714 = vld [vmem:[#allocation17] sm:$0xf]
        %v715 = vld [vmem:[#allocation17 + $0x4] sm:$0xf]
        %v716 = vld [vmem:[#allocation17 + $0x8] sm:$0xf]
        %v717 = vld [vmem:[#allocation17 + $0xc] sm:$0xf]
        %v718 = vld [vmem:[#allocation17 + $0x10] sm:$0xf]
        %v719 = vld [vmem:[#allocation17 + $0x14] sm:$0xf]
        %v720 = vld [vmem:[#allocation17 + $0x18] sm:$0xf]
        %v721 = vld [vmem:[#allocation17 + $0x1c] sm:$0xf]
        %v722 = vld [vmem:[#allocation17 + $0x20] sm:$0xf]
        %v723 = vld [vmem:[#allocation17 + $0x24] sm:$0xf]
        %v724 = vld [vmem:[#allocation17 + $0x28] sm:$0xf]
        %v725 = vld [vmem:[#allocation17 + $0x2c] sm:$0xf]
        %v726 = vld [vmem:[#allocation17 + $0x30] sm:$0xf]
        %v727 = vld [vmem:[#allocation17 + $0x34] sm:$0xf]
        %v728 = vld [vmem:[#allocation17 + $0x38] sm:$0xf]
        %v729 = vld [vmem:[#allocation17 + $0x3c] sm:$0xf]
        %v730 = vld [vmem:[%s506] sm:$0x1]
        %v731 = vsub.f32 %v730, 1.0
        %v732 = vmul.f32 %v731, 1e+09
        %v749 = vunpack.c.l.b16 %v714
        %v750 = vunpack.c.l.b16 %v715
        %v751 = vunpack.c.l.b16 %v716
        %v752 = vunpack.c.l.b16 %v717
        %v753 = vunpack.c.l.b16 %v718
        %v754 = vunpack.c.l.b16 %v719
        %v755 = vunpack.c.l.b16 %v720
        %v756 = vunpack.c.l.b16 %v721
        %v757 = vunpack.c.l.b16 %v722
        %v758 = vunpack.c.l.b16 %v723
        %v759 = vunpack.c.l.b16 %v724
        %v760 = vunpack.c.l.b16 %v725
        %v761 = vunpack.c.l.b16 %v726
        %v762 = vunpack.c.l.b16 %v727
        %v763 = vunpack.c.l.b16 %v728
        %v764 = vunpack.c.l.b16 %v729
        %v765 = vpack.c.b16 %v750, %v749
        %v766 = vpack.c.b16 %v752, %v751
        %v767 = vpack.c.b16 %v754, %v753
        %v768 = vpack.c.b16 %v756, %v755
        %v769 = vpack.c.b16 %v758, %v757
        %v770 = vpack.c.b16 %v760, %v759
        %v771 = vpack.c.b16 %v762, %v761
        %v772 = vpack.c.b16 %v764, %v763
        %vm773 = vcmask 64512
        %v775 = vsel %vm773, %v713, 0
        %v778 = vsel %vm773, %v765, 0
        %v781 = vsel %vm773, %v766, 0
        %v784 = vsel %vm773, %v767, 0
        %v787 = vsel %vm773, %v768, 0
        %v790 = vsel %vm773, %v769, 0
        %v793 = vsel %vm773, %v770, 0
        %v796 = vsel %vm773, %v771, 0
        %v799 = vsel %vm773, %v772, 0
        %801 = vmatprep.subr.bf16.mxu0 0
        %802 = vmatpush1.bf16.xpose.msra.mxu0 %v778
        %803 = vmatprep.subr.bf16.mxu0 0
        %804 = vmatpush1.bf16.xpose.msra.mxu0 %v781
        %805 = vmatprep.subr.bf16.mxu0 0
        %806 = vmatpush1.bf16.xpose.msra.mxu0 %v784
        %807 = vmatprep.subr.bf16.mxu0 0
        %808 = vmatpush1.bf16.xpose.msra.mxu0 %v787
        %809 = vmatprep.subr.bf16.mxu0 0
        %810 = vmatpush1.bf16.xpose.msra.mxu0 %v790
        %811 = vmatprep.subr.bf16.mxu0 0
        %812 = vmatpush1.bf16.xpose.msra.mxu0 %v793
        %813 = vmatprep.subr.bf16.mxu0 0
        %814 = vmatpush1.bf16.xpose.msra.mxu0 %v796
        %815 = vmatprep.subr.bf16.mxu0 0
        %816 = vmatpush1.bf16.xpose.msra.mxu0 %v799
        %817 = vmatprep.subr.bf16.mxu0 0
        %818 = vmatpush1.bf16.xpose.msra.mxu0 0
        %819 = vmatprep.subr.bf16.mxu0 0
        %820 = vmatpush1.bf16.xpose.msra.mxu0 0
        %821 = vmatprep.subr.bf16.mxu0 0
        %822 = vmatpush1.bf16.xpose.msra.mxu0 0
        %823 = vmatprep.subr.bf16.mxu0 0
        %824 = vmatpush1.bf16.xpose.msra.mxu0 0
        %825 = vmatprep.subr.bf16.mxu0 0
        %826 = vmatpush1.bf16.xpose.msra.mxu0 0
        %827 = vmatprep.subr.bf16.mxu0 0
        %828 = vmatpush1.bf16.xpose.msra.mxu0 0
        %829 = vmatprep.subr.bf16.mxu0 0
        %830 = vmatpush1.bf16.xpose.msra.mxu0 0
        %831 = vmatprep.subr.bf16.mxu0 0
        %832 = vmatpush1.bf16.xpose.msra.mxu0 0
        %833 = vmatprep.mubr.bf16.mxu0 0
        %834 = vmatmul.mubr.bf16.gmra.mrb[0].mxu0 %v775
        %v835 = vpop.f32.mrb[0].mxu0
        %v836 = vadd.f32 0.0, %v835
        %v837 = vpop.f32.mrb[0].mxu0
        %v838 = vpop.f32.mrb[0].mxu0
        %v839 = vpop.f32.mrb[0].mxu0
        %840 = vdwg.mxu0
        %s842 = sor.u32 256, 121
        %843 = vrot.lane.b32.xlu0 %v836, %s842
        %v844 = vpop.permute.xlu0 %843
        %846 = vrot.lane.b32.xlu0 %v693, 96
        %v847 = vpop.permute.xlu0 %846
        %v849 = vsel %vm773, %v703, 0
        %v852 = vsel %vm773, %v847, 0
        %854 = vmatprep.subr.bf16.mxu0 0
        %855 = vmatpush1.bf16.xpose.msra.mxu0 %v852
        %856 = vmatprep.subr.bf16.mxu0 0
        %857 = vmatpush1.bf16.xpose.msra.mxu0 0
        %858 = vmatprep.subr.bf16.mxu0 0
        %859 = vmatpush1.bf16.xpose.msra.mxu0 0
        %860 = vmatprep.subr.bf16.mxu0 0
        %861 = vmatpush1.bf16.xpose.msra.mxu0 0
        %862 = vmatprep.subr.bf16.mxu0 0
        %863 = vmatpush1.bf16.xpose.msra.mxu0 0
        %864 = vmatprep.subr.bf16.mxu0 0
        %865 = vmatpush1.bf16.xpose.msra.mxu0 0
        %866 = vmatprep.subr.bf16.mxu0 0
        %867 = vmatpush1.bf16.xpose.msra.mxu0 0
        %868 = vmatprep.subr.bf16.mxu0 0
        %869 = vmatpush1.bf16.xpose.msra.mxu0 0
        %870 = vmatprep.subr.bf16.mxu0 0
        %871 = vmatpush1.bf16.xpose.msra.mxu0 0
        %872 = vmatprep.subr.bf16.mxu0 0
        %873 = vmatpush1.bf16.xpose.msra.mxu0 0
        %874 = vmatprep.subr.bf16.mxu0 0
        %875 = vmatpush1.bf16.xpose.msra.mxu0 0
        %876 = vmatprep.subr.bf16.mxu0 0
        %877 = vmatpush1.bf16.xpose.msra.mxu0 0
        %878 = vmatprep.subr.bf16.mxu0 0
        %879 = vmatpush1.bf16.xpose.msra.mxu0 0
        %880 = vmatprep.subr.bf16.mxu0 0
        %881 = vmatpush1.bf16.xpose.msra.mxu0 0
        %882 = vmatprep.subr.bf16.mxu0 0
        %883 = vmatpush1.bf16.xpose.msra.mxu0 0
        %884 = vmatprep.subr.bf16.mxu0 0
        %885 = vmatpush1.bf16.xpose.msra.mxu0 0
        %886 = vmatprep.mubr.bf16.mxu0 0
        %887 = vmatmul.mubr.bf16.gmra.mrb[0].mxu0 %v849
        %v888 = vpop.f32.mrb[0].mxu0
        %v889 = vadd.f32 %v844, %v888
        %v890 = vpop.f32.mrb[0].mxu0
        %v891 = vpop.f32.mrb[0].mxu0
        %v892 = vpop.f32.mrb[0].mxu0
        %893 = vdwg.mxu0
        %v895 = vlaneseq
        %v896 = vshrl.u32 %v895, 7
        %v897 = vsub.s32 0, %v896
        %v898 = vrot.slane %v732, %v897
        %v900 = vadd.f32 %v889, %v898
        %v901 = vsel %vm773, %v900, -inf
        %902 = vmax.xlane.f32.xlu0 %v901
        %v903 = vpop.xlane.xlu0 %902
        %v904 = vsub.f32 %v900, %v903
        %v905 = vmul.f32 %v904, 1.442695
        %v906 = vpow.pop %v905
        %v907 = vsel %vm773, %v906, 0.0
        %908 = vadd.xlane.f32.xlu0 %v907
        %v909 = vpop.xlane.xlu0 %908
        %v910 = vrcp.pop %v909
        %v911 = vmul.f32 %v906, %v910
        %v912 = vpack.c.bf16 %v911, %v911
        %vm913 = vcmask 60416
        %914 = vst.msk [vmem:[%s591] sm:$0xf] %vm913, %v912
        %915 = vrot.lane.b32.xlu0 %v693, 64
        %v916 = vpop.permute.xlu0 %915
        %v918 = vsel %vm773, %v912, 0
        %vm920 = vcmask 1043456
        %v922 = vsel %vm920, %v916, 0
        %924 = vmatprep.subr.bf16.mxu0 0
        %925 = vmatpush1.bf16.msra.mxu0 %v922
        %926 = vmatprep.subr.bf16.mxu0 0
        %927 = vmatpush1.bf16.msra.mxu0 0
        %928 = vmatprep.subr.bf16.mxu0 0
        %929 = vmatpush1.bf16.msra.mxu0 0
        %930 = vmatprep.subr.bf16.mxu0 0
        %931 = vmatpush1.bf16.msra.mxu0 0
        %932 = vmatprep.subr.bf16.mxu0 0
        %933 = vmatpush1.bf16.msra.mxu0 0
        %934 = vmatprep.subr.bf16.mxu0 0
        %935 = vmatpush1.bf16.msra.mxu0 0
        %936 = vmatprep.subr.bf16.mxu0 0
        %937 = vmatpush1.bf16.msra.mxu0 0
        %938 = vmatprep.subr.bf16.mxu0 0
        %939 = vmatpush1.bf16.msra.mxu0 0
        %940 = vmatprep.subr.bf16.mxu0 0
        %941 = vmatpush1.bf16.msra.mxu0 0
        %942 = vmatprep.subr.bf16.mxu0 0
        %943 = vmatpush1.bf16.msra.mxu0 0
        %944 = vmatprep.subr.bf16.mxu0 0
        %945 = vmatpush1.bf16.msra.mxu0 0
        %946 = vmatprep.subr.bf16.mxu0 0
        %947 = vmatpush1.bf16.msra.mxu0 0
        %948 = vmatprep.subr.bf16.mxu0 0
        %949 = vmatpush1.bf16.msra.mxu0 0
        %950 = vmatprep.subr.bf16.mxu0 0
        %951 = vmatpush1.bf16.msra.mxu0 0
        %952 = vmatprep.subr.bf16.mxu0 0
        %953 = vmatpush1.bf16.msra.mxu0 0
        %954 = vmatprep.subr.bf16.mxu0 0
        %955 = vmatpush1.bf16.msra.mxu0 0
        %956 = vmatprep.mubr.bf16.mxu0 0
        %957 = vmatmul.mubr.bf16.gmra.mrb[0].mxu0 %v918
        %v958 = vpop.f32.mrb[0].mxu0
        %v959 = vadd.f32 0.0, %v958
        %v960 = vpop.f32.mrb[0].mxu0
        %v961 = vpop.f32.mrb[0].mxu0
        %v962 = vpop.f32.mrb[0].mxu0
        %963 = vdwg.mxu0
        %964 = vst.msk [vmem:[#allocation2] sm:$0xff] %vm773, %v959
        %966 = vrot.lane.b32.xlu0 %v713, 120
        %v967 = vpop.permute.xlu0 %966
        %968 = vrot.lane.b32.xlu0 %v765, 120
        %v969 = vpop.permute.xlu0 %968
        %970 = vrot.lane.b32.xlu0 %v766, 120
        %v971 = vpop.permute.xlu0 %970
        %972 = vrot.lane.b32.xlu0 %v767, 120
        %v973 = vpop.permute.xlu0 %972
        %974 = vrot.lane.b32.xlu0 %v768, 120
        %v975 = vpop.permute.xlu0 %974
        %976 = vrot.lane.b32.xlu0 %v769, 120
        %v977 = vpop.permute.xlu0 %976
        %978 = vrot.lane.b32.xlu0 %v770, 120
        %v979 = vpop.permute.xlu0 %978
        %980 = vrot.lane.b32.xlu0 %v771, 120
        %v981 = vpop.permute.xlu0 %980
        %982 = vrot.lane.b32.xlu0 %v772, 120
        %v983 = vpop.permute.xlu0 %982
        %v985 = vsel %vm773, %v967, 0
        %v988 = vsel %vm773, %v969, 0
        %v991 = vsel %vm773, %v971, 0
        %v994 = vsel %vm773, %v973, 0
        %v997 = vsel %vm773, %v975, 0
        %v1000 = vsel %vm773, %v977, 0
        %v1003 = vsel %vm773, %v979, 0
        %v1006 = vsel %vm773, %v981, 0
        %v1009 = vsel %vm773, %v983, 0
        %1011 = vmatprep.subr.bf16.mxu0 0
        %1012 = vmatpush1.bf16.xpose.msra.mxu0 %v988
        %1013 = vmatprep.subr.bf16.mxu0 0
        %1014 = vmatpush1.bf16.xpose.msra.mxu0 %v991
        %1015 = vmatprep.subr.bf16.mxu0 0
        %1016 = vmatpush1.bf16.xpose.msra.mxu0 %v994
        %1017 = vmatprep.subr.bf16.mxu0 0
        %1018 = vmatpush1.bf16.xpose.msra.mxu0 %v997
        %1019 = vmatprep.subr.bf16.mxu0 0
        %1020 = vmatpush1.bf16.xpose.msra.mxu0 %v1000
        %1021 = vmatprep.subr.bf16.mxu0 0
        %1022 = vmatpush1.bf16.xpose.msra.mxu0 %v1003
        %1023 = vmatprep.subr.bf16.mxu0 0
        %1024 = vmatpush1.bf16.xpose.msra.mxu0 %v1006
        %1025 = vmatprep.subr.bf16.mxu0 0
        %1026 = vmatpush1.bf16.xpose.msra.mxu0 %v1009
        %1027 = vmatprep.subr.bf16.mxu0 0
        %1028 = vmatpush1.bf16.xpose.msra.mxu0 0
        %1029 = vmatprep.subr.bf16.mxu0 0
        %1030 = vmatpush1.bf16.xpose.msra.mxu0 0
        %1031 = vmatprep.subr.bf16.mxu0 0
        %1032 = vmatpush1.bf16.xpose.msra.mxu0 0
        %1033 = vmatprep.subr.bf16.mxu0 0
        %1034 = vmatpush1.bf16.xpose.msra.mxu0 0
        %1035 = vmatprep.subr.bf16.mxu0 0
        %1036 = vmatpush1.bf16.xpose.msra.mxu0 0
        %1037 = vmatprep.subr.bf16.mxu0 0
        %1038 = vmatpush1.bf16.xpose.msra.mxu0 0
        %1039 = vmatprep.subr.bf16.mxu0 0
        %1040 = vmatpush1.bf16.xpose.msra.mxu0 0
        %1041 = vmatprep.subr.bf16.mxu0 0
        %1042 = vmatpush1.bf16.xpose.msra.mxu0 0
        %1043 = vmatprep.mubr.bf16.mxu0 0
        %1044 = vmatmul.mubr.bf16.gmra.mrb[0].mxu0 %v985
        %v1045 = vpop.f32.mrb[0].mxu0
        %v1046 = vadd.f32 0.0, %v1045
        %v1047 = vpop.f32.mrb[0].mxu0
        %v1048 = vpop.f32.mrb[0].mxu0
        %v1049 = vpop.f32.mrb[0].mxu0
        %1050 = vdwg.mxu0
        %s1052 = sor.u32 256, 121
        %1053 = vrot.lane.b32.xlu0 %v1046, %s1052
        %v1054 = vpop.permute.xlu0 %1053
        %1056 = vrot.lane.b32.xlu0 %v703, 120
        %v1057 = vpop.permute.xlu0 %1056
        %1058 = vrot.lane.b32.xlu0 %v693, 88
        %v1059 = vpop.permute.xlu0 %1058
        %v1061 = vsel %vm773, %v1057, 0
        %v1064 = vsel %vm773, %v1059, 0
        %1066 = vmatprep.subr.bf16.mxu0 0
        %1067 = vmatpush1.bf16.xpose.msra.mxu0 %v1064
        %1068 = vmatprep.subr.bf16.mxu0 0
        %1069 = vmatpush1.bf16.xpose.msra.mxu0 0
        %1070 = vmatprep.subr.bf16.mxu0 0
        %1071 = vmatpush1.bf16.xpose.msra.mxu0 0
        %1072 = vmatprep.subr.bf16.mxu0 0
        %1073 = vmatpush1.bf16.xpose.msra.mxu0 0
        %1074 = vmatprep.subr.bf16.mxu0 0
        %1075 = vmatpush1.bf16.xpose.msra.mxu0 0
        %1076 = vmatprep.subr.bf16.mxu0 0
        %1077 = vmatpush1.bf16.xpose.msra.mxu0 0
        %1078 = vmatprep.subr.bf16.mxu0 0
        %1079 = vmatpush1.bf16.xpose.msra.mxu0 0
        %1080 = vmatprep.subr.bf16.mxu0 0
        %1081 = vmatpush1.bf16.xpose.msra.mxu0 0
        %1082 = vmatprep.subr.bf16.mxu0 0
        %1083 = vmatpush1.bf16.xpose.msra.mxu0 0
        %1084 = vmatprep.subr.bf16.mxu0 0
        %1085 = vmatpush1.bf16.xpose.msra.mxu0 0
        %1086 = vmatprep.subr.bf16.mxu0 0
        %1087 = vmatpush1.bf16.xpose.msra.mxu0 0
        %1088 = vmatprep.subr.bf16.mxu0 0
        %1089 = vmatpush1.bf16.xpose.msra.mxu0 0
        %1090 = vmatprep.subr.bf16.mxu0 0
        %1091 = vmatpush1.bf16.xpose.msra.mxu0 0
        %1092 = vmatprep.subr.bf16.mxu0 0
        %1093 = vmatpush1.bf16.xpose.msra.mxu0 0
        %1094 = vmatprep.subr.bf16.mxu0 0
        %1095 = vmatpush1.bf16.xpose.msra.mxu0 0
        %1096 = vmatprep.subr.bf16.mxu0 0
        %1097 = vmatpush1.bf16.xpose.msra.mxu0 0
        %1098 = vmatprep.mubr.bf16.mxu0 0
        %1099 = vmatmul.mubr.bf16.gmra.mrb[0].mxu0 %v1061
        %v1100 = vpop.f32.mrb[0].mxu0
        %v1101 = vadd.f32 %v1054, %v1100
        %v1102 = vpop.f32.mrb[0].mxu0
        %v1103 = vpop.f32.mrb[0].mxu0
        %v1104 = vpop.f32.mrb[0].mxu0
        %1105 = vdwg.mxu0
        %v1106 = vadd.f32 %v1101, %v898
        %v1107 = vsel %vm773, %v1106, -inf
        %1108 = vmax.xlane.f32.xlu0 %v1107
        %v1109 = vpop.xlane.xlu0 %1108
        %v1110 = vsub.f32 %v1106, %v1109
        %v1111 = vmul.f32 %v1110, 1.442695
        %v1112 = vpow.pop %v1111
        %v1113 = vsel %vm773, %v1112, 0.0
        %1114 = vadd.xlane.f32.xlu0 %v1113
        %v1115 = vpop.xlane.xlu0 %1114
        %v1116 = vrcp.pop %v1115
        %v1117 = vmul.f32 %v1112, %v1116
        %v1118 = vpack.c.bf16 %v1117, %v1117
        %s1119 = scalar_lea.vmem %s591, 4 [#allocation22]
        %1120 = vst.msk [vmem:[%s1119] sm:$0xf] %vm913, %v1118
        %1121 = vrot.lane.b32.xlu0 %v693, 56
        %v1122 = vpop.permute.xlu0 %1121
        %v1124 = vsel %vm773, %v1118, 0
        %v1127 = vsel %vm920, %v1122, 0
        %1129 = vmatprep.subr.bf16.mxu0 0
        %1130 = vmatpush1.bf16.msra.mxu0 %v1127
        %1131 = vmatprep.subr.bf16.mxu0 0
        %1132 = vmatpush1.bf16.msra.mxu0 0
        %1133 = vmatprep.subr.bf16.mxu0 0
        %1134 = vmatpush1.bf16.msra.mxu0 0
        %1135 = vmatprep.subr.bf16.mxu0 0
        %1136 = vmatpush1.bf16.msra.mxu0 0
        %1137 = vmatprep.subr.bf16.mxu0 0
        %1138 = vmatpush1.bf16.msra.mxu0 0
        %1139 = vmatprep.subr.bf16.mxu0 0
        %1140 = vmatpush1.bf16.msra.mxu0 0
        %1141 = vmatprep.subr.bf16.mxu0 0
        %1142 = vmatpush1.bf16.msra.mxu0 0
        %1143 = vmatprep.subr.bf16.mxu0 0
        %1144 = vmatpush1.bf16.msra.mxu0 0
        %1145 = vmatprep.subr.bf16.mxu0 0
        %1146 = vmatpush1.bf16.msra.mxu0 0
        %1147 = vmatprep.subr.bf16.mxu0 0
        %1148 = vmatpush1.bf16.msra.mxu0 0
        %1149 = vmatprep.subr.bf16.mxu0 0
        %1150 = vmatpush1.bf16.msra.mxu0 0
        %1151 = vmatprep.subr.bf16.mxu0 0
        %1152 = vmatpush1.bf16.msra.mxu0 0
        %1153 = vmatprep.subr.bf16.mxu0 0
        %1154 = vmatpush1.bf16.msra.mxu0 0
        %1155 = vmatprep.subr.bf16.mxu0 0
        %1156 = vmatpush1.bf16.msra.mxu0 0
        %1157 = vmatprep.subr.bf16.mxu0 0
        %1158 = vmatpush1.bf16.msra.mxu0 0
        %1159 = vmatprep.subr.bf16.mxu0 0
        %1160 = vmatpush1.bf16.msra.mxu0 0
        %1161 = vmatprep.mubr.bf16.mxu0 0
        %1162 = vmatmul.mubr.bf16.gmra.mrb[0].mxu0 %v1124
        %v1163 = vpop.f32.mrb[0].mxu0
        %v1164 = vadd.f32 0.0, %v1163
        %v1165 = vpop.f32.mrb[0].mxu0
        %v1166 = vpop.f32.mrb[0].mxu0
        %v1167 = vpop.f32.mrb[0].mxu0
        %1168 = vdwg.mxu0
        %1170 = vrot.lane.b32.xlu0 %v1164, 8
        %v1171 = vpop.permute.xlu0 %1170
        %vm1173 = vcmask 130112
        %1174 = vst.msk [vmem:[#allocation2] sm:$0xff] %vm1173, %v1171
        %1175 = vrot.lane.b32.xlu0 %v713, 112
        %v1176 = vpop.permute.xlu0 %1175
        %1177 = vrot.lane.b32.xlu0 %v765, 112
        %v1178 = vpop.permute.xlu0 %1177
        %1179 = vrot.lane.b32.xlu0 %v766, 112
        %v1180 = vpop.permute.xlu0 %1179
        %1181 = vrot.lane.b32.xlu0 %v767, 112
        %v1182 = vpop.permute.xlu0 %1181
        %1183 = vrot.lane.b32.xlu0 %v768, 112
        %v1184 = vpop.permute.xlu0 %1183
        %1185 = vrot.lane.b32.xlu0 %v769, 112
        %v1186 = vpop.permute.xlu0 %1185
        %1187 = vrot.lane.b32.xlu0 %v770, 112
        %v1188 = vpop.permute.xlu0 %1187
        %1189 = vrot.lane.b32.xlu0 %v771, 112
        %v1190 = vpop.permute.xlu0 %1189
        %1191 = vrot.lane.b32.xlu0 %v772, 112
        %v1192 = vpop.permute.xlu0 %1191
        %v1194 = vsel %vm773, %v1176, 0
        %v1197 = vsel %vm773, %v1178, 0
        %v1200 = vsel %vm773, %v1180, 0
        %v1203 = vsel %vm773, %v1182, 0
        %v1206 = vsel %vm773, %v1184, 0
        %v1209 = vsel %vm773, %v1186, 0
        %v1212 = vsel %vm773, %v1188, 0
        %v1215 = vsel %vm773, %v1190, 0
        %v1218 = vsel %vm773, %v1192, 0
        %1220 = vmatprep.subr.bf16.mxu0 0
        %1221 = vmatpush1.bf16.xpose.msra.mxu0 %v1197
        %1222 = vmatprep.subr.bf16.mxu0 0
        %1223 = vmatpush1.bf16.xpose.msra.mxu0 %v1200
        %1224 = vmatprep.subr.bf16.mxu0 0
        %1225 = vmatpush1.bf16.xpose.msra.mxu0 %v1203
        %1226 = vmatprep.subr.bf16.mxu0 0
        %1227 = vmatpush1.bf16.xpose.msra.mxu0 %v1206
        %1228 = vmatprep.subr.bf16.mxu0 0
        %1229 = vmatpush1.bf16.xpose.msra.mxu0 %v1209
        %1230 = vmatprep.subr.bf16.mxu0 0
        %1231 = vmatpush1.bf16.xpose.msra.mxu0 %v1212
        %1232 = vmatprep.subr.bf16.mxu0 0
        %1233 = vmatpush1.bf16.xpose.msra.mxu0 %v1215
        %1234 = vmatprep.subr.bf16.mxu0 0
        %1235 = vmatpush1.bf16.xpose.msra.mxu0 %v1218
        %1236 = vmatprep.subr.bf16.mxu0 0
        %1237 = vmatpush1.bf16.xpose.msra.mxu0 0
        %1238 = vmatprep.subr.bf16.mxu0 0
        %1239 = vmatpush1.bf16.xpose.msra.mxu0 0
        %1240 = vmatprep.subr.bf16.mxu0 0
        %1241 = vmatpush1.bf16.xpose.msra.mxu0 0
        %1242 = vmatprep.subr.bf16.mxu0 0
        %1243 = vmatpush1.bf16.xpose.msra.mxu0 0
        %1244 = vmatprep.subr.bf16.mxu0 0
        %1245 = vmatpush1.bf16.xpose.msra.mxu0 0
        %1246 = vmatprep.subr.bf16.mxu0 0
        %1247 = vmatpush1.bf16.xpose.msra.mxu0 0
        %1248 = vmatprep.subr.bf16.mxu0 0
        %1249 = vmatpush1.bf16.xpose.msra.mxu0 0
        %1250 = vmatprep.subr.bf16.mxu0 0
        %1251 = vmatpush1.bf16.xpose.msra.mxu0 0
        %1252 = vmatprep.mubr.bf16.mxu0 0
        %1253 = vmatmul.mubr.bf16.gmra.mrb[0].mxu0 %v1194
        %v1254 = vpop.f32.mrb[0].mxu0
        %v1255 = vadd.f32 0.0, %v1254
        %v1256 = vpop.f32.mrb[0].mxu0
        %v1257 = vpop.f32.mrb[0].mxu0
        %v1258 = vpop.f32.mrb[0].mxu0
        %1259 = vdwg.mxu0
        %s1261 = sor.u32 256, 121
        %1262 = vrot.lane.b32.xlu0 %v1255, %s1261
        %v1263 = vpop.permute.xlu0 %1262
        %1264 = vrot.lane.b32.xlu0 %v703, 112
        %v1265 = vpop.permute.xlu0 %1264
        %1266 = vrot.lane.b32.xlu0 %v693, 80
        %v1267 = vpop.permute.xlu0 %1266
        %v1269 = vsel %vm773, %v1265, 0
        %v1272 = vsel %vm773, %v1267, 0
        %1274 = vmatprep.subr.bf16.mxu0 0
        %1275 = vmatpush1.bf16.xpose.msra.mxu0 %v1272
        %1276 = vmatprep.subr.bf16.mxu0 0
        %1277 = vmatpush1.bf16.xpose.msra.mxu0 0
        %1278 = vmatprep.subr.bf16.mxu0 0
        %1279 = vmatpush1.bf16.xpose.msra.mxu0 0
        %1280 = vmatprep.subr.bf16.mxu0 0
        %1281 = vmatpush1.bf16.xpose.msra.mxu0 0
        %1282 = vmatprep.subr.bf16.mxu0 0
        %1283 = vmatpush1.bf16.xpose.msra.mxu0 0
        %1284 = vmatprep.subr.bf16.mxu0 0
        %1285 = vmatpush1.bf16.xpose.msra.mxu0 0
        %1286 = vmatprep.subr.bf16.mxu0 0
        %1287 = vmatpush1.bf16.xpose.msra.mxu0 0
        %1288 = vmatprep.subr.bf16.mxu0 0
        %1289 = vmatpush1.bf16.xpose.msra.mxu0 0
        %1290 = vmatprep.subr.bf16.mxu0 0
        %1291 = vmatpush1.bf16.xpose.msra.mxu0 0
        %1292 = vmatprep.subr.bf16.mxu0 0
        %1293 = vmatpush1.bf16.xpose.msra.mxu0 0
        %1294 = vmatprep.subr.bf16.mxu0 0
        %1295 = vmatpush1.bf16.xpose.msra.mxu0 0
        %1296 = vmatprep.subr.bf16.mxu0 0
        %1297 = vmatpush1.bf16.xpose.msra.mxu0 0
        %1298 = vmatprep.subr.bf16.mxu0 0
        %1299 = vmatpush1.bf16.xpose.msra.mxu0 0
        %1300 = vmatprep.subr.bf16.mxu0 0
        %1301 = vmatpush1.bf16.xpose.msra.mxu0 0
        %1302 = vmatprep.subr.bf16.mxu0 0
        %1303 = vmatpush1.bf16.xpose.msra.mxu0 0
        %1304 = vmatprep.subr.bf16.mxu0 0
        %1305 = vmatpush1.bf16.xpose.msra.mxu0 0
        %1306 = vmatprep.mubr.bf16.mxu0 0
        %1307 = vmatmul.mubr.bf16.gmra.mrb[0].mxu0 %v1269
        %v1308 = vpop.f32.mrb[0].mxu0
        %v1309 = vadd.f32 %v1263, %v1308
        %v1310 = vpop.f32.mrb[0].mxu0
        %v1311 = vpop.f32.mrb[0].mxu0
        %v1312 = vpop.f32.mrb[0].mxu0
        %1313 = vdwg.mxu0
        %v1314 = vadd.f32 %v1309, %v898
        %v1315 = vsel %vm773, %v1314, -inf
        %1316 = vmax.xlane.f32.xlu0 %v1315
        %v1317 = vpop.xlane.xlu0 %1316
        %v1318 = vsub.f32 %v1314, %v1317
        %v1319 = vmul.f32 %v1318, 1.442695
        %v1320 = vpow.pop %v1319
        %v1321 = vsel %vm773, %v1320, 0.0
        %1322 = vadd.xlane.f32.xlu0 %v1321
        %v1323 = vpop.xlane.xlu0 %1322
        %v1324 = vrcp.pop %v1323
        %v1325 = vmul.f32 %v1320, %v1324
        %v1326 = vpack.c.bf16 %v1325, %v1325
        %s1327 = scalar_lea.vmem %s591, 8 [#allocation22]
        %1328 = vst.msk [vmem:[%s1327] sm:$0xf] %vm913, %v1326
        %1329 = vrot.lane.b32.xlu0 %v693, 48
        %v1330 = vpop.permute.xlu0 %1329
        %v1332 = vsel %vm773, %v1326, 0
        %v1335 = vsel %vm920, %v1330, 0
        %1337 = vmatprep.subr.bf16.mxu0 0
        %1338 = vmatpush1.bf16.msra.mxu0 %v1335
        %1339 = vmatprep.subr.bf16.mxu0 0
        %1340 = vmatpush1.bf16.msra.mxu0 0
        %1341 = vmatprep.subr.bf16.mxu0 0
        %1342 = vmatpush1.bf16.msra.mxu0 0
        %1343 = vmatprep.subr.bf16.mxu0 0
        %1344 = vmatpush1.bf16.msra.mxu0 0
        %1345 = vmatprep.subr.bf16.mxu0 0
        %1346 = vmatpush1.bf16.msra.mxu0 0
        %1347 = vmatprep.subr.bf16.mxu0 0
        %1348 = vmatpush1.bf16.msra.mxu0 0
        %1349 = vmatprep.subr.bf16.mxu0 0
        %1350 = vmatpush1.bf16.msra.mxu0 0
        %1351 = vmatprep.subr.bf16.mxu0 0
        %1352 = vmatpush1.bf16.msra.mxu0 0
        %1353 = vmatprep.subr.bf16.mxu0 0
        %1354 = vmatpush1.bf16.msra.mxu0 0
        %1355 = vmatprep.subr.bf16.mxu0 0
        %1356 = vmatpush1.bf16.msra.mxu0 0
        %1357 = vmatprep.subr.bf16.mxu0 0
        %1358 = vmatpush1.bf16.msra.mxu0 0
        %1359 = vmatprep.subr.bf16.mxu0 0
        %1360 = vmatpush1.bf16.msra.mxu0 0
        %1361 = vmatprep.subr.bf16.mxu0 0
        %1362 = vmatpush1.bf16.msra.mxu0 0
        %1363 = vmatprep.subr.bf16.mxu0 0
        %1364 = vmatpush1.bf16.msra.mxu0 0
        %1365 = vmatprep.subr.bf16.mxu0 0
        %1366 = vmatpush1.bf16.msra.mxu0 0
        %1367 = vmatprep.subr.bf16.mxu0 0
        %1368 = vmatpush1.bf16.msra.mxu0 0
        %1369 = vmatprep.mubr.bf16.mxu0 0
        %1370 = vmatmul.mubr.bf16.gmra.mrb[0].mxu0 %v1332
        %v1371 = vpop.f32.mrb[0].mxu0
        %v1372 = vadd.f32 0.0, %v1371
        %v1373 = vpop.f32.mrb[0].mxu0
        %v1374 = vpop.f32.mrb[0].mxu0
        %v1375 = vpop.f32.mrb[0].mxu0
        %1376 = vdwg.mxu0
        %1378 = vrot.lane.b32.xlu0 %v1372, 16
        %v1379 = vpop.permute.xlu0 %1378
        %vm1381 = vcmask 195712
        %1382 = vst.msk [vmem:[#allocation2] sm:$0xff] %vm1381, %v1379
        %1383 = vrot.lane.b32.xlu0 %v713, 104
        %v1384 = vpop.permute.xlu0 %1383
        %1385 = vrot.lane.b32.xlu0 %v765, 104
        %v1386 = vpop.permute.xlu0 %1385
        %1387 = vrot.lane.b32.xlu0 %v766, 104
        %v1388 = vpop.permute.xlu0 %1387
        %1389 = vrot.lane.b32.xlu0 %v767, 104
        %v1390 = vpop.permute.xlu0 %1389
        %1391 = vrot.lane.b32.xlu0 %v768, 104
        %v1392 = vpop.permute.xlu0 %1391
        %1393 = vrot.lane.b32.xlu0 %v769, 104
        %v1394 = vpop.permute.xlu0 %1393
        %1395 = vrot.lane.b32.xlu0 %v770, 104
        %v1396 = vpop.permute.xlu0 %1395
        %1397 = vrot.lane.b32.xlu0 %v771, 104
        %v1398 = vpop.permute.xlu0 %1397
        %1399 = vrot.lane.b32.xlu0 %v772, 104
        %v1400 = vpop.permute.xlu0 %1399
        %v1402 = vsel %vm773, %v1384, 0
        %v1405 = vsel %vm773, %v1386, 0
        %v1408 = vsel %vm773, %v1388, 0
        %v1411 = vsel %vm773, %v1390, 0
        %v1414 = vsel %vm773, %v1392, 0
        %v1417 = vsel %vm773, %v1394, 0
        %v1420 = vsel %vm773, %v1396, 0
        %v1423 = vsel %vm773, %v1398, 0
        %v1426 = vsel %vm773, %v1400, 0
        %1428 = vmatprep.subr.bf16.mxu0 0
        %1429 = vmatpush1.bf16.xpose.msra.mxu0 %v1405
        %1430 = vmatprep.subr.bf16.mxu0 0
        %1431 = vmatpush1.bf16.xpose.msra.mxu0 %v1408
        %1432 = vmatprep.subr.bf16.mxu0 0
        %1433 = vmatpush1.bf16.xpose.msra.mxu0 %v1411
        %1434 = vmatprep.subr.bf16.mxu0 0
        %1435 = vmatpush1.bf16.xpose.msra.mxu0 %v1414
        %1436 = vmatprep.subr.bf16.mxu0 0
        %1437 = vmatpush1.bf16.xpose.msra.mxu0 %v1417
        %1438 = vmatprep.subr.bf16.mxu0 0
        %1439 = vmatpush1.bf16.xpose.msra.mxu0 %v1420
        %1440 = vmatprep.subr.bf16.mxu0 0
        %1441 = vmatpush1.bf16.xpose.msra.mxu0 %v1423
        %1442 = vmatprep.subr.bf16.mxu0 0
        %1443 = vmatpush1.bf16.xpose.msra.mxu0 %v1426
        %1444 = vmatprep.subr.bf16.mxu0 0
        %1445 = vmatpush1.bf16.xpose.msra.mxu0 0
        %1446 = vmatprep.subr.bf16.mxu0 0
        %1447 = vmatpush1.bf16.xpose.msra.mxu0 0
        %1448 = vmatprep.subr.bf16.mxu0 0
        %1449 = vmatpush1.bf16.xpose.msra.mxu0 0
        %1450 = vmatprep.subr.bf16.mxu0 0
        %1451 = vmatpush1.bf16.xpose.msra.mxu0 0
        %1452 = vmatprep.subr.bf16.mxu0 0
        %1453 = vmatpush1.bf16.xpose.msra.mxu0 0
        %1454 = vmatprep.subr.bf16.mxu0 0
        %1455 = vmatpush1.bf16.xpose.msra.mxu0 0
        %1456 = vmatprep.subr.bf16.mxu0 0
        %1457 = vmatpush1.bf16.xpose.msra.mxu0 0
        %1458 = vmatprep.subr.bf16.mxu0 0
        %1459 = vmatpush1.bf16.xpose.msra.mxu0 0
        %1460 = vmatprep.mubr.bf16.mxu0 0
        %1461 = vmatmul.mubr.bf16.gmra.mrb[0].mxu0 %v1402
        %v1462 = vpop.f32.mrb[0].mxu0
        %v1463 = vadd.f32 0.0, %v1462
        %v1464 = vpop.f32.mrb[0].mxu0
        %v1465 = vpop.f32.mrb[0].mxu0
        %v1466 = vpop.f32.mrb[0].mxu0
        %1467 = vdwg.mxu0
        %s1469 = sor.u32 256, 121
        %1470 = vrot.lane.b32.xlu0 %v1463, %s1469
        %v1471 = vpop.permute.xlu0 %1470
        %1472 = vrot.lane.b32.xlu0 %v703, 104
        %v1473 = vpop.permute.xlu0 %1472
        %1474 = vrot.lane.b32.xlu0 %v693, 72
        %v1475 = vpop.permute.xlu0 %1474
        %v1477 = vsel %vm773, %v1473, 0
        %v1480 = vsel %vm773, %v1475, 0
        %1482 = vmatprep.subr.bf16.mxu0 0
        %1483 = vmatpush1.bf16.xpose.msra.mxu0 %v1480
        %1484 = vmatprep.subr.bf16.mxu0 0
        %1485 = vmatpush1.bf16.xpose.msra.mxu0 0
        %1486 = vmatprep.subr.bf16.mxu0 0
        %1487 = vmatpush1.bf16.xpose.msra.mxu0 0
        %1488 = vmatprep.subr.bf16.mxu0 0
        %1489 = vmatpush1.bf16.xpose.msra.mxu0 0
        %1490 = vmatprep.subr.bf16.mxu0 0
        %1491 = vmatpush1.bf16.xpose.msra.mxu0 0
        %1492 = vmatprep.subr.bf16.mxu0 0
        %1493 = vmatpush1.bf16.xpose.msra.mxu0 0
        %1494 = vmatprep.subr.bf16.mxu0 0
        %1495 = vmatpush1.bf16.xpose.msra.mxu0 0
        %1496 = vmatprep.subr.bf16.mxu0 0
        %1497 = vmatpush1.bf16.xpose.msra.mxu0 0
        %1498 = vmatprep.subr.bf16.mxu0 0
        %1499 = vmatpush1.bf16.xpose.msra.mxu0 0
        %1500 = vmatprep.subr.bf16.mxu0 0
        %1501 = vmatpush1.bf16.xpose.msra.mxu0 0
        %1502 = vmatprep.subr.bf16.mxu0 0
        %1503 = vmatpush1.bf16.xpose.msra.mxu0 0
        %1504 = vmatprep.subr.bf16.mxu0 0
        %1505 = vmatpush1.bf16.xpose.msra.mxu0 0
        %1506 = vmatprep.subr.bf16.mxu0 0
        %1507 = vmatpush1.bf16.xpose.msra.mxu0 0
        %1508 = vmatprep.subr.bf16.mxu0 0
        %1509 = vmatpush1.bf16.xpose.msra.mxu0 0
        %1510 = vmatprep.subr.bf16.mxu0 0
        %1511 = vmatpush1.bf16.xpose.msra.mxu0 0
        %1512 = vmatprep.subr.bf16.mxu0 0
        %1513 = vmatpush1.bf16.xpose.msra.mxu0 0
        %1514 = vmatprep.mubr.bf16.mxu0 0
        %1515 = vmatmul.mubr.bf16.gmra.mrb[0].mxu0 %v1477
        %v1516 = vpop.f32.mrb[0].mxu0
        %v1517 = vadd.f32 %v1471, %v1516
        %v1518 = vpop.f32.mrb[0].mxu0
        %v1519 = vpop.f32.mrb[0].mxu0
        %v1520 = vpop.f32.mrb[0].mxu0
        %1521 = vdwg.mxu0
        %v1522 = vadd.f32 %v1517, %v898
        %v1523 = vsel %vm773, %v1522, -inf
        %1524 = vmax.xlane.f32.xlu0 %v1523
        %v1525 = vpop.xlane.xlu0 %1524
        %v1526 = vsub.f32 %v1522, %v1525
        %v1527 = vmul.f32 %v1526, 1.442695
        %v1528 = vpow.pop %v1527
        %v1529 = vsel %vm773, %v1528, 0.0
        %1530 = vadd.xlane.f32.xlu0 %v1529
        %v1531 = vpop.xlane.xlu0 %1530
        %v1532 = vrcp.pop %v1531
        %v1533 = vmul.f32 %v1528, %v1532
        %v1534 = vpack.c.bf16 %v1533, %v1533
        %s1535 = scalar_lea.vmem %s591, 12 [#allocation22]
        %1536 = vst.msk [vmem:[%s1535] sm:$0xf] %vm913, %v1534
        %1537 = vrot.lane.b32.xlu0 %v693, 40
        %v1538 = vpop.permute.xlu0 %1537
        %v1540 = vsel %vm773, %v1534, 0
        %v1543 = vsel %vm920, %v1538, 0
        %1545 = vmatprep.subr.bf16.mxu0 0
        %1546 = vmatpush1.bf16.msra.mxu0 %v1543
        %1547 = vmatprep.subr.bf16.mxu0 0
        %1548 = vmatpush1.bf16.msra.mxu0 0
        %1549 = vmatprep.subr.bf16.mxu0 0
        %1550 = vmatpush1.bf16.msra.mxu0 0
        %1551 = vmatprep.subr.bf16.mxu0 0
        %1552 = vmatpush1.bf16.msra.mxu0 0
        %1553 = vmatprep.subr.bf16.mxu0 0
        %1554 = vmatpush1.bf16.msra.mxu0 0
        %1555 = vmatprep.subr.bf16.mxu0 0
        %1556 = vmatpush1.bf16.msra.mxu0 0
        %1557 = vmatprep.subr.bf16.mxu0 0
        %1558 = vmatpush1.bf16.msra.mxu0 0
        %1559 = vmatprep.subr.bf16.mxu0 0
        %1560 = vmatpush1.bf16.msra.mxu0 0
        %1561 = vmatprep.subr.bf16.mxu0 0
        %1562 = vmatpush1.bf16.msra.mxu0 0
        %1563 = vmatprep.subr.bf16.mxu0 0
        %1564 = vmatpush1.bf16.msra.mxu0 0
        %1565 = vmatprep.subr.bf16.mxu0 0
        %1566 = vmatpush1.bf16.msra.mxu0 0
        %1567 = vmatprep.subr.bf16.mxu0 0
        %1568 = vmatpush1.bf16.msra.mxu0 0
        %1569 = vmatprep.subr.bf16.mxu0 0
        %1570 = vmatpush1.bf16.msra.mxu0 0
        %1571 = vmatprep.subr.bf16.mxu0 0
        %1572 = vmatpush1.bf16.msra.mxu0 0
        %1573 = vmatprep.subr.bf16.mxu0 0
        %1574 = vmatpush1.bf16.msra.mxu0 0
        %1575 = vmatprep.subr.bf16.mxu0 0
        %1576 = vmatpush1.bf16.msra.mxu0 0
        %1577 = vmatprep.mubr.bf16.mxu0 0
        %1578 = vmatmul.mubr.bf16.gmra.mrb[0].mxu0 %v1540
        %v1579 = vpop.f32.mrb[0].mxu0
        %v1580 = vadd.f32 0.0, %v1579
        %v1581 = vpop.f32.mrb[0].mxu0
        %v1582 = vpop.f32.mrb[0].mxu0
        %v1583 = vpop.f32.mrb[0].mxu0
        %1584 = vdwg.mxu0
        %1586 = vrot.lane.b32.xlu0 %v1580, 24
        %v1587 = vpop.permute.xlu0 %1586
        %vm1589 = vcmask 261312
        %1590 = vst.msk [vmem:[#allocation2] sm:$0xff] %vm1589, %v1587
        %v1591 = vld [vmem:[#allocation2] sm:$0xff]
        %v1592 = vpack.c.bf16 %v1591, %v1591
        %v1593 = vld [vmem:[#allocation18] sm:$0xf]
        %v1594 = vld [vmem:[#allocation18 + $0x4] sm:$0xf]
        %v1595 = vld [vmem:[#allocation18 + $0x8] sm:$0xf]
        %v1596 = vld [vmem:[#allocation18 + $0xc] sm:$0xf]
        %v1597 = vld [vmem:[#allocation20] sm:$0x1]
        %v1599 = vlaneseq
        %v1600 = vshrl.u32 %v1599, 7
        %v1601 = vsub.s32 0, %v1600
        %v1602 = vrot.slane %v1597, %v1601
        %v1608 = vunpack.c.l.b16 %v1593
        %v1609 = vunpack.c.l.b16 %v1594
        %v1610 = vunpack.c.l.b16 %v1595
        %v1611 = vunpack.c.l.b16 %v1596
        %v1612 = vpack.c.b16 %v1609, %v1608
        %v1613 = vpack.c.b16 %v1611, %v1610
        %v1617 = vsel %vm597, %v1592, 0
        %1619 = vmatprep.subr.bf16.mxu0 0
        %1620 = vmatpush1.bf16.msra.mxu0 %v1612
        %1621 = vmatprep.subr.bf16.mxu0 0
        %1622 = vmatpush1.bf16.msra.mxu0 %v1613
        %1623 = vmatprep.subr.bf16.mxu0 0
        %1624 = vmatpush1.bf16.msra.mxu0 0
        %1625 = vmatprep.subr.bf16.mxu0 0
        %1626 = vmatpush1.bf16.msra.mxu0 0
        %1627 = vmatprep.subr.bf16.mxu0 0
        %1628 = vmatpush1.bf16.msra.mxu0 0
        %1629 = vmatprep.subr.bf16.mxu0 0
        %1630 = vmatpush1.bf16.msra.mxu0 0
        %1631 = vmatprep.subr.bf16.mxu0 0
        %1632 = vmatpush1.bf16.msra.mxu0 0
        %1633 = vmatprep.subr.bf16.mxu0 0
        %1634 = vmatpush1.bf16.msra.mxu0 0
        %1635 = vmatprep.subr.bf16.mxu0 0
        %1636 = vmatpush1.bf16.msra.mxu0 0
        %1637 = vmatprep.subr.bf16.mxu0 0
        %1638 = vmatpush1.bf16.msra.mxu0 0
        %1639 = vmatprep.subr.bf16.mxu0 0
        %1640 = vmatpush1.bf16.msra.mxu0 0
        %1641 = vmatprep.subr.bf16.mxu0 0
        %1642 = vmatpush1.bf16.msra.mxu0 0
        %1643 = vmatprep.subr.bf16.mxu0 0
        %1644 = vmatpush1.bf16.msra.mxu0 0
        %1645 = vmatprep.subr.bf16.mxu0 0
        %1646 = vmatpush1.bf16.msra.mxu0 0
        %1647 = vmatprep.subr.bf16.mxu0 0
        %1648 = vmatpush1.bf16.msra.mxu0 0
        %1649 = vmatprep.subr.bf16.mxu0 0
        %1650 = vmatpush1.bf16.msra.mxu0 0
        %1651 = vmatprep.mubr.bf16.mxu0 0
        %1652 = vmatmul.mubr.bf16.gmra.mrb[0].mxu0 %v1617
        %v1653 = vpop.f32.mrb[0].mxu0
        %v1654 = vadd.f32 %v1602, %v1653
        %v1655 = vpop.f32.mrb[0].mxu0
        %v1656 = vpop.f32.mrb[0].mxu0
        %v1657 = vpop.f32.mrb[0].mxu0
        %1658 = vdwg.mxu0
        %v1659 = vadd.f32 %v594, %v1654
        %v1660 = vpack.c.bf16 %v1659, %v1659
        %vm1661 = vcmask 257024
        %1662 = vst.msk [vmem:[%s584] sm:$0xf] %vm1661, %v1660
        %s1663 = sand.u32 %s289, 1
        %s1664 = scalar_lea.sflag [#allocation5], %s1663
        %s1665 = sand.u32 %s289, 1
        %s1666 = smul.addr %s1665, 4
        %s1667 = scalar_lea.vmem [#allocation21], %s1666
        %s1668 = sand.u32 %s315, 1
        %s1669 = scalar_lea.sflag [#allocation23], %s1668
        %s1670 = sand.u32 %s315, 1
        %s1671 = smul.addr %s1670, 16
        %s1672 = scalar_lea.vmem [#allocation22], %s1671
        // Predicated region
        $region109: #{conformer_encoder.12} parent=63 // pred_check
          %p1673 = pneg %p299
        $region110: #{conformer_encoder.12} parent=63 // pred_check_branch
          %1675 = sbr.rel (%p1673) target = $region112
        $region111: #{conformer_encoder.12} parent=63 // pred_region
          %s1677 = ssub.s32 64, 64
          %1678 = vsyncadd %s1664, %s1677
          %s1679 = smul.addr %s40, 64
          %s1680 = scalar_lea.hbm %s11, %s1679
          %s1682 = sshll.u32 %s1667, 4
          %s1683 = int_to_ptr.vmem [resolvable:$true] %s1682
          %1685 = dma.vmem_to_hbm [thread:$0]  %s1683, 64, %s1680, %s1664
        $region112: #{conformer_encoder.12} parent=63 // pred_fallthru
          _
        // Predicated region
        $region113: #{conformer_encoder.12} parent=63 // pred_check
          %p1686 = pneg %p325
        $region114: #{conformer_encoder.12} parent=63 // pred_check_branch
          %1688 = sbr.rel (%p1686) target = $region116
        $region115: #{conformer_encoder.12} parent=63 // pred_region
          %s1690 = ssub.s32 256, 256
          %1691 = vsyncadd %s1669, %s1690
          %s1692 = smul.addr %s40, 4
          %s1693 = smul.addr %s1692, 64
          %s1694 = scalar_lea.hbm %s12, %s1693
          %s1695 = sshll.u32 %s1672, 4
          %s1696 = int_to_ptr.vmem [resolvable:$true] %s1695
          %1701 = dma.vmem_to_hbm [thread:$0]  %s1696, 256, %s1694, %s1669, 64, 64, 4
        $region116: #{conformer_encoder.12} parent=63 // pred_fallthru
          _
      $region64: #{conformer_encoder.12} parent=5 // pred_fallthru
        _
      %p1702 = scmp.le.s32.totalorder 2, %s35
      // Predicated region
      $region117: #{conformer_encoder.12} parent=5 // pred_check
        %p1703 = pneg %p1702
      $region118: #{conformer_encoder.12} parent=5 // pred_check_branch
        %1705 = sbr.rel (%p1703) target = $region120
      $region119: #{conformer_encoder.12} parent=5 // pred_region
        %s1706 = ssub.s32 %s35, 2
        // Predicated region
        $region121: #{conformer_encoder.12} parent=119 // pred_check
          %p1707 = pneg %p305
        $region122: #{conformer_encoder.12} parent=119 // pred_check_branch
          %1709 = sbr.rel (%p1707) target = $region124
        $region123: #{conformer_encoder.12} parent=119 // pred_region
          %s1710 = sand.u32 %s290, 1
          %s1711 = scalar_lea.sflag [#allocation5], %s1710
          %s1712 = sand.u32 %s290, 1
          %s1713 = smul.addr %s1712, 4
          %s1714 = scalar_lea.vmem [#allocation21], %s1713
          %1715 = dma.done %s1711, 64
        $region124: #{conformer_encoder.12} parent=119 // pred_fallthru
          _
        // Predicated region
        $region125: #{conformer_encoder.12} parent=119 // pred_check
          %p1716 = pneg %p331
        $region126: #{conformer_encoder.12} parent=119 // pred_check_branch
          %1718 = sbr.rel (%p1716) target = $region128
        $region127: #{conformer_encoder.12} parent=119 // pred_region
          %s1719 = sand.u32 %s316, 1
          %s1720 = scalar_lea.sflag [#allocation23], %s1719
          %s1721 = sand.u32 %s316, 1
          %s1722 = smul.addr %s1721, 16
          %s1723 = scalar_lea.vmem [#allocation22], %s1722
          %1724 = dma.done %s1720, 256
        $region128: #{conformer_encoder.12} parent=119 // pred_fallthru
          _
      $region120: #{conformer_encoder.12} parent=5 // pred_fallthru
        _
    $region6: #{conformer_encoder.12} parent=1 // loop_footer
      %s39 = sadd.s32 1, %s35
    $region7: #{conformer_encoder.12} parent=1 // loop_footer_branch
      %34 = sbr.rel target = $region3
    $region8: #{conformer_encoder.12} parent=1 // loop_exit
      _
    %1725 = vsyncpa [#allocation4], 1
    %s1726 = scalar_lea.sflag [#allocation4], 1
    %1727 = vsyncpa %s1726, 1
    %1728 = vsyncpa [#allocation7], 1
    %s1729 = scalar_lea.sflag [#allocation7], 1
    %1730 = vsyncpa %s1729, 1
    %1731 = vsyncpa [#allocation10], 1
    %1732 = vsyncpa [#allocation13], 1
    %1733 = vsyncpa [#allocation16], 1
    %1734 = vsyncpa [#allocation19], 1
    %1735 = vsyncpa [#allocation5], 1
    %s1736 = scalar_lea.sflag [#allocation5], 1
    %1737 = vsyncpa %s1736, 1
    %1738 = vsyncpa [#allocation23], 1
    %s1739 = scalar_lea.sflag [#allocation23], 1
    %1740 = vsyncpa %s1739, 1

// kernel: conformer_encoder.13
$region0: #{conformer_encoder.13}
  #allocation0 [shape = 'u32[]', space=smem, size = 0x4, offset = 0x4, fixed_abs, tag = 'smem constant byte address 0x4 - core index']
  #allocation1 [shape = 'u32[144,128]{1,0:T(1,128)}', space=vmem, size = 0x12000, scoped, tag = 'internal scratch']
  #allocation2 [shape = 'f32[10,32]{1,0:T(8,128)}', space=vmem, size = 0x2000, scoped, tag = 'scratch operand']
  %s0 = inlined_call_operand.hbm [shape: bf16[2,8,32], index: 0, kind: input, shape index: {}]
  %s1 = inlined_call_operand.hbm [shape: f32[2,8,1], index: 1, kind: input, shape index: {}]
  %s2 = inlined_call_operand.hbm [shape: f32[1,32], index: 2, kind: input, shape index: {}]
  %s3 = inlined_call_operand.hbm [shape: f32[1,32], index: 3, kind: input, shape index: {}]
  %s4 = inlined_call_operand.hbm [shape: bf16[32,64], index: 4, kind: input, shape index: {}]
  %s5 = inlined_call_operand.hbm [shape: f32[1,64], index: 5, kind: input, shape index: {}]
  %s6 = inlined_call_operand.hbm [shape: f32[3,32], index: 6, kind: input, shape index: {}]
  %s7 = inlined_call_operand.hbm [shape: f32[1,32], index: 7, kind: input, shape index: {}]
  %s8 = inlined_call_operand.hbm [shape: f32[1,32], index: 8, kind: input, shape index: {}]
  %s9 = inlined_call_operand.hbm [shape: bf16[32,32], index: 9, kind: input, shape index: {}]
  %s10 = inlined_call_operand.hbm [shape: f32[1,32], index: 10, kind: input, shape index: {}]
  %s11 = inlined_call_operand.hbm [shape: bf16[2,8,32], index: 11, kind: output, shape index: {}]
  %s12 = sld [smem:[#allocation0]]
  $region121: #{conformer_encoder.13} parent=0
    _
  %s14 = ssub.s32 1, %s12
  %s15 = scalar_select 0, %s14, %s12
  $region1: #{conformer_encoder.13} parent=0
    #allocation3 [shape = 'u8[4096]{0}', space=vmem, size = 0x1000, scoped, tag = 'input window, operand 0']
    #allocation4 [shape = 's32[2]{0}', space=sflag, size = 0x8, scoped, tag = 'scoped memory for conformer_encoder.13']
    #allocation5 [shape = 's32[2]{0}', space=sflag, size = 0x8, scoped, tag = 'scoped memory for conformer_encoder.13']
    #allocation6 [shape = 'u8[8192]{0}', space=vmem, size = 0x2000, scoped, tag = 'input window, operand 1']
    #allocation7 [shape = 's32[2]{0}', space=sflag, size = 0x8, scoped, tag = 'scoped memory for conformer_encoder.13']
    #allocation8 [shape = 'u8[512]{0}', space=vmem, size = 0x400, scoped, tag = 'input window, operand 2, single buffered']
    #allocation9 [shape = 'u8[512]{0}', space=vmem, size = 0x400, scoped, tag = 'input window, operand 3, single buffered']
    #allocation10 [shape = 's32[1]{0}', space=sflag, size = 0x4, scoped, tag = 'scoped memory for conformer_encoder.13']
    #allocation11 [shape = 'u8[8192]{0}', space=vmem, size = 0x2000, scoped, tag = 'input window, operand 4, single buffered']
    #allocation12 [shape = 'u8[512]{0}', space=vmem, size = 0x400, scoped, tag = 'input window, operand 5, single buffered']
    #allocation13 [shape = 's32[1]{0}', space=sflag, size = 0x4, scoped, tag = 'scoped memory for conformer_encoder.13']
    #allocation14 [shape = 'u8[2048]{0}', space=vmem, size = 0x800, scoped, tag = 'input window, operand 6, single buffered']
    #allocation15 [shape = 'u8[512]{0}', space=vmem, size = 0x400, scoped, tag = 'input window, operand 7, single buffered']
    #allocation16 [shape = 's32[1]{0}', space=sflag, size = 0x4, scoped, tag = 'scoped memory for conformer_encoder.13']
    #allocation17 [shape = 'u8[512]{0}', space=vmem, size = 0x400, scoped, tag = 'input window, operand 8, single buffered']
    #allocation18 [shape = 'u8[8192]{0}', space=vmem, size = 0x2000, scoped, tag = 'input window, operand 9, single buffered']
    #allocation19 [shape = 's32[1]{0}', space=sflag, size = 0x4, scoped, tag = 'scoped memory for conformer_encoder.13']
    #allocation20 [shape = 'u8[512]{0}', space=vmem, size = 0x400, scoped, tag = 'input window, operand 10, single buffered']
    #allocation21 [shape = 'u8[4096]{0}', space=vmem, size = 0x1000, scoped, tag = 'output window, operand 0']
    %16 = vsyncpa [#allocation4], 0
    %s17 = scalar_lea.sflag [#allocation4], 1
    %18 = vsyncpa %s17, 0
    %19 = vsyncpa [#allocation7], 0
    %s20 = scalar_lea.sflag [#allocation7], 1
    %21 = vsyncpa %s20, 0
    %22 = vsyncpa [#allocation10], 0
    %23 = vsyncpa [#allocation13], 0
    %24 = vsyncpa [#allocation16], 0
    %25 = vsyncpa [#allocation19], 0
    %26 = vsyncpa [#allocation5], 0
    %s27 = scalar_lea.sflag [#allocation5], 1
    %28 = vsyncpa %s27, 0
    loop: start=0, step=1, limit=4
    $region2: #{conformer_encoder.13} parent=1 // loop_pre_header
      _
    $region3: #{conformer_encoder.13} parent=1 // loop_header
      %s30 = sphi 0, %s34
      %p31 = scmp.ge.s32.totalorder %s30, 4
      %s40 = sphi 0, %s42
      %s43 = sphi 0, %s40
      %s44 = sphi 0, %s43
      %s60 = sphi 0, %s44
      %s66 = sphi 0, %s68
      %s69 = sphi 0, %s66
      %s70 = sphi 0, %s69
      %s86 = sphi 0, %s70
      %s90 = sphi 0, %s90
      %s92 = sphi 0, %s90
      %s93 = sphi 0, %s92
      %s107 = sphi 0, %s93
      %s111 = sphi 0, %s111
      %s113 = sphi 0, %s111
      %s114 = sphi 0, %s113
      %s128 = sphi 0, %s114
      %s132 = sphi 0, %s132
      %s134 = sphi 0, %s132
      %s135 = sphi 0, %s134
      %s149 = sphi 0, %s135
      %s153 = sphi 0, %s153
      %s155 = sphi 0, %s153
      %s156 = sphi 0, %s155
      %s170 = sphi 0, %s156
      %s174 = sphi 0, %s174
      %s176 = sphi 0, %s174
      %s177 = sphi 0, %s176
      %s191 = sphi 0, %s177
      %s195 = sphi 0, %s195
      %s197 = sphi 0, %s195
      %s198 = sphi 0, %s197
      %s212 = sphi 0, %s198
      %s216 = sphi 0, %s216
      %s218 = sphi 0, %s216
      %s219 = sphi 0, %s218
      %s233 = sphi 0, %s219
      %s237 = sphi 0, %s237
      %s239 = sphi 0, %s237
      %s240 = sphi 0, %s239
      %s254 = sphi 0, %s240
      %s258 = sphi 0, %s258
      %s260 = sphi 0, %s258
      %s261 = sphi 0, %s260
      %s275 = sphi 0, %s261
      %s281 = sphi 0, %s283
      %s284 = sphi 0, %s281
      %s285 = sphi 0, %s284
      %s301 = sphi 0, %s285
    $region4: #{conformer_encoder.13} parent=1 // loop_header_branch
      %33 = sbr.rel (%p31) target = $region8
    $region5: #{conformer_encoder.13} parent=1 // loop_body
      %s35 = ssub.s32 %s30, 1
      %s36 = ssub.s32 %s30, 2
      %s37 = sadd.s32 %s30, 1
      %s38 = ssub.s32 %s30, %s37
      %p39 = scmp.eq.s32.totalorder %s38, 0
      %s41 = sadd.s32 %s40, 1
      %s42 = scalar_select %p39, %s40, %s41
      %p45 = pneg %p39
      %p46 = scmp.eq.s32.totalorder %s30, 1
      %p47 = por %p45, %p46
      %p48 = scmp.ne.s32.totalorder %s40, %s43
      %p49 = scmp.eq.s32.totalorder %s30, 0
      %p50 = por %p48, %p49
      %p51 = scmp.ne.s32.totalorder %s40, %s43
      %p52 = scmp.eq.s32.totalorder %s35, 1
      %p53 = por %p51, %p52
      %p54 = scmp.ne.s32.totalorder %s43, %s44
      %p55 = scmp.eq.s32.totalorder %s35, 0
      %p56 = por %p54, %p55
      %p57 = scmp.ne.s32.totalorder %s43, %s44
      %p58 = scmp.eq.s32.totalorder %s36, 1
      %p59 = por %p57, %p58
      %p61 = scmp.ne.s32.totalorder %s44, %s60
      %p62 = scmp.eq.s32.totalorder %s36, 0
      %p63 = por %p61, %p62
      %s64 = ssub.s32 %s30, %s37
      %p65 = scmp.eq.s32.totalorder %s64, 0
      %s67 = sadd.s32 %s66, 1
      %s68 = scalar_select %p65, %s66, %s67
      %p71 = pneg %p65
      %p72 = scmp.eq.s32.totalorder %s30, 1
      %p73 = por %p71, %p72
      %p74 = scmp.ne.s32.totalorder %s66, %s69
      %p75 = scmp.eq.s32.totalorder %s30, 0
      %p76 = por %p74, %p75
      %p77 = scmp.ne.s32.totalorder %s66, %s69
      %p78 = scmp.eq.s32.totalorder %s35, 1
      %p79 = por %p77, %p78
      %p80 = scmp.ne.s32.totalorder %s69, %s70
      %p81 = scmp.eq.s32.totalorder %s35, 0
      %p82 = por %p80, %p81
      %p83 = scmp.ne.s32.totalorder %s69, %s70
      %p84 = scmp.eq.s32.totalorder %s36, 1
      %p85 = por %p83, %p84
      %p87 = scmp.ne.s32.totalorder %s70, %s86
      %p88 = scmp.eq.s32.totalorder %s36, 0
      %p89 = por %p87, %p88
      %s91 = sadd.s32 %s90, 1
      %p94 = scmp.eq.s32.totalorder %s30, 1
      %p95 = scmp.ne.s32.totalorder %s90, %s92
      %p96 = scmp.eq.s32.totalorder %s30, 0
      %p97 = por %p95, %p96
      %p98 = scmp.ne.s32.totalorder %s90, %s92
      %p99 = scmp.eq.s32.totalorder %s35, 1
      %p100 = por %p98, %p99
      %p101 = scmp.ne.s32.totalorder %s92, %s93
      %p102 = scmp.eq.s32.totalorder %s35, 0
      %p103 = por %p101, %p102
      %p104 = scmp.ne.s32.totalorder %s92, %s93
      %p105 = scmp.eq.s32.totalorder %s36, 1
      %p106 = por %p104, %p105
      %p108 = scmp.ne.s32.totalorder %s93, %s107
      %p109 = scmp.eq.s32.totalorder %s36, 0
      %p110 = por %p108, %p109
      %s112 = sadd.s32 %s111, 1
      %p115 = scmp.eq.s32.totalorder %s30, 1
      %p116 = scmp.ne.s32.totalorder %s111, %s113
      %p117 = scmp.eq.s32.totalorder %s30, 0
      %p118 = por %p116, %p117
      %p119 = scmp.ne.s32.totalorder %s111, %s113
      %p120 = scmp.eq.s32.totalorder %s35, 1
      %p121 = por %p119, %p120
      %p122 = scmp.ne.s32.totalorder %s113, %s114
      %p123 = scmp.eq.s32.totalorder %s35, 0
      %p124 = por %p122, %p123
      %p125 = scmp.ne.s32.totalorder %s113, %s114
      %p126 = scmp.eq.s32.totalorder %s36, 1
      %p127 = por %p125, %p126
      %p129 = scmp.ne.s32.totalorder %s114, %s128
      %p130 = scmp.eq.s32.totalorder %s36, 0
      %p131 = por %p129, %p130
      %s133 = sadd.s32 %s132, 1
      %p136 = scmp.eq.s32.totalorder %s30, 1
      %p137 = scmp.ne.s32.totalorder %s132, %s134
      %p138 = scmp.eq.s32.totalorder %s30, 0
      %p139 = por %p137, %p138
      %p140 = scmp.ne.s32.totalorder %s132, %s134
      %p141 = scmp.eq.s32.totalorder %s35, 1
      %p142 = por %p140, %p141
      %p143 = scmp.ne.s32.totalorder %s134, %s135
      %p144 = scmp.eq.s32.totalorder %s35, 0
      %p145 = por %p143, %p144
      %p146 = scmp.ne.s32.totalorder %s134, %s135
      %p147 = scmp.eq.s32.totalorder %s36, 1
      %p148 = por %p146, %p147
      %p150 = scmp.ne.s32.totalorder %s135, %s149
      %p151 = scmp.eq.s32.totalorder %s36, 0
      %p152 = por %p150, %p151
      %s154 = sadd.s32 %s153, 1
      %p157 = scmp.eq.s32.totalorder %s30, 1
      %p158 = scmp.ne.s32.totalorder %s153, %s155
      %p159 = scmp.eq.s32.totalorder %s30, 0
      %p160 = por %p158, %p159
      %p161 = scmp.ne.s32.totalorder %s153, %s155
      %p162 = scmp.eq.s32.totalorder %s35, 1
      %p163 = por %p161, %p162
      %p164 = scmp.ne.s32.totalorder %s155, %s156
      %p165 = scmp.eq.s32.totalorder %s35, 0
      %p166 = por %p164, %p165
      %p167 = scmp.ne.s32.totalorder %s155, %s156
      %p168 = scmp.eq.s32.totalorder %s36, 1
      %p169 = por %p167, %p168
      %p171 = scmp.ne.s32.totalorder %s156, %s170
      %p172 = scmp.eq.s32.totalorder %s36, 0
      %p173 = por %p171, %p172
      %s175 = sadd.s32 %s174, 1
      %p178 = scmp.eq.s32.totalorder %s30, 1
      %p179 = scmp.ne.s32.totalorder %s174, %s176
      %p180 = scmp.eq.s32.totalorder %s30, 0
      %p181 = por %p179, %p180
      %p182 = scmp.ne.s32.totalorder %s174, %s176
      %p183 = scmp.eq.s32.totalorder %s35, 1
      %p184 = por %p182, %p183
      %p185 = scmp.ne.s32.totalorder %s176, %s177
      %p186 = scmp.eq.s32.totalorder %s35, 0
      %p187 = por %p185, %p186
      %p188 = scmp.ne.s32.totalorder %s176, %s177
      %p189 = scmp.eq.s32.totalorder %s36, 1
      %p190 = por %p188, %p189
      %p192 = scmp.ne.s32.totalorder %s177, %s191
      %p193 = scmp.eq.s32.totalorder %s36, 0
      %p194 = por %p192, %p193
      %s196 = sadd.s32 %s195, 1
      %p199 = scmp.eq.s32.totalorder %s30, 1
      %p200 = scmp.ne.s32.totalorder %s195, %s197
      %p201 = scmp.eq.s32.totalorder %s30, 0
      %p202 = por %p200, %p201
      %p203 = scmp.ne.s32.totalorder %s195, %s197
      %p204 = scmp.eq.s32.totalorder %s35, 1
      %p205 = por %p203, %p204
      %p206 = scmp.ne.s32.totalorder %s197, %s198
      %p207 = scmp.eq.s32.totalorder %s35, 0
      %p208 = por %p206, %p207
      %p209 = scmp.ne.s32.totalorder %s197, %s198
      %p210 = scmp.eq.s32.totalorder %s36, 1
      %p211 = por %p209, %p210
      %p213 = scmp.ne.s32.totalorder %s198, %s212
      %p214 = scmp.eq.s32.totalorder %s36, 0
      %p215 = por %p213, %p214
      %s217 = sadd.s32 %s216, 1
      %p220 = scmp.eq.s32.totalorder %s30, 1
      %p221 = scmp.ne.s32.totalorder %s216, %s218
      %p222 = scmp.eq.s32.totalorder %s30, 0
      %p223 = por %p221, %p222
      %p224 = scmp.ne.s32.totalorder %s216, %s218
      %p225 = scmp.eq.s32.totalorder %s35, 1
      %p226 = por %p224, %p225
      %p227 = scmp.ne.s32.totalorder %s218, %s219
      %p228 = scmp.eq.s32.totalorder %s35, 0
      %p229 = por %p227, %p228
      %p230 = scmp.ne.s32.totalorder %s218, %s219
      %p231 = scmp.eq.s32.totalorder %s36, 1
      %p232 = por %p230, %p231
      %p234 = scmp.ne.s32.totalorder %s219, %s233
      %p235 = scmp.eq.s32.totalorder %s36, 0
      %p236 = por %p234, %p235
      %s238 = sadd.s32 %s237, 1
      %p241 = scmp.eq.s32.totalorder %s30, 1
      %p242 = scmp.ne.s32.totalorder %s237, %s239
      %p243 = scmp.eq.s32.totalorder %s30, 0
      %p244 = por %p242, %p243
      %p245 = scmp.ne.s32.totalorder %s237, %s239
      %p246 = scmp.eq.s32.totalorder %s35, 1
      %p247 = por %p245, %p246
      %p248 = scmp.ne.s32.totalorder %s239, %s240
      %p249 = scmp.eq.s32.totalorder %s35, 0
      %p250 = por %p248, %p249
      %p251 = scmp.ne.s32.totalorder %s239, %s240
      %p252 = scmp.eq.s32.totalorder %s36, 1
      %p253 = por %p251, %p252
      %p255 = scmp.ne.s32.totalorder %s240, %s254
      %p256 = scmp.eq.s32.totalorder %s36, 0
      %p257 = por %p255, %p256
      %s259 = sadd.s32 %s258, 1
      %p262 = scmp.eq.s32.totalorder %s30, 1
      %p263 = scmp.ne.s32.totalorder %s258, %s260
      %p264 = scmp.eq.s32.totalorder %s30, 0
      %p265 = por %p263, %p264
      %p266 = scmp.ne.s32.totalorder %s258, %s260
      %p267 = scmp.eq.s32.totalorder %s35, 1
      %p268 = por %p266, %p267
      %p269 = scmp.ne.s32.totalorder %s260, %s261
      %p270 = scmp.eq.s32.totalorder %s35, 0
      %p271 = por %p269, %p270
      %p272 = scmp.ne.s32.totalorder %s260, %s261
      %p273 = scmp.eq.s32.totalorder %s36, 1
      %p274 = por %p272, %p273
      %p276 = scmp.ne.s32.totalorder %s261, %s275
      %p277 = scmp.eq.s32.totalorder %s36, 0
      %p278 = por %p276, %p277
      %s279 = ssub.s32 %s30, %s37
      %p280 = scmp.eq.s32.totalorder %s279, 0
      %s282 = sadd.s32 %s281, 1
      %s283 = scalar_select %p280, %s281, %s282
      %p286 = pneg %p280
      %p287 = scmp.eq.s32.totalorder %s30, 1
      %p288 = por %p286, %p287
      %p289 = scmp.ne.s32.totalorder %s281, %s284
      %p290 = scmp.eq.s32.totalorder %s30, 0
      %p291 = por %p289, %p290
      %p292 = scmp.ne.s32.totalorder %s281, %s284
      %p293 = scmp.eq.s32.totalorder %s35, 1
      %p294 = por %p292, %p293
      %p295 = scmp.ne.s32.totalorder %s284, %s285
      %p296 = scmp.eq.s32.totalorder %s35, 0
      %p297 = por %p295, %p296
      %p298 = scmp.ne.s32.totalorder %s284, %s285
      %p299 = scmp.eq.s32.totalorder %s36, 1
      %p300 = por %p298, %p299
      %p302 = scmp.ne.s32.totalorder %s285, %s301
      %p303 = scmp.eq.s32.totalorder %s36, 0
      %p304 = por %p302, %p303
      %p305 = scmp.le.s32.totalorder 1, %s30
      %p306 = scmp.lt.s32.totalorder %s30, 3
      %p307 = pnand %p305, %p306
      %p308 = pneg %p307
      // Predicated region
      $region9: #{conformer_encoder.13} parent=5 // pred_check
        _
      $region10: #{conformer_encoder.13} parent=5 // pred_check_branch
        %310 = sbr.rel (%p307) target = $region12
      $region11: #{conformer_encoder.13} parent=5 // pred_region
        %s311 = ssub.s32 %s30, 1
        // Predicated region
        $region13: #{conformer_encoder.13} parent=11 // pred_check
          %p312 = pneg %p103
        $region14: #{conformer_encoder.13} parent=11 // pred_check_branch
          %314 = sbr.rel (%p312) target = $region16
        $region15: #{conformer_encoder.13} parent=11 // pred_region
          %s316 = ssub.s32 16, 16
          %317 = vsyncadd [#allocation7], %s316
          %s319 = sshll.u32 [#allocation8], 4
          %s320 = int_to_ptr.vmem [resolvable:$true] %s319
          %322 = dma.hbm_to_vmem [thread:$0]  %s2, 16, %s320, [#allocation7]
        $region16: #{conformer_encoder.13} parent=11 // pred_fallthru
          _
        // Predicated region
        $region17: #{conformer_encoder.13} parent=11 // pred_check
          %p323 = pneg %p124
        $region18: #{conformer_encoder.13} parent=11 // pred_check_branch
          %325 = sbr.rel (%p323) target = $region20
        $region19: #{conformer_encoder.13} parent=11 // pred_region
          %s327 = ssub.s32 16, 16
          %328 = vsyncadd [#allocation10], %s327
          %s330 = sshll.u32 [#allocation9], 4
          %s331 = int_to_ptr.vmem [resolvable:$true] %s330
          %333 = dma.hbm_to_vmem [thread:$0]  %s3, 16, %s331, [#allocation10]
        $region20: #{conformer_encoder.13} parent=11 // pred_fallthru
          _
        // Predicated region
        $region21: #{conformer_encoder.13} parent=11 // pred_check
          %p334 = pneg %p145
        $region22: #{conformer_encoder.13} parent=11 // pred_check_branch
          %336 = sbr.rel (%p334) target = $region24
        $region23: #{conformer_encoder.13} parent=11 // pred_region
          %s338 = ssub.s32 256, 256
          %339 = vsyncadd [#allocation10], %s338
          %s340 = sshll.u32 [#allocation11], 4
          %s341 = int_to_ptr.vmem [resolvable:$true] %s340
          %346 = dma.hbm_to_vmem [thread:$0]  %s4, 256, %s341, [#allocation10], 64, 64, 4
        $region24: #{conformer_encoder.13} parent=11 // pred_fallthru
          _
        // Predicated region
        $region25: #{conformer_encoder.13} parent=11 // pred_check
          %p347 = pneg %p166
        $region26: #{conformer_encoder.13} parent=11 // pred_check_branch
          %349 = sbr.rel (%p347) target = $region28
        $region27: #{conformer_encoder.13} parent=11 // pred_region
          %s351 = ssub.s32 16, 16
          %352 = vsyncadd [#allocation13], %s351
          %s354 = sshll.u32 [#allocation12], 4
          %s355 = int_to_ptr.vmem [resolvable:$true] %s354
          %357 = dma.hbm_to_vmem [thread:$0]  %s5, 16, %s355, [#allocation13]
        $region28: #{conformer_encoder.13} parent=11 // pred_fallthru
          _
        // Predicated region
        $region29: #{conformer_encoder.13} parent=11 // pred_check
          %p358 = pneg %p187
        $region30: #{conformer_encoder.13} parent=11 // pred_check_branch
          %360 = sbr.rel (%p358) target = $region32
        $region31: #{conformer_encoder.13} parent=11 // pred_region
          %s362 = ssub.s32 64, 64
          %363 = vsyncadd [#allocation13], %s362
          %s365 = sshll.u32 [#allocation14], 4
          %s366 = int_to_ptr.vmem [resolvable:$true] %s365
          %368 = dma.hbm_to_vmem [thread:$0]  %s6, 64, %s366, [#allocation13]
        $region32: #{conformer_encoder.13} parent=11 // pred_fallthru
          _
        // Predicated region
        $region33: #{conformer_encoder.13} parent=11 // pred_check
          %p369 = pneg %p208
        $region34: #{conformer_encoder.13} parent=11 // pred_check_branch
          %371 = sbr.rel (%p369) target = $region36
        $region35: #{conformer_encoder.13} parent=11 // pred_region
          %s373 = ssub.s32 16, 16
          %374 = vsyncadd [#allocation16], %s373
          %s376 = sshll.u32 [#allocation15], 4
          %s377 = int_to_ptr.vmem [resolvable:$true] %s376
          %379 = dma.hbm_to_vmem [thread:$0]  %s7, 16, %s377, [#allocation16]
        $region36: #{conformer_encoder.13} parent=11 // pred_fallthru
          _
        // Predicated region
        $region37: #{conformer_encoder.13} parent=11 // pred_check
          %p380 = pneg %p229
        $region38: #{conformer_encoder.13} parent=11 // pred_check_branch
          %382 = sbr.rel (%p380) target = $region40
        $region39: #{conformer_encoder.13} parent=11 // pred_region
          %s384 = ssub.s32 16, 16
          %385 = vsyncadd [#allocation16], %s384
          %s387 = sshll.u32 [#allocation17], 4
          %s388 = int_to_ptr.vmem [resolvable:$true] %s387
          %390 = dma.hbm_to_vmem [thread:$0]  %s8, 16, %s388, [#allocation16]
        $region40: #{conformer_encoder.13} parent=11 // pred_fallthru
          _
        // Predicated region
        $region41: #{conformer_encoder.13} parent=11 // pred_check
          %p391 = pneg %p250
        $region42: #{conformer_encoder.13} parent=11 // pred_check_branch
          %393 = sbr.rel (%p391) target = $region44
        $region43: #{conformer_encoder.13} parent=11 // pred_region
          %s395 = ssub.s32 256, 256
          %396 = vsyncadd [#allocation19], %s395
          %s397 = sshll.u32 [#allocation18], 4
          %s398 = int_to_ptr.vmem [resolvable:$true] %s397
          %403 = dma.hbm_to_vmem [thread:$0]  %s9, 256, %s398, [#allocation19], 64, 64, 4
        $region44: #{conformer_encoder.13} parent=11 // pred_fallthru
          _
        // Predicated region
        $region45: #{conformer_encoder.13} parent=11 // pred_check
          %p404 = pneg %p271
        $region46: #{conformer_encoder.13} parent=11 // pred_check_branch
          %406 = sbr.rel (%p404) target = $region48
        $region47: #{conformer_encoder.13} parent=11 // pred_region
          %s408 = ssub.s32 16, 16
          %409 = vsyncadd [#allocation19], %s408
          %s411 = sshll.u32 [#allocation20], 4
          %s412 = int_to_ptr.vmem [resolvable:$true] %s411
          %414 = dma.hbm_to_vmem [thread:$0]  %s10, 16, %s412, [#allocation19]
        $region48: #{conformer_encoder.13} parent=11 // pred_fallthru
          _
      $region12: #{conformer_encoder.13} parent=5 // pred_fallthru
        _
      %p415 = scmp.lt.s32.totalorder %s30, 2
      // Predicated region
      $region49: #{conformer_encoder.13} parent=5 // pred_check
        %p416 = pneg %p415
      $region50: #{conformer_encoder.13} parent=5 // pred_check_branch
        %418 = sbr.rel (%p416) target = $region52
      $region51: #{conformer_encoder.13} parent=5 // pred_region
        // Predicated region
        $region53: #{conformer_encoder.13} parent=51 // pred_check
          %p419 = pneg %p50
        $region54: #{conformer_encoder.13} parent=51 // pred_check_branch
          %421 = sbr.rel (%p419) target = $region56
        $region55: #{conformer_encoder.13} parent=51 // pred_region
          %s422 = sand.u32 %s40, 1
          %s423 = scalar_lea.sflag [#allocation4], %s422
          %s424 = sand.u32 %s40, 1
          %s425 = smul.addr %s424, 4
          %s426 = scalar_lea.vmem [#allocation3], %s425
          %s428 = ssub.s32 64, 64
          %429 = vsyncadd %s423, %s428
          %s430 = smul.addr %s30, 64
          %s431 = scalar_lea.hbm %s0, %s430
          %s433 = sshll.u32 %s426, 4
          %s434 = int_to_ptr.vmem [resolvable:$true] %s433
          %436 = dma.hbm_to_vmem [thread:$0]  %s431, 64, %s434, %s423
        $region56: #{conformer_encoder.13} parent=51 // pred_fallthru
          _
        // Predicated region
        $region57: #{conformer_encoder.13} parent=51 // pred_check
          %p437 = pneg %p76
        $region58: #{conformer_encoder.13} parent=51 // pred_check_branch
          %439 = sbr.rel (%p437) target = $region60
        $region59: #{conformer_encoder.13} parent=51 // pred_region
          %s440 = sand.u32 %s30, 1
          %s441 = scalar_lea.sflag [#allocation7], %s440
          %s442 = sand.u32 %s66, 1
          %s443 = smul.addr %s442, 8
          %s444 = scalar_lea.vmem [#allocation6], %s443
          %s446 = ssub.s32 128, 128
          %447 = vsyncadd %s441, %s446
          %s448 = smul.addr %s30, 128
          %s449 = scalar_lea.hbm %s1, %s448
          %s451 = sshll.u32 %s444, 4
          %s452 = int_to_ptr.vmem [resolvable:$true] %s451
          %454 = dma.hbm_to_vmem [thread:$0]  %s449, 128, %s452, %s441
        $region60: #{conformer_encoder.13} parent=51 // pred_fallthru
          _
      $region52: #{conformer_encoder.13} parent=5 // pred_fallthru
        _
      %p455 = scmp.le.s32.totalorder 1, %s30
      %p456 = scmp.lt.s32.totalorder %s30, 3
      %p457 = pnand %p455, %p456
      %p458 = pneg %p457
      // Predicated region
      $region61: #{conformer_encoder.13} parent=5 // pred_check
        _
      $region62: #{conformer_encoder.13} parent=5 // pred_check_branch
        %460 = sbr.rel (%p457) target = $region64
      $region63: #{conformer_encoder.13} parent=5 // pred_region
        %s461 = ssub.s32 %s30, 1
        %s462 = sand.u32 %s43, 1
        %s463 = scalar_lea.sflag [#allocation4], %s462
        %s464 = sand.u32 %s43, 1
        %s465 = smul.addr %s464, 4
        %s466 = scalar_lea.vmem [#allocation3], %s465
        // Predicated region
        $region65: #{conformer_encoder.13} parent=63 // pred_check
          %p467 = pneg %p56
        $region66: #{conformer_encoder.13} parent=63 // pred_check_branch
          %469 = sbr.rel (%p467) target = $region68
        $region67: #{conformer_encoder.13} parent=63 // pred_region
          %470 = dma.done %s463, 64
        $region68: #{conformer_encoder.13} parent=63 // pred_fallthru
          _
        %s471 = sand.u32 %s35, 1
        %s472 = scalar_lea.sflag [#allocation7], %s471
        %s473 = sand.u32 %s69, 1
        %s474 = smul.addr %s473, 8
        %s475 = scalar_lea.vmem [#allocation6], %s474
        // Predicated region
        $region69: #{conformer_encoder.13} parent=63 // pred_check
          %p476 = pneg %p82
        $region70: #{conformer_encoder.13} parent=63 // pred_check_branch
          %478 = sbr.rel (%p476) target = $region72
        $region71: #{conformer_encoder.13} parent=63 // pred_region
          %479 = dma.done %s472, 128
        $region72: #{conformer_encoder.13} parent=63 // pred_fallthru
          _
        // Predicated region
        $region73: #{conformer_encoder.13} parent=63 // pred_check
          %p480 = pneg %p103
        $region74: #{conformer_encoder.13} parent=63 // pred_check_branch
          %482 = sbr.rel (%p480) target = $region76
        $region75: #{conformer_encoder.13} parent=63 // pred_region
          %483 = dma.done [#allocation7], 16
        $region76: #{conformer_encoder.13} parent=63 // pred_fallthru
          _
        // Predicated region
        $region77: #{conformer_encoder.13} parent=63 // pred_check
          %p484 = pneg %p124
        $region78: #{conformer_encoder.13} parent=63 // pred_check_branch
          %486 = sbr.rel (%p484) target = $region80
        $region79: #{conformer_encoder.13} parent=63 // pred_region
          %487 = dma.done [#allocation10], 16
        $region80: #{conformer_encoder.13} parent=63 // pred_fallthru
          _
        // Predicated region
        $region81: #{conformer_encoder.13} parent=63 // pred_check
          %p488 = pneg %p145
        $region82: #{conformer_encoder.13} parent=63 // pred_check_branch
          %490 = sbr.rel (%p488) target = $region84
        $region83: #{conformer_encoder.13} parent=63 // pred_region
          %491 = dma.done [#allocation10], 256
        $region84: #{conformer_encoder.13} parent=63 // pred_fallthru
          _
        // Predicated region
        $region85: #{conformer_encoder.13} parent=63 // pred_check
          %p492 = pneg %p166
        $region86: #{conformer_encoder.13} parent=63 // pred_check_branch
          %494 = sbr.rel (%p492) target = $region88
        $region87: #{conformer_encoder.13} parent=63 // pred_region
          %495 = dma.done [#allocation13], 16
        $region88: #{conformer_encoder.13} parent=63 // pred_fallthru
          _
        // Predicated region
        $region89: #{conformer_encoder.13} parent=63 // pred_check
          %p496 = pneg %p187
        $region90: #{conformer_encoder.13} parent=63 // pred_check_branch
          %498 = sbr.rel (%p496) target = $region92
        $region91: #{conformer_encoder.13} parent=63 // pred_region
          %499 = dma.done [#allocation13], 64
        $region92: #{conformer_encoder.13} parent=63 // pred_fallthru
          _
        // Predicated region
        $region93: #{conformer_encoder.13} parent=63 // pred_check
          %p500 = pneg %p208
        $region94: #{conformer_encoder.13} parent=63 // pred_check_branch
          %502 = sbr.rel (%p500) target = $region96
        $region95: #{conformer_encoder.13} parent=63 // pred_region
          %503 = dma.done [#allocation16], 16
        $region96: #{conformer_encoder.13} parent=63 // pred_fallthru
          _
        // Predicated region
        $region97: #{conformer_encoder.13} parent=63 // pred_check
          %p504 = pneg %p229
        $region98: #{conformer_encoder.13} parent=63 // pred_check_branch
          %506 = sbr.rel (%p504) target = $region100
        $region99: #{conformer_encoder.13} parent=63 // pred_region
          %507 = dma.done [#allocation16], 16
        $region100: #{conformer_encoder.13} parent=63 // pred_fallthru
          _
        // Predicated region
        $region101: #{conformer_encoder.13} parent=63 // pred_check
          %p508 = pneg %p250
        $region102: #{conformer_encoder.13} parent=63 // pred_check_branch
          %510 = sbr.rel (%p508) target = $region104
        $region103: #{conformer_encoder.13} parent=63 // pred_region
          %511 = dma.done [#allocation19], 256
        $region104: #{conformer_encoder.13} parent=63 // pred_fallthru
          _
        // Predicated region
        $region105: #{conformer_encoder.13} parent=63 // pred_check
          %p512 = pneg %p271
        $region106: #{conformer_encoder.13} parent=63 // pred_check_branch
          %514 = sbr.rel (%p512) target = $region108
        $region107: #{conformer_encoder.13} parent=63 // pred_region
          %515 = dma.done [#allocation19], 16
        $region108: #{conformer_encoder.13} parent=63 // pred_fallthru
          _
        %s516 = sand.u32 %s43, 1
        %s517 = scalar_lea.sflag [#allocation4], %s516
        %s518 = sand.u32 %s43, 1
        %s519 = smul.addr %s518, 4
        %s520 = scalar_lea.vmem [#allocation3], %s519
        %p521 = pneg %p56
        %p522 = pneg %p53
        %s523 = sand.u32 %s35, 1
        %s524 = scalar_lea.sflag [#allocation7], %s523
        %s525 = sand.u32 %s69, 1
        %s526 = smul.addr %s525, 8
        %s527 = scalar_lea.vmem [#allocation6], %s526
        %p528 = pneg %p82
        %p529 = pneg %p79
        %p530 = pneg %p103
        %p531 = pneg %p100
        %p532 = pneg %p124
        %p533 = pneg %p121
        %p534 = pneg %p145
        %p535 = pneg %p142
        %p536 = pneg %p166
        %p537 = pneg %p163
        %p538 = pneg %p187
        %p539 = pneg %p184
        %p540 = pneg %p208
        %p541 = pneg %p205
        %p542 = pneg %p229
        %p543 = pneg %p226
        %p544 = pneg %p250
        %p545 = pneg %p247
        %p546 = pneg %p271
        %p547 = pneg %p268
        %p548 = pneg %p297
        %p549 = pneg %p294
        %s550 = sand.u32 %s284, 1
        %s551 = scalar_lea.sflag [#allocation5], %s550
        %s552 = sand.u32 %s284, 1
        %s553 = smul.addr %s552, 4
        %s554 = scalar_lea.vmem [#allocation21], %s553
        %v556 = vld [vmem:[%s466] sm:$0xf]
        %v557 = vunpack.c.l.bf16 %v556
        %v558 = vld [vmem:[#allocation8] sm:$0x1]
        %v559 = vld [vmem:[#allocation9] sm:$0x1]
        %vm560 = vcmask 261120
        %v561 = vsel %vm560, %v557, 0.0
        %562 = vadd.xlane.f32.xlu0 %v561
        %v563 = vpop.xlane.xlu0 %562
        %v564 = vrcp.pop 32.0
        %v565 = vmul.f32 %v563, %v564
        %v566 = vsub.f32 %v557, %v565
        %v567 = vmul.f32 %v566, %v566
        %v568 = vsel %vm560, %v567, 0.0
        %569 = vadd.xlane.f32.xlu0 %v568
        %v570 = vpop.xlane.xlu0 %569
        %v571 = vmul.f32 %v570, %v564
        %v572 = vadd.f32 %v571, 1e-05
        %v573 = vrsqrt.pop %v572
        %v574 = vmul.f32 %v566, %v573
        %v576 = vlaneseq
        %v577 = vshrl.u32 %v576, 7
        %v578 = vsub.s32 0, %v577
        %v579 = vrot.slane %v558, %v578
        %v581 = vmul.f32 %v574, %v579
        %v583 = vlaneseq
        %v584 = vshrl.u32 %v583, 7
        %v585 = vsub.s32 0, %v584
        %v586 = vrot.slane %v559, %v585
        %v588 = vadd.f32 %v581, %v586
        %v589 = vpack.c.bf16 %v588, %v588
        %v590 = vld [vmem:[#allocation11] sm:$0xf]
        %v591 = vld [vmem:[#allocation11 + $0x4] sm:$0xf]
        %v592 = vld [vmem:[#allocation11 + $0x8] sm:$0xf]
        %v593 = vld [vmem:[#allocation11 + $0xc] sm:$0xf]
        %v594 = vld [vmem:[#allocation12] sm:$0x1]
        %v596 = vlaneseq
        %v597 = vshrl.u32 %v596, 7
        %v598 = vsub.s32 0, %v597
        %v599 = vrot.slane %v594, %v598
        %v605 = vunpack.c.l.b16 %v590
        %v606 = vunpack.c.l.b16 %v591
        %v607 = vunpack.c.l.b16 %v592
        %v608 = vunpack.c.l.b16 %v593
        %v609 = vpack.c.b16 %v606, %v605
        %v610 = vpack.c.b16 %v608, %v607
        %v614 = vsel %vm560, %v589, 0
        %616 = vmatprep.subr.bf16.mxu0 0
        %617 = vmatpush1.bf16.msra.mxu0 %v609
        %618 = vmatprep.subr.bf16.mxu0 0
        %619 = vmatpush1.bf16.msra.mxu0 %v610
        %620 = vmatprep.subr.bf16.mxu0 0
        %621 = vmatpush1.bf16.msra.mxu0 0
        %622 = vmatprep.subr.bf16.mxu0 0
        %623 = vmatpush1.bf16.msra.mxu0 0
        %624 = vmatprep.subr.bf16.mxu0 0
        %625 = vmatpush1.bf16.msra.mxu0 0
        %626 = vmatprep.subr.bf16.mxu0 0
        %627 = vmatpush1.bf16.msra.mxu0 0
        %628 = vmatprep.subr.bf16.mxu0 0
        %629 = vmatpush1.bf16.msra.mxu0 0
        %630 = vmatprep.subr.bf16.mxu0 0
        %631 = vmatpush1.bf16.msra.mxu0 0
        %632 = vmatprep.subr.bf16.mxu0 0
        %633 = vmatpush1.bf16.msra.mxu0 0
        %634 = vmatprep.subr.bf16.mxu0 0
        %635 = vmatpush1.bf16.msra.mxu0 0
        %636 = vmatprep.subr.bf16.mxu0 0
        %637 = vmatpush1.bf16.msra.mxu0 0
        %638 = vmatprep.subr.bf16.mxu0 0
        %639 = vmatpush1.bf16.msra.mxu0 0
        %640 = vmatprep.subr.bf16.mxu0 0
        %641 = vmatpush1.bf16.msra.mxu0 0
        %642 = vmatprep.subr.bf16.mxu0 0
        %643 = vmatpush1.bf16.msra.mxu0 0
        %644 = vmatprep.subr.bf16.mxu0 0
        %645 = vmatpush1.bf16.msra.mxu0 0
        %646 = vmatprep.subr.bf16.mxu0 0
        %647 = vmatpush1.bf16.msra.mxu0 0
        %648 = vmatprep.mubr.bf16.mxu0 0
        %649 = vmatmul.mubr.bf16.gmra.mrb[0].mxu0 %v614
        %v650 = vpop.f32.mrb[0].mxu0
        %v651 = vadd.f32 %v599, %v650
        %v652 = vpop.f32.mrb[0].mxu0
        %v653 = vpop.f32.mrb[0].mxu0
        %v654 = vpop.f32.mrb[0].mxu0
        %655 = vdwg.mxu0
        %v656 = vxor.u32 %v651, 2147483648
        %v657 = vmul.f32 %v656, 1.442695
        %v658 = vpow.pop %v657
        %v659 = vadd.f32 %v658, 1.0
        %v660 = vrcp.pop %v659
        %v661 = vmul.f32 1.0, %v660
        %663 = vrot.lane.b32.xlu0 %v661, 96
        %v664 = vpop.permute.xlu0 %663
        %v666 = vmul.f32 %v651, %v664
        %v667 = vld [vmem:[%s475] sm:$0xff]
        %669 = vset.pattern.permute.xlu0 0
        %670 = vperm.xlu0 %669, %v667
        %v671 = vpop.permute.xlu0 %670
        %v673 = vmul.f32 %v666, %v671
        %vm674 = vcmask 253952
        %675 = vst.msk [vmem:[#allocation2] sm:$0x1] %vm674, 0.0
        %676 = vst.msk [vmem:[#allocation2 + $0x9] sm:$0x1] %vm674, 0.0
        %677 = vst.msk [vmem:[#allocation2 + $0x1] sm:$0xff] %vm560, %v673
        %v678 = vld [vmem:[#allocation2] sm:$0xff]
        %v679 = vld [vmem:[#allocation14] sm:$0x1]
        %v680 = vlaneseq
        %v681 = vshrl.u32 %v680, 7
        %v682 = vsub.s32 0, %v681
        %v683 = vrot.slane %v679, %v682
        %v684 = vmul.f32 %v678, %v683
        %v685 = vadd.f32 %v684, 0.0
        %v686 = vld [vmem:[#allocation2 + $0x1] sm:$0xff]
        %v687 = vld [vmem:[#allocation14 + $0x1] sm:$0x1]
        %v688 = vlaneseq
        %v689 = vshrl.u32 %v688, 7
        %v690 = vsub.s32 0, %v689
        %v691 = vrot.slane %v687, %v690
        %v692 = vmul.f32 %v686, %v691
        %v693 = vadd.f32 %v685, %v692
        %v694 = vld [vmem:[#allocation2 + $0x2] sm:$0xff]
        %v695 = vld [vmem:[#allocation14 + $0x2] sm:$0x1]
        %v696 = vlaneseq
        %v697 = vshrl.u32 %v696, 7
        %v698 = vsub.s32 0, %v697
        %v699 = vrot.slane %v695, %v698
        %v700 = vmul.f32 %v694, %v699
        %v701 = vadd.f32 %v693, %v700
        %v702 = vld [vmem:[#allocation15] sm:$0x1]
        %v704 = vlaneseq
        %v705 = vshrl.u32 %v704, 7
        %v706 = vsub.s32 0, %v705
        %v707 = vrot.slane %v702, %v706
        %v709 = vmul.f32 %v701, %v707
        %v710 = vld [vmem:[#allocation17] sm:$0x1]
        %v712 = vlaneseq
        %v713 = vshrl.u32 %v712, 7
        %v714 = vsub.s32 0, %v713
        %v715 = vrot.slane %v710, %v714
        %v717 = vadd.f32 %v709, %v715
        %v718 = vxor.u32 %v717, 2147483648
        %v719 = vmul.f32 %v718, 1.442695
        %v720 = vpow.pop %v719
        %v721 = vadd.f32 %v720, 1.0
        %v722 = vrcp.pop %v721
        %v723 = vmul.f32 1.0, %v722
        %v724 = vmul.f32 %v717, %v723
        %v725 = vpack.c.bf16 %v724, %v724
        %v726 = vld [vmem:[#allocation18] sm:$0xf]
        %v727 = vld [vmem:[#allocation18 + $0x4] sm:$0xf]
        %v728 = vld [vmem:[#allocation18 + $0x8] sm:$0xf]
        %v729 = vld [vmem:[#allocation18 + $0xc] sm:$0xf]
        %v730 = vld [vmem:[#allocation20] sm:$0x1]
        %v732 = vlaneseq
        %v733 = vshrl.u32 %v732, 7
        %v734 = vsub.s32 0, %v733
        %v735 = vrot.slane %v730, %v734
        %v741 = vunpack.c.l.b16 %v726
        %v742 = vunpack.c.l.b16 %v727
        %v743 = vunpack.c.l.b16 %v728
        %v744 = vunpack.c.l.b16 %v729
        %v745 = vpack.c.b16 %v742, %v741
        %v746 = vpack.c.b16 %v744, %v743
        %v750 = vsel %vm560, %v725, 0
        %752 = vmatprep.subr.bf16.mxu0 0
        %753 = vmatpush1.bf16.msra.mxu0 %v745
        %754 = vmatprep.subr.bf16.mxu0 0
        %755 = vmatpush1.bf16.msra.mxu0 %v746
        %756 = vmatprep.subr.bf16.mxu0 0
        %757 = vmatpush1.bf16.msra.mxu0 0
        %758 = vmatprep.subr.bf16.mxu0 0
        %759 = vmatpush1.bf16.msra.mxu0 0
        %760 = vmatprep.subr.bf16.mxu0 0
        %761 = vmatpush1.bf16.msra.mxu0 0
        %762 = vmatprep.subr.bf16.mxu0 0
        %763 = vmatpush1.bf16.msra.mxu0 0
        %764 = vmatprep.subr.bf16.mxu0 0
        %765 = vmatpush1.bf16.msra.mxu0 0
        %766 = vmatprep.subr.bf16.mxu0 0
        %767 = vmatpush1.bf16.msra.mxu0 0
        %768 = vmatprep.subr.bf16.mxu0 0
        %769 = vmatpush1.bf16.msra.mxu0 0
        %770 = vmatprep.subr.bf16.mxu0 0
        %771 = vmatpush1.bf16.msra.mxu0 0
        %772 = vmatprep.subr.bf16.mxu0 0
        %773 = vmatpush1.bf16.msra.mxu0 0
        %774 = vmatprep.subr.bf16.mxu0 0
        %775 = vmatpush1.bf16.msra.mxu0 0
        %776 = vmatprep.subr.bf16.mxu0 0
        %777 = vmatpush1.bf16.msra.mxu0 0
        %778 = vmatprep.subr.bf16.mxu0 0
        %779 = vmatpush1.bf16.msra.mxu0 0
        %780 = vmatprep.subr.bf16.mxu0 0
        %781 = vmatpush1.bf16.msra.mxu0 0
        %782 = vmatprep.subr.bf16.mxu0 0
        %783 = vmatpush1.bf16.msra.mxu0 0
        %784 = vmatprep.mubr.bf16.mxu0 0
        %785 = vmatmul.mubr.bf16.gmra.mrb[0].mxu0 %v750
        %v786 = vpop.f32.mrb[0].mxu0
        %v787 = vadd.f32 %v735, %v786
        %v788 = vpop.f32.mrb[0].mxu0
        %v789 = vpop.f32.mrb[0].mxu0
        %v790 = vpop.f32.mrb[0].mxu0
        %791 = vdwg.mxu0
        %v792 = vadd.f32 %v557, %v787
        %v793 = vpack.c.bf16 %v792, %v792
        %vm794 = vcmask 257024
        %795 = vst.msk [vmem:[%s554] sm:$0xf] %vm794, %v793
        %s796 = sand.u32 %s284, 1
        %s797 = scalar_lea.sflag [#allocation5], %s796
        %s798 = sand.u32 %s284, 1
        %s799 = smul.addr %s798, 4
        %s800 = scalar_lea.vmem [#allocation21], %s799
        // Predicated region
        $region109: #{conformer_encoder.13} parent=63 // pred_check
          %p801 = pneg %p294
        $region110: #{conformer_encoder.13} parent=63 // pred_check_branch
          %803 = sbr.rel (%p801) target = $region112
        $region111: #{conformer_encoder.13} parent=63 // pred_region
          %s805 = ssub.s32 64, 64
          %806 = vsyncadd %s797, %s805
          %s807 = smul.addr %s35, 64
          %s808 = scalar_lea.hbm %s11, %s807
          %s810 = sshll.u32 %s800, 4
          %s811 = int_to_ptr.vmem [resolvable:$true] %s810
          %813 = dma.vmem_to_hbm [thread:$0]  %s811, 64, %s808, %s797
        $region112: #{conformer_encoder.13} parent=63 // pred_fallthru
          _
      $region64: #{conformer_encoder.13} parent=5 // pred_fallthru
        _
      %p814 = scmp.le.s32.totalorder 2, %s30
      // Predicated region
      $region113: #{conformer_encoder.13} parent=5 // pred_check
        %p815 = pneg %p814
      $region114: #{conformer_encoder.13} parent=5 // pred_check_branch
        %817 = sbr.rel (%p815) target = $region116
      $region115: #{conformer_encoder.13} parent=5 // pred_region
        %s818 = ssub.s32 %s30, 2
        // Predicated region
        $region117: #{conformer_encoder.13} parent=115 // pred_check
          %p819 = pneg %p300
        $region118: #{conformer_encoder.13} parent=115 // pred_check_branch
          %821 = sbr.rel (%p819) target = $region120
        $region119: #{conformer_encoder.13} parent=115 // pred_region
          %s822 = sand.u32 %s285, 1
          %s823 = scalar_lea.sflag [#allocation5], %s822
          %s824 = sand.u32 %s285, 1
          %s825 = smul.addr %s824, 4
          %s826 = scalar_lea.vmem [#allocation21], %s825
          %827 = dma.done %s823, 64
        $region120: #{conformer_encoder.13} parent=115 // pred_fallthru
          _
      $region116: #{conformer_encoder.13} parent=5 // pred_fallthru
        _
    $region6: #{conformer_encoder.13} parent=1 // loop_footer
      %s34 = sadd.s32 1, %s30
    $region7: #{conformer_encoder.13} parent=1 // loop_footer_branch
      %29 = sbr.rel target = $region3
    $region8: #{conformer_encoder.13} parent=1 // loop_exit
      _
    %828 = vsyncpa [#allocation4], 1
    %s829 = scalar_lea.sflag [#allocation4], 1
    %830 = vsyncpa %s829, 1
    %831 = vsyncpa [#allocation7], 1
    %s832 = scalar_lea.sflag [#allocation7], 1
    %833 = vsyncpa %s832, 1
    %834 = vsyncpa [#allocation10], 1
    %835 = vsyncpa [#allocation13], 1
    %836 = vsyncpa [#allocation16], 1
    %837 = vsyncpa [#allocation19], 1
    %838 = vsyncpa [#allocation5], 1
    %s839 = scalar_lea.sflag [#allocation5], 1
    %840 = vsyncpa %s839, 1

// kernel: conformer_encoder.15
$region0: #{conformer_encoder.15}
  #allocation0 [shape = 'u32[]', space=smem, size = 0x4, offset = 0x4, fixed_abs, tag = 'smem constant byte address 0x4 - core index']
  #allocation1 [shape = 'u32[144,128]{1,0:T(1,128)}', space=vmem, size = 0x12000, scoped, tag = 'internal scratch']
  %s0 = inlined_call_operand.hbm [shape: bf16[16,32], index: 0, kind: input, shape index: {}]
  %s1 = inlined_call_operand.hbm [shape: f32[1,32], index: 1, kind: input, shape index: {}]
  %s2 = inlined_call_operand.hbm [shape: f32[1,32], index: 2, kind: input, shape index: {}]
  %s3 = inlined_call_operand.hbm [shape: bf16[32,128], index: 3, kind: input, shape index: {}]
  %s4 = inlined_call_operand.hbm [shape: f32[1,128], index: 4, kind: input, shape index: {}]
  %s5 = inlined_call_operand.hbm [shape: bf16[128,32], index: 5, kind: input, shape index: {}]
  %s6 = inlined_call_operand.hbm [shape: f32[1,32], index: 6, kind: input, shape index: {}]
  %s7 = inlined_call_operand.hbm [shape: bf16[16,32], index: 7, kind: output, shape index: {}]
  %s8 = sld [smem:[#allocation0]]
  $region66: #{conformer_encoder.15} parent=0
    _
  %s10 = ssub.s32 1, %s8
  %s11 = scalar_select 0, %s10, %s8
  $region1: #{conformer_encoder.15} parent=0
    #allocation2 [shape = 'u8[4096]{0}', space=vmem, size = 0x1000, scoped, tag = 'input window, operand 0, single buffered']
    #allocation3 [shape = 's32[1]{0}', space=sflag, size = 0x4, scoped, tag = 'scoped memory for conformer_encoder.15']
    #allocation4 [shape = 's32[1]{0}', space=sflag, size = 0x4, scoped, tag = 'scoped memory for conformer_encoder.15']
    #allocation5 [shape = 'u8[512]{0}', space=vmem, size = 0x400, scoped, tag = 'input window, operand 1, single buffered']
    #allocation6 [shape = 's32[1]{0}', space=sflag, size = 0x4, scoped, tag = 'scoped memory for conformer_encoder.15']
    #allocation7 [shape = 'u8[512]{0}', space=vmem, size = 0x400, scoped, tag = 'input window, operand 2, single buffered']
    #allocation8 [shape = 'u8[8192]{0}', space=vmem, size = 0x2000, scoped, tag = 'input window, operand 3, single buffered']
    #allocation9 [shape = 's32[1]{0}', space=sflag, size = 0x4, scoped, tag = 'scoped memory for conformer_encoder.15']
    #allocation10 [shape = 'u8[512]{0}', space=vmem, size = 0x400, scoped, tag = 'input window, operand 4, single buffered']
    #allocation11 [shape = 'u8[32768]{0}', space=vmem, size = 0x8000, scoped, tag = 'input window, operand 5, single buffered']
    #allocation12 [shape = 's32[1]{0}', space=sflag, size = 0x4, scoped, tag = 'scoped memory for conformer_encoder.15']
    #allocation13 [shape = 'u8[512]{0}', space=vmem, size = 0x400, scoped, tag = 'input window, operand 6, single buffered']
    #allocation14 [shape = 'u8[4096]{0}', space=vmem, size = 0x1000, scoped, tag = 'output window, operand 0, single buffered']
    %12 = vsyncpa [#allocation3], 0
    %13 = vsyncpa [#allocation6], 0
    %14 = vsyncpa [#allocation9], 0
    %15 = vsyncpa [#allocation12], 0
    %16 = vsyncpa [#allocation4], 0
    // Predicated region
    $region2: #{conformer_encoder.15} parent=1 // pred_check
      _
    $region3: #{conformer_encoder.15} parent=1 // pred_check_branch
      %18 = sbr.rel (0) target = $region5
    $region4: #{conformer_encoder.15} parent=1 // pred_region
      %s20 = ssub.s32 128, 128
      %21 = vsyncadd [#allocation3], %s20
      %s22 = sshll.u32 [#allocation2], 4
      %s23 = int_to_ptr.vmem [resolvable:$true] %s22
      %28 = dma.hbm_to_vmem [thread:$0]  %s0, 128, %s23, [#allocation3], 64, 64, 4
    $region5: #{conformer_encoder.15} parent=1 // pred_fallthru
      _
    // Predicated region
    $region6: #{conformer_encoder.15} parent=1 // pred_check
      _
    $region7: #{conformer_encoder.15} parent=1 // pred_check_branch
      %30 = sbr.rel (0) target = $region9
    $region8: #{conformer_encoder.15} parent=1 // pred_region
      %s32 = ssub.s32 16, 16
      %33 = vsyncadd [#allocation6], %s32
      %s35 = sshll.u32 [#allocation5], 4
      %s36 = int_to_ptr.vmem [resolvable:$true] %s35
      %38 = dma.hbm_to_vmem [thread:$0]  %s1, 16, %s36, [#allocation6]
    $region9: #{conformer_encoder.15} parent=1 // pred_fallthru
      _
    // Predicated region
    $region10: #{conformer_encoder.15} parent=1 // pred_check
      _
    $region11: #{conformer_encoder.15} parent=1 // pred_check_branch
      %40 = sbr.rel (0) target = $region13
    $region12: #{conformer_encoder.15} parent=1 // pred_region
      %s42 = ssub.s32 16, 16
      %43 = vsyncadd [#allocation6], %s42
      %s45 = sshll.u32 [#allocation7], 4
      %s46 = int_to_ptr.vmem [resolvable:$true] %s45
      %48 = dma.hbm_to_vmem [thread:$0]  %s2, 16, %s46, [#allocation6]
    $region13: #{conformer_encoder.15} parent=1 // pred_fallthru
      _
    // Predicated region
    $region14: #{conformer_encoder.15} parent=1 // pred_check
      _
    $region15: #{conformer_encoder.15} parent=1 // pred_check_branch
      %50 = sbr.rel (0) target = $region17
    $region16: #{conformer_encoder.15} parent=1 // pred_region
      %s52 = ssub.s32 256, 256
      %53 = vsyncadd [#allocation9], %s52
      %s54 = sshll.u32 [#allocation8], 4
      %s55 = int_to_ptr.vmem [resolvable:$true] %s54
      %60 = dma.hbm_to_vmem [thread:$0]  %s3, 256, %s55, [#allocation9], 64, 64, 4
    $region17: #{conformer_encoder.15} parent=1 // pred_fallthru
      _
    // Predicated region
    $region18: #{conformer_encoder.15} parent=1 // pred_check
      _
    $region19: #{conformer_encoder.15} parent=1 // pred_check_branch
      %62 = sbr.rel (0) target = $region21
    $region20: #{conformer_encoder.15} parent=1 // pred_region
      %s64 = ssub.s32 16, 16
      %65 = vsyncadd [#allocation9], %s64
      %s67 = sshll.u32 [#allocation10], 4
      %s68 = int_to_ptr.vmem [resolvable:$true] %s67
      %70 = dma.hbm_to_vmem [thread:$0]  %s4, 16, %s68, [#allocation9]
    $region21: #{conformer_encoder.15} parent=1 // pred_fallthru
      _
    // Predicated region
    $region22: #{conformer_encoder.15} parent=1 // pred_check
      _
    $region23: #{conformer_encoder.15} parent=1 // pred_check_branch
      %72 = sbr.rel (0) target = $region25
    $region24: #{conformer_encoder.15} parent=1 // pred_region
      %s74 = ssub.s32 1024, 1024
      %75 = vsyncadd [#allocation12], %s74
      %s76 = sshll.u32 [#allocation11], 4
      %s77 = int_to_ptr.vmem [resolvable:$true] %s76
      %82 = dma.hbm_to_vmem [thread:$0]  %s5, 1024, %s77, [#allocation12], 64, 64, 4
    $region25: #{conformer_encoder.15} parent=1 // pred_fallthru
      _
    // Predicated region
    $region26: #{conformer_encoder.15} parent=1 // pred_check
      _
    $region27: #{conformer_encoder.15} parent=1 // pred_check_branch
      %84 = sbr.rel (0) target = $region29
    $region28: #{conformer_encoder.15} parent=1 // pred_region
      %s86 = ssub.s32 16, 16
      %87 = vsyncadd [#allocation12], %s86
      %s89 = sshll.u32 [#allocation13], 4
      %s90 = int_to_ptr.vmem [resolvable:$true] %s89
      %92 = dma.hbm_to_vmem [thread:$0]  %s6, 16, %s90, [#allocation12]
    $region29: #{conformer_encoder.15} parent=1 // pred_fallthru
      _
    // Predicated region
    $region30: #{conformer_encoder.15} parent=1 // pred_check
      _
    $region31: #{conformer_encoder.15} parent=1 // pred_check_branch
      %94 = sbr.rel (0) target = $region33
    $region32: #{conformer_encoder.15} parent=1 // pred_region
      %95 = dma.done [#allocation3], 128
    $region33: #{conformer_encoder.15} parent=1 // pred_fallthru
      _
    // Predicated region
    $region34: #{conformer_encoder.15} parent=1 // pred_check
      _
    $region35: #{conformer_encoder.15} parent=1 // pred_check_branch
      %97 = sbr.rel (0) target = $region37
    $region36: #{conformer_encoder.15} parent=1 // pred_region
      %98 = dma.done [#allocation6], 16
    $region37: #{conformer_encoder.15} parent=1 // pred_fallthru
      _
    // Predicated region
    $region38: #{conformer_encoder.15} parent=1 // pred_check
      _
    $region39: #{conformer_encoder.15} parent=1 // pred_check_branch
      %100 = sbr.rel (0) target = $region41
    $region40: #{conformer_encoder.15} parent=1 // pred_region
      %101 = dma.done [#allocation6], 16
    $region41: #{conformer_encoder.15} parent=1 // pred_fallthru
      _
    // Predicated region
    $region42: #{conformer_encoder.15} parent=1 // pred_check
      _
    $region43: #{conformer_encoder.15} parent=1 // pred_check_branch
      %103 = sbr.rel (0) target = $region45
    $region44: #{conformer_encoder.15} parent=1 // pred_region
      %104 = dma.done [#allocation9], 256
    $region45: #{conformer_encoder.15} parent=1 // pred_fallthru
      _
    // Predicated region
    $region46: #{conformer_encoder.15} parent=1 // pred_check
      _
    $region47: #{conformer_encoder.15} parent=1 // pred_check_branch
      %106 = sbr.rel (0) target = $region49
    $region48: #{conformer_encoder.15} parent=1 // pred_region
      %107 = dma.done [#allocation9], 16
    $region49: #{conformer_encoder.15} parent=1 // pred_fallthru
      _
    // Predicated region
    $region50: #{conformer_encoder.15} parent=1 // pred_check
      _
    $region51: #{conformer_encoder.15} parent=1 // pred_check_branch
      %109 = sbr.rel (0) target = $region53
    $region52: #{conformer_encoder.15} parent=1 // pred_region
      %110 = dma.done [#allocation12], 1024
    $region53: #{conformer_encoder.15} parent=1 // pred_fallthru
      _
    // Predicated region
    $region54: #{conformer_encoder.15} parent=1 // pred_check
      _
    $region55: #{conformer_encoder.15} parent=1 // pred_check_branch
      %112 = sbr.rel (0) target = $region57
    $region56: #{conformer_encoder.15} parent=1 // pred_region
      %113 = dma.done [#allocation12], 16
    $region57: #{conformer_encoder.15} parent=1 // pred_fallthru
      _
    %v115 = vld [vmem:[#allocation2] sm:$0xf]
    %v116 = vld [vmem:[#allocation2 + $0x4] sm:$0xf]
    %v117 = vunpack.c.l.bf16 %v115
    %v118 = vunpack.c.l.bf16 %v116
    %v119 = vld [vmem:[#allocation5] sm:$0x1]
    %v120 = vld [vmem:[#allocation7] sm:$0x1]
    %vm121 = vcmask 261120
    %v122 = vsel %vm121, %v117, 0.0
    %123 = vadd.xlane.f32.xlu0 %v122
    %v124 = vpop.xlane.xlu0 %123
    %v125 = vsel %vm121, %v118, 0.0
    %126 = vadd.xlane.f32.xlu0 %v125
    %v127 = vpop.xlane.xlu0 %126
    %v128 = vrcp.pop 32.0
    %v129 = vmul.f32 %v124, %v128
    %v130 = vmul.f32 %v127, %v128
    %v131 = vsub.f32 %v117, %v129
    %v132 = vsub.f32 %v118, %v130
    %v133 = vmul.f32 %v131, %v131
    %v134 = vmul.f32 %v132, %v132
    %v135 = vsel %vm121, %v133, 0.0
    %136 = vadd.xlane.f32.xlu0 %v135
    %v137 = vpop.xlane.xlu0 %136
    %v138 = vsel %vm121, %v134, 0.0
    %139 = vadd.xlane.f32.xlu0 %v138
    %v140 = vpop.xlane.xlu0 %139
    %v141 = vmul.f32 %v137, %v128
    %v142 = vmul.f32 %v140, %v128
    %v143 = vadd.f32 %v141, 1e-05
    %v144 = vadd.f32 %v142, 1e-05
    %v145 = vrsqrt.pop %v143
    %v146 = vrsqrt.pop %v144
    %v147 = vmul.f32 %v131, %v145
    %v148 = vmul.f32 %v132, %v146
    %v150 = vlaneseq
    %v151 = vshrl.u32 %v150, 7
    %v152 = vsub.s32 0, %v151
    %v153 = vrot.slane %v119, %v152
    %v155 = vmul.f32 %v147, %v153
    %v156 = vmul.f32 %v148, %v153
    %v158 = vlaneseq
    %v159 = vshrl.u32 %v158, 7
    %v160 = vsub.s32 0, %v159
    %v161 = vrot.slane %v120, %v160
    %v163 = vadd.f32 %v155, %v161
    %v164 = vadd.f32 %v156, %v161
    %v165 = vpack.c.bf16 %v164, %v163
    %v166 = vld [vmem:[#allocation8] sm:$0xf]
    %v167 = vld [vmem:[#allocation8 + $0x4] sm:$0xf]
    %v168 = vld [vmem:[#allocation8 + $0x8] sm:$0xf]
    %v169 = vld [vmem:[#allocation8 + $0xc] sm:$0xf]
    %v170 = vld [vmem:[#allocation10] sm:$0x1]
    %v172 = vlaneseq
    %v173 = vshrl.u32 %v172, 7
    %v174 = vsub.s32 0, %v173
    %v175 = vrot.slane %v170, %v174
    %v181 = vunpack.c.l.b16 %v166
    %v182 = vunpack.c.l.b16 %v167
    %v183 = vunpack.c.l.b16 %v168
    %v184 = vunpack.c.l.b16 %v169
    %v185 = vpack.c.b16 %v182, %v181
    %v186 = vpack.c.b16 %v184, %v183
    %v190 = vsel %vm121, %v165, 0
    %192 = vmatprep.subr.bf16.mxu0 0
    %193 = vmatpush1.bf16.msra.mxu0 %v185
    %194 = vmatprep.subr.bf16.mxu0 0
    %195 = vmatpush1.bf16.msra.mxu0 %v186
    %196 = vmatprep.subr.bf16.mxu0 0
    %197 = vmatpush1.bf16.msra.mxu0 0
    %198 = vmatprep.subr.bf16.mxu0 0
    %199 = vmatpush1.bf16.msra.mxu0 0
    %200 = vmatprep.subr.bf16.mxu0 0
    %201 = vmatpush1.bf16.msra.mxu0 0
    %202 = vmatprep.subr.bf16.mxu0 0
    %203 = vmatpush1.bf16.msra.mxu0 0
    %204 = vmatprep.subr.bf16.mxu0 0
    %205 = vmatpush1.bf16.msra.mxu0 0
    %206 = vmatprep.subr.bf16.mxu0 0
    %207 = vmatpush1.bf16.msra.mxu0 0
    %208 = vmatprep.subr.bf16.mxu0 0
    %209 = vmatpush1.bf16.msra.mxu0 0
    %210 = vmatprep.subr.bf16.mxu0 0
    %211 = vmatpush1.bf16.msra.mxu0 0
    %212 = vmatprep.subr.bf16.mxu0 0
    %213 = vmatpush1.bf16.msra.mxu0 0
    %214 = vmatprep.subr.bf16.mxu0 0
    %215 = vmatpush1.bf16.msra.mxu0 0
    %216 = vmatprep.subr.bf16.mxu0 0
    %217 = vmatpush1.bf16.msra.mxu0 0
    %218 = vmatprep.subr.bf16.mxu0 0
    %219 = vmatpush1.bf16.msra.mxu0 0
    %220 = vmatprep.subr.bf16.mxu0 0
    %221 = vmatpush1.bf16.msra.mxu0 0
    %222 = vmatprep.subr.bf16.mxu0 0
    %223 = vmatpush1.bf16.msra.mxu0 0
    %224 = vmatprep.mubr.bf16.mxu0 0
    %225 = vmatmul.mubr.bf16.gmra.mrb[0].mxu0 %v190
    %v226 = vpop.f32.mrb[0].mxu0
    %v227 = vadd.f32 %v175, %v226
    %v228 = vpop.f32.mrb[0].mxu0
    %v229 = vpop.f32.mrb[0].mxu0
    %v230 = vadd.f32 %v175, %v229
    %v231 = vpop.f32.mrb[0].mxu0
    %232 = vdwg.mxu0
    %v233 = vxor.u32 %v227, 2147483648
    %v234 = vxor.u32 %v230, 2147483648
    %v235 = vmul.f32 %v233, 1.442695
    %v236 = vpow.pop %v235
    %v237 = vmul.f32 %v234, 1.442695
    %v238 = vpow.pop %v237
    %v239 = vadd.f32 %v236, 1.0
    %v240 = vadd.f32 %v238, 1.0
    %v241 = vrcp.pop %v239
    %v242 = vmul.f32 1.0, %v241
    %v243 = vrcp.pop %v240
    %v244 = vmul.f32 1.0, %v243
    %v245 = vmul.f32 %v227, %v242
    %v246 = vmul.f32 %v230, %v244
    %v247 = vpack.c.bf16 %v246, %v245
    %v248 = vld [vmem:[#allocation11] sm:$0xf]
    %v249 = vld [vmem:[#allocation11 + $0x4] sm:$0xf]
    %v250 = vld [vmem:[#allocation11 + $0x8] sm:$0xf]
    %v251 = vld [vmem:[#allocation11 + $0xc] sm:$0xf]
    %v252 = vld [vmem:[#allocation11 + $0x10] sm:$0xf]
    %v253 = vld [vmem:[#allocation11 + $0x14] sm:$0xf]
    %v254 = vld [vmem:[#allocation11 + $0x18] sm:$0xf]
    %v255 = vld [vmem:[#allocation11 + $0x1c] sm:$0xf]
    %v256 = vld [vmem:[#allocation11 + $0x20] sm:$0xf]
    %v257 = vld [vmem:[#allocation11 + $0x24] sm:$0xf]
    %v258 = vld [vmem:[#allocation11 + $0x28] sm:$0xf]
    %v259 = vld [vmem:[#allocation11 + $0x2c] sm:$0xf]
    %v260 = vld [vmem:[#allocation11 + $0x30] sm:$0xf]
    %v261 = vld [vmem:[#allocation11 + $0x34] sm:$0xf]
    %v262 = vld [vmem:[#allocation11 + $0x38] sm:$0xf]
    %v263 = vld [vmem:[#allocation11 + $0x3c] sm:$0xf]
    %v264 = vld [vmem:[#allocation13] sm:$0x1]
    %v266 = vlaneseq
    %v267 = vshrl.u32 %v266, 7
    %v268 = vsub.s32 0, %v267
    %v269 = vrot.slane %v264, %v268
    %v287 = vunpack.c.l.b16 %v248
    %v288 = vunpack.c.l.b16 %v249
    %v289 = vunpack.c.l.b16 %v250
    %v290 = vunpack.c.l.b16 %v251
    %v291 = vunpack.c.l.b16 %v252
    %v292 = vunpack.c.l.b16 %v253
    %v293 = vunpack.c.l.b16 %v254
    %v294 = vunpack.c.l.b16 %v255
    %v295 = vunpack.c.l.b16 %v256
    %v296 = vunpack.c.l.b16 %v257
    %v297 = vunpack.c.l.b16 %v258
    %v298 = vunpack.c.l.b16 %v259
    %v299 = vunpack.c.l.b16 %v260
    %v300 = vunpack.c.l.b16 %v261
    %v301 = vunpack.c.l.b16 %v262
    %v302 = vunpack.c.l.b16 %v263
    %v303 = vpack.c.b16 %v288, %v287
    %v304 = vpack.c.b16 %v290, %v289
    %v305 = vpack.c.b16 %v292, %v291
    %v306 = vpack.c.b16 %v294, %v293
    %v307 = vpack.c.b16 %v296, %v295
    %v308 = vpack.c.b16 %v298, %v297
    %v309 = vpack.c.b16 %v300, %v299
    %v310 = vpack.c.b16 %v302, %v301
    %319 = vmatprep.subr.bf16.mxu0 0
    %320 = vmatpush1.bf16.msra.mxu0 %v303
    %321 = vmatprep.subr.bf16.mxu0 0
    %322 = vmatpush1.bf16.msra.mxu0 %v304
    %323 = vmatprep.subr.bf16.mxu0 0
    %324 = vmatpush1.bf16.msra.mxu0 %v305
    %325 = vmatprep.subr.bf16.mxu0 0
    %326 = vmatpush1.bf16.msra.mxu0 %v306
    %327 = vmatprep.subr.bf16.mxu0 0
    %328 = vmatpush1.bf16.msra.mxu0 %v307
    %329 = vmatprep.subr.bf16.mxu0 0
    %330 = vmatpush1.bf16.msra.mxu0 %v308
    %331 = vmatprep.subr.bf16.mxu0 0
    %332 = vmatpush1.bf16.msra.mxu0 %v309
    %333 = vmatprep.subr.bf16.mxu0 0
    %334 = vmatpush1.bf16.msra.mxu0 %v310
    %335 = vmatprep.subr.bf16.mxu0 0
    %336 = vmatpush1.bf16.msra.mxu0 0
    %337 = vmatprep.subr.bf16.mxu0 0
    %338 = vmatpush1.bf16.msra.mxu0 0
    %339 = vmatprep.subr.bf16.mxu0 0
    %340 = vmatpush1.bf16.msra.mxu0 0
    %341 = vmatprep.subr.bf16.mxu0 0
    %342 = vmatpush1.bf16.msra.mxu0 0
    %343 = vmatprep.subr.bf16.mxu0 0
    %344 = vmatpush1.bf16.msra.mxu0 0
    %345 = vmatprep.subr.bf16.mxu0 0
    %346 = vmatpush1.bf16.msra.mxu0 0
    %347 = vmatprep.subr.bf16.mxu0 0
    %348 = vmatpush1.bf16.msra.mxu0 0
    %349 = vmatprep.subr.bf16.mxu0 0
    %350 = vmatpush1.bf16.msra.mxu0 0
    %351 = vmatprep.mubr.bf16.mxu0 0
    %352 = vmatmul.mubr.bf16.gmra.mrb[0].mxu0 %v247
    %v353 = vpop.f32.mrb[0].mxu0
    %v354 = vadd.f32 %v269, %v353
    %v355 = vpop.f32.mrb[0].mxu0
    %v356 = vpop.f32.mrb[0].mxu0
    %v357 = vadd.f32 %v269, %v356
    %v358 = vpop.f32.mrb[0].mxu0
    %359 = vdwg.mxu0
    %v360 = vmul.f32 %v354, 0.5
    %v361 = vmul.f32 %v357, 0.5
    %v362 = vadd.f32 %v117, %v360
    %v363 = vadd.f32 %v118, %v361
    %v364 = vpack.c.bf16 %v363, %v362
    %v366 = vunpack.c.l.b16 %v364
    %v367 = vunpack.c.h.b16 %v364
    %v368 = vpack.c.b16 %v366, %v366
    %v369 = vpack.c.b16 %v367, %v367
    %vm372 = vcmask 257024
    %373 = vst.msk [vmem:[#allocation14] sm:$0xf] %vm372, %v368
    %374 = vst.msk [vmem:[#allocation14 + $0x4] sm:$0xf] %vm372, %v369
    // Predicated region
    $region58: #{conformer_encoder.15} parent=1 // pred_check
      _
    $region59: #{conformer_encoder.15} parent=1 // pred_check_branch
      %376 = sbr.rel (0) target = $region61
    $region60: #{conformer_encoder.15} parent=1 // pred_region
      %s378 = ssub.s32 128, 128
      %379 = vsyncadd [#allocation4], %s378
      %s380 = sshll.u32 [#allocation14], 4
      %s381 = int_to_ptr.vmem [resolvable:$true] %s380
      %386 = dma.vmem_to_hbm [thread:$0]  %s381, 128, %s7, [#allocation4], 64, 64, 4
    $region61: #{conformer_encoder.15} parent=1 // pred_fallthru
      _
    // Predicated region
    $region62: #{conformer_encoder.15} parent=1 // pred_check
      _
    $region63: #{conformer_encoder.15} parent=1 // pred_check_branch
      %388 = sbr.rel (0) target = $region65
    $region64: #{conformer_encoder.15} parent=1 // pred_region
      %389 = dma.done [#allocation4], 128
    $region65: #{conformer_encoder.15} parent=1 // pred_fallthru
      _
    %390 = vsyncpa [#allocation3], 1
    %391 = vsyncpa [#allocation6], 1
    %392 = vsyncpa [#allocation9], 1
    %393 = vsyncpa [#allocation12], 1
    %394 = vsyncpa [#allocation4], 1

// kernel: conformer_encoder.14
$region0: #{conformer_encoder.14}
  #allocation0 [shape = 'u32[]', space=smem, size = 0x4, offset = 0x4, fixed_abs, tag = 'smem constant byte address 0x4 - core index']
  #allocation1 [shape = 'u32[144,128]{1,0:T(1,128)}', space=vmem, size = 0x12000, scoped, tag = 'internal scratch']
  %s0 = inlined_call_operand.hbm [shape: bf16[16,32], index: 0, kind: input, shape index: {}]
  %s1 = inlined_call_operand.hbm [shape: f32[1,32], index: 1, kind: input, shape index: {}]
  %s2 = inlined_call_operand.hbm [shape: f32[1,32], index: 2, kind: input, shape index: {}]
  %s3 = inlined_call_operand.hbm [shape: bf16[32,128], index: 3, kind: input, shape index: {}]
  %s4 = inlined_call_operand.hbm [shape: f32[1,128], index: 4, kind: input, shape index: {}]
  %s5 = inlined_call_operand.hbm [shape: bf16[128,32], index: 5, kind: input, shape index: {}]
  %s6 = inlined_call_operand.hbm [shape: f32[1,32], index: 6, kind: input, shape index: {}]
  %s7 = inlined_call_operand.hbm [shape: f32[1,32], index: 7, kind: input, shape index: {}]
  %s8 = inlined_call_operand.hbm [shape: f32[1,32], index: 8, kind: input, shape index: {}]
  %s9 = inlined_call_operand.hbm [shape: bf16[16,32], index: 9, kind: output, shape index: {}]
  %s10 = sld [smem:[#allocation0]]
  $region82: #{conformer_encoder.14} parent=0
    _
  %s12 = ssub.s32 1, %s10
  %s13 = scalar_select 0, %s12, %s10
  $region1: #{conformer_encoder.14} parent=0
    #allocation2 [shape = 'u8[4096]{0}', space=vmem, size = 0x1000, scoped, tag = 'input window, operand 0, single buffered']
    #allocation3 [shape = 's32[1]{0}', space=sflag, size = 0x4, scoped, tag = 'scoped memory for conformer_encoder.14']
    #allocation4 [shape = 's32[1]{0}', space=sflag, size = 0x4, scoped, tag = 'scoped memory for conformer_encoder.14']
    #allocation5 [shape = 'u8[512]{0}', space=vmem, size = 0x400, scoped, tag = 'input window, operand 1, single buffered']
    #allocation6 [shape = 's32[1]{0}', space=sflag, size = 0x4, scoped, tag = 'scoped memory for conformer_encoder.14']
    #allocation7 [shape = 'u8[512]{0}', space=vmem, size = 0x400, scoped, tag = 'input window, operand 2, single buffered']
    #allocation8 [shape = 'u8[8192]{0}', space=vmem, size = 0x2000, scoped, tag = 'input window, operand 3, single buffered']
    #allocation9 [shape = 's32[1]{0}', space=sflag, size = 0x4, scoped, tag = 'scoped memory for conformer_encoder.14']
    #allocation10 [shape = 'u8[512]{0}', space=vmem, size = 0x400, scoped, tag = 'input window, operand 4, single buffered']
    #allocation11 [shape = 'u8[32768]{0}', space=vmem, size = 0x8000, scoped, tag = 'input window, operand 5, single buffered']
    #allocation12 [shape = 's32[1]{0}', space=sflag, size = 0x4, scoped, tag = 'scoped memory for conformer_encoder.14']
    #allocation13 [shape = 'u8[512]{0}', space=vmem, size = 0x400, scoped, tag = 'input window, operand 6, single buffered']
    #allocation14 [shape = 'u8[512]{0}', space=vmem, size = 0x400, scoped, tag = 'input window, operand 7, single buffered']
    #allocation15 [shape = 's32[1]{0}', space=sflag, size = 0x4, scoped, tag = 'scoped memory for conformer_encoder.14']
    #allocation16 [shape = 'u8[512]{0}', space=vmem, size = 0x400, scoped, tag = 'input window, operand 8, single buffered']
    #allocation17 [shape = 'u8[4096]{0}', space=vmem, size = 0x1000, scoped, tag = 'output window, operand 0, single buffered']
    %14 = vsyncpa [#allocation3], 0
    %15 = vsyncpa [#allocation6], 0
    %16 = vsyncpa [#allocation9], 0
    %17 = vsyncpa [#allocation12], 0
    %18 = vsyncpa [#allocation15], 0
    %19 = vsyncpa [#allocation4], 0
    // Predicated region
    $region2: #{conformer_encoder.14} parent=1 // pred_check
      _
    $region3: #{conformer_encoder.14} parent=1 // pred_check_branch
      %21 = sbr.rel (0) target = $region5
    $region4: #{conformer_encoder.14} parent=1 // pred_region
      %s23 = ssub.s32 128, 128
      %24 = vsyncadd [#allocation3], %s23
      %s25 = sshll.u32 [#allocation2], 4
      %s26 = int_to_ptr.vmem [resolvable:$true] %s25
      %31 = dma.hbm_to_vmem [thread:$0]  %s0, 128, %s26, [#allocation3], 64, 64, 4
    $region5: #{conformer_encoder.14} parent=1 // pred_fallthru
      _
    // Predicated region
    $region6: #{conformer_encoder.14} parent=1 // pred_check
      _
    $region7: #{conformer_encoder.14} parent=1 // pred_check_branch
      %33 = sbr.rel (0) target = $region9
    $region8: #{conformer_encoder.14} parent=1 // pred_region
      %s35 = ssub.s32 16, 16
      %36 = vsyncadd [#allocation6], %s35
      %s38 = sshll.u32 [#allocation5], 4
      %s39 = int_to_ptr.vmem [resolvable:$true] %s38
      %41 = dma.hbm_to_vmem [thread:$0]  %s1, 16, %s39, [#allocation6]
    $region9: #{conformer_encoder.14} parent=1 // pred_fallthru
      _
    // Predicated region
    $region10: #{conformer_encoder.14} parent=1 // pred_check
      _
    $region11: #{conformer_encoder.14} parent=1 // pred_check_branch
      %43 = sbr.rel (0) target = $region13
    $region12: #{conformer_encoder.14} parent=1 // pred_region
      %s45 = ssub.s32 16, 16
      %46 = vsyncadd [#allocation6], %s45
      %s48 = sshll.u32 [#allocation7], 4
      %s49 = int_to_ptr.vmem [resolvable:$true] %s48
      %51 = dma.hbm_to_vmem [thread:$0]  %s2, 16, %s49, [#allocation6]
    $region13: #{conformer_encoder.14} parent=1 // pred_fallthru
      _
    // Predicated region
    $region14: #{conformer_encoder.14} parent=1 // pred_check
      _
    $region15: #{conformer_encoder.14} parent=1 // pred_check_branch
      %53 = sbr.rel (0) target = $region17
    $region16: #{conformer_encoder.14} parent=1 // pred_region
      %s55 = ssub.s32 256, 256
      %56 = vsyncadd [#allocation9], %s55
      %s57 = sshll.u32 [#allocation8], 4
      %s58 = int_to_ptr.vmem [resolvable:$true] %s57
      %63 = dma.hbm_to_vmem [thread:$0]  %s3, 256, %s58, [#allocation9], 64, 64, 4
    $region17: #{conformer_encoder.14} parent=1 // pred_fallthru
      _
    // Predicated region
    $region18: #{conformer_encoder.14} parent=1 // pred_check
      _
    $region19: #{conformer_encoder.14} parent=1 // pred_check_branch
      %65 = sbr.rel (0) target = $region21
    $region20: #{conformer_encoder.14} parent=1 // pred_region
      %s67 = ssub.s32 16, 16
      %68 = vsyncadd [#allocation9], %s67
      %s70 = sshll.u32 [#allocation10], 4
      %s71 = int_to_ptr.vmem [resolvable:$true] %s70
      %73 = dma.hbm_to_vmem [thread:$0]  %s4, 16, %s71, [#allocation9]
    $region21: #{conformer_encoder.14} parent=1 // pred_fallthru
      _
    // Predicated region
    $region22: #{conformer_encoder.14} parent=1 // pred_check
      _
    $region23: #{conformer_encoder.14} parent=1 // pred_check_branch
      %75 = sbr.rel (0) target = $region25
    $region24: #{conformer_encoder.14} parent=1 // pred_region
      %s77 = ssub.s32 1024, 1024
      %78 = vsyncadd [#allocation12], %s77
      %s79 = sshll.u32 [#allocation11], 4
      %s80 = int_to_ptr.vmem [resolvable:$true] %s79
      %85 = dma.hbm_to_vmem [thread:$0]  %s5, 1024, %s80, [#allocation12], 64, 64, 4
    $region25: #{conformer_encoder.14} parent=1 // pred_fallthru
      _
    // Predicated region
    $region26: #{conformer_encoder.14} parent=1 // pred_check
      _
    $region27: #{conformer_encoder.14} parent=1 // pred_check_branch
      %87 = sbr.rel (0) target = $region29
    $region28: #{conformer_encoder.14} parent=1 // pred_region
      %s89 = ssub.s32 16, 16
      %90 = vsyncadd [#allocation12], %s89
      %s92 = sshll.u32 [#allocation13], 4
      %s93 = int_to_ptr.vmem [resolvable:$true] %s92
      %95 = dma.hbm_to_vmem [thread:$0]  %s6, 16, %s93, [#allocation12]
    $region29: #{conformer_encoder.14} parent=1 // pred_fallthru
      _
    // Predicated region
    $region30: #{conformer_encoder.14} parent=1 // pred_check
      _
    $region31: #{conformer_encoder.14} parent=1 // pred_check_branch
      %97 = sbr.rel (0) target = $region33
    $region32: #{conformer_encoder.14} parent=1 // pred_region
      %s99 = ssub.s32 16, 16
      %100 = vsyncadd [#allocation15], %s99
      %s102 = sshll.u32 [#allocation14], 4
      %s103 = int_to_ptr.vmem [resolvable:$true] %s102
      %105 = dma.hbm_to_vmem [thread:$0]  %s7, 16, %s103, [#allocation15]
    $region33: #{conformer_encoder.14} parent=1 // pred_fallthru
      _
    // Predicated region
    $region34: #{conformer_encoder.14} parent=1 // pred_check
      _
    $region35: #{conformer_encoder.14} parent=1 // pred_check_branch
      %107 = sbr.rel (0) target = $region37
    $region36: #{conformer_encoder.14} parent=1 // pred_region
      %s109 = ssub.s32 16, 16
      %110 = vsyncadd [#allocation15], %s109
      %s112 = sshll.u32 [#allocation16], 4
      %s113 = int_to_ptr.vmem [resolvable:$true] %s112
      %115 = dma.hbm_to_vmem [thread:$0]  %s8, 16, %s113, [#allocation15]
    $region37: #{conformer_encoder.14} parent=1 // pred_fallthru
      _
    // Predicated region
    $region38: #{conformer_encoder.14} parent=1 // pred_check
      _
    $region39: #{conformer_encoder.14} parent=1 // pred_check_branch
      %117 = sbr.rel (0) target = $region41
    $region40: #{conformer_encoder.14} parent=1 // pred_region
      %118 = dma.done [#allocation3], 128
    $region41: #{conformer_encoder.14} parent=1 // pred_fallthru
      _
    // Predicated region
    $region42: #{conformer_encoder.14} parent=1 // pred_check
      _
    $region43: #{conformer_encoder.14} parent=1 // pred_check_branch
      %120 = sbr.rel (0) target = $region45
    $region44: #{conformer_encoder.14} parent=1 // pred_region
      %121 = dma.done [#allocation6], 16
    $region45: #{conformer_encoder.14} parent=1 // pred_fallthru
      _
    // Predicated region
    $region46: #{conformer_encoder.14} parent=1 // pred_check
      _
    $region47: #{conformer_encoder.14} parent=1 // pred_check_branch
      %123 = sbr.rel (0) target = $region49
    $region48: #{conformer_encoder.14} parent=1 // pred_region
      %124 = dma.done [#allocation6], 16
    $region49: #{conformer_encoder.14} parent=1 // pred_fallthru
      _
    // Predicated region
    $region50: #{conformer_encoder.14} parent=1 // pred_check
      _
    $region51: #{conformer_encoder.14} parent=1 // pred_check_branch
      %126 = sbr.rel (0) target = $region53
    $region52: #{conformer_encoder.14} parent=1 // pred_region
      %127 = dma.done [#allocation9], 256
    $region53: #{conformer_encoder.14} parent=1 // pred_fallthru
      _
    // Predicated region
    $region54: #{conformer_encoder.14} parent=1 // pred_check
      _
    $region55: #{conformer_encoder.14} parent=1 // pred_check_branch
      %129 = sbr.rel (0) target = $region57
    $region56: #{conformer_encoder.14} parent=1 // pred_region
      %130 = dma.done [#allocation9], 16
    $region57: #{conformer_encoder.14} parent=1 // pred_fallthru
      _
    // Predicated region
    $region58: #{conformer_encoder.14} parent=1 // pred_check
      _
    $region59: #{conformer_encoder.14} parent=1 // pred_check_branch
      %132 = sbr.rel (0) target = $region61
    $region60: #{conformer_encoder.14} parent=1 // pred_region
      %133 = dma.done [#allocation12], 1024
    $region61: #{conformer_encoder.14} parent=1 // pred_fallthru
      _
    // Predicated region
    $region62: #{conformer_encoder.14} parent=1 // pred_check
      _
    $region63: #{conformer_encoder.14} parent=1 // pred_check_branch
      %135 = sbr.rel (0) target = $region65
    $region64: #{conformer_encoder.14} parent=1 // pred_region
      %136 = dma.done [#allocation12], 16
    $region65: #{conformer_encoder.14} parent=1 // pred_fallthru
      _
    // Predicated region
    $region66: #{conformer_encoder.14} parent=1 // pred_check
      _
    $region67: #{conformer_encoder.14} parent=1 // pred_check_branch
      %138 = sbr.rel (0) target = $region69
    $region68: #{conformer_encoder.14} parent=1 // pred_region
      %139 = dma.done [#allocation15], 16
    $region69: #{conformer_encoder.14} parent=1 // pred_fallthru
      _
    // Predicated region
    $region70: #{conformer_encoder.14} parent=1 // pred_check
      _
    $region71: #{conformer_encoder.14} parent=1 // pred_check_branch
      %141 = sbr.rel (0) target = $region73
    $region72: #{conformer_encoder.14} parent=1 // pred_region
      %142 = dma.done [#allocation15], 16
    $region73: #{conformer_encoder.14} parent=1 // pred_fallthru
      _
    %v144 = vld [vmem:[#allocation2] sm:$0xf]
    %v145 = vld [vmem:[#allocation2 + $0x4] sm:$0xf]
    %v146 = vunpack.c.l.bf16 %v144
    %v147 = vunpack.c.l.bf16 %v145
    %v148 = vld [vmem:[#allocation5] sm:$0x1]
    %v149 = vld [vmem:[#allocation7] sm:$0x1]
    %vm150 = vcmask 261120
    %v151 = vsel %vm150, %v146, 0.0
    %152 = vadd.xlane.f32.xlu0 %v151
    %v153 = vpop.xlane.xlu0 %152
    %v154 = vsel %vm150, %v147, 0.0
    %155 = vadd.xlane.f32.xlu0 %v154
    %v156 = vpop.xlane.xlu0 %155
    %v157 = vrcp.pop 32.0
    %v158 = vmul.f32 %v153, %v157
    %v159 = vmul.f32 %v156, %v157
    %v160 = vsub.f32 %v146, %v158
    %v161 = vsub.f32 %v147, %v159
    %v162 = vmul.f32 %v160, %v160
    %v163 = vmul.f32 %v161, %v161
    %v164 = vsel %vm150, %v162, 0.0
    %165 = vadd.xlane.f32.xlu0 %v164
    %v166 = vpop.xlane.xlu0 %165
    %v167 = vsel %vm150, %v163, 0.0
    %168 = vadd.xlane.f32.xlu0 %v167
    %v169 = vpop.xlane.xlu0 %168
    %v170 = vmul.f32 %v166, %v157
    %v171 = vmul.f32 %v169, %v157
    %v172 = vadd.f32 %v170, 1e-05
    %v173 = vadd.f32 %v171, 1e-05
    %v174 = vrsqrt.pop %v172
    %v175 = vrsqrt.pop %v173
    %v176 = vmul.f32 %v160, %v174
    %v177 = vmul.f32 %v161, %v175
    %v179 = vlaneseq
    %v180 = vshrl.u32 %v179, 7
    %v181 = vsub.s32 0, %v180
    %v182 = vrot.slane %v148, %v181
    %v184 = vmul.f32 %v176, %v182
    %v185 = vmul.f32 %v177, %v182
    %v187 = vlaneseq
    %v188 = vshrl.u32 %v187, 7
    %v189 = vsub.s32 0, %v188
    %v190 = vrot.slane %v149, %v189
    %v192 = vadd.f32 %v184, %v190
    %v193 = vadd.f32 %v185, %v190
    %v194 = vpack.c.bf16 %v193, %v192
    %v195 = vld [vmem:[#allocation8] sm:$0xf]
    %v196 = vld [vmem:[#allocation8 + $0x4] sm:$0xf]
    %v197 = vld [vmem:[#allocation8 + $0x8] sm:$0xf]
    %v198 = vld [vmem:[#allocation8 + $0xc] sm:$0xf]
    %v199 = vld [vmem:[#allocation10] sm:$0x1]
    %v201 = vlaneseq
    %v202 = vshrl.u32 %v201, 7
    %v203 = vsub.s32 0, %v202
    %v204 = vrot.slane %v199, %v203
    %v210 = vunpack.c.l.b16 %v195
    %v211 = vunpack.c.l.b16 %v196
    %v212 = vunpack.c.l.b16 %v197
    %v213 = vunpack.c.l.b16 %v198
    %v214 = vpack.c.b16 %v211, %v210
    %v215 = vpack.c.b16 %v213, %v212
    %v219 = vsel %vm150, %v194, 0
    %221 = vmatprep.subr.bf16.mxu0 0
    %222 = vmatpush1.bf16.msra.mxu0 %v214
    %223 = vmatprep.subr.bf16.mxu0 0
    %224 = vmatpush1.bf16.msra.mxu0 %v215
    %225 = vmatprep.subr.bf16.mxu0 0
    %226 = vmatpush1.bf16.msra.mxu0 0
    %227 = vmatprep.subr.bf16.mxu0 0
    %228 = vmatpush1.bf16.msra.mxu0 0
    %229 = vmatprep.subr.bf16.mxu0 0
    %230 = vmatpush1.bf16.msra.mxu0 0
    %231 = vmatprep.subr.bf16.mxu0 0
    %232 = vmatpush1.bf16.msra.mxu0 0
    %233 = vmatprep.subr.bf16.mxu0 0
    %234 = vmatpush1.bf16.msra.mxu0 0
    %235 = vmatprep.subr.bf16.mxu0 0
    %236 = vmatpush1.bf16.msra.mxu0 0
    %237 = vmatprep.subr.bf16.mxu0 0
    %238 = vmatpush1.bf16.msra.mxu0 0
    %239 = vmatprep.subr.bf16.mxu0 0
    %240 = vmatpush1.bf16.msra.mxu0 0
    %241 = vmatprep.subr.bf16.mxu0 0
    %242 = vmatpush1.bf16.msra.mxu0 0
    %243 = vmatprep.subr.bf16.mxu0 0
    %244 = vmatpush1.bf16.msra.mxu0 0
    %245 = vmatprep.subr.bf16.mxu0 0
    %246 = vmatpush1.bf16.msra.mxu0 0
    %247 = vmatprep.subr.bf16.mxu0 0
    %248 = vmatpush1.bf16.msra.mxu0 0
    %249 = vmatprep.subr.bf16.mxu0 0
    %250 = vmatpush1.bf16.msra.mxu0 0
    %251 = vmatprep.subr.bf16.mxu0 0
    %252 = vmatpush1.bf16.msra.mxu0 0
    %253 = vmatprep.mubr.bf16.mxu0 0
    %254 = vmatmul.mubr.bf16.gmra.mrb[0].mxu0 %v219
    %v255 = vpop.f32.mrb[0].mxu0
    %v256 = vadd.f32 %v204, %v255
    %v257 = vpop.f32.mrb[0].mxu0
    %v258 = vpop.f32.mrb[0].mxu0
    %v259 = vadd.f32 %v204, %v258
    %v260 = vpop.f32.mrb[0].mxu0
    %261 = vdwg.mxu0
    %v262 = vxor.u32 %v256, 2147483648
    %v263 = vxor.u32 %v259, 2147483648
    %v264 = vmul.f32 %v262, 1.442695
    %v265 = vpow.pop %v264
    %v266 = vmul.f32 %v263, 1.442695
    %v267 = vpow.pop %v266
    %v268 = vadd.f32 %v265, 1.0
    %v269 = vadd.f32 %v267, 1.0
    %v270 = vrcp.pop %v268
    %v271 = vmul.f32 1.0, %v270
    %v272 = vrcp.pop %v269
    %v273 = vmul.f32 1.0, %v272
    %v274 = vmul.f32 %v256, %v271
    %v275 = vmul.f32 %v259, %v273
    %v276 = vpack.c.bf16 %v275, %v274
    %v277 = vld [vmem:[#allocation11] sm:$0xf]
    %v278 = vld [vmem:[#allocation11 + $0x4] sm:$0xf]
    %v279 = vld [vmem:[#allocation11 + $0x8] sm:$0xf]
    %v280 = vld [vmem:[#allocation11 + $0xc] sm:$0xf]
    %v281 = vld [vmem:[#allocation11 + $0x10] sm:$0xf]
    %v282 = vld [vmem:[#allocation11 + $0x14] sm:$0xf]
    %v283 = vld [vmem:[#allocation11 + $0x18] sm:$0xf]
    %v284 = vld [vmem:[#allocation11 + $0x1c] sm:$0xf]
    %v285 = vld [vmem:[#allocation11 + $0x20] sm:$0xf]
    %v286 = vld [vmem:[#allocation11 + $0x24] sm:$0xf]
    %v287 = vld [vmem:[#allocation11 + $0x28] sm:$0xf]
    %v288 = vld [vmem:[#allocation11 + $0x2c] sm:$0xf]
    %v289 = vld [vmem:[#allocation11 + $0x30] sm:$0xf]
    %v290 = vld [vmem:[#allocation11 + $0x34] sm:$0xf]
    %v291 = vld [vmem:[#allocation11 + $0x38] sm:$0xf]
    %v292 = vld [vmem:[#allocation11 + $0x3c] sm:$0xf]
    %v293 = vld [vmem:[#allocation13] sm:$0x1]
    %v295 = vlaneseq
    %v296 = vshrl.u32 %v295, 7
    %v297 = vsub.s32 0, %v296
    %v298 = vrot.slane %v293, %v297
    %v316 = vunpack.c.l.b16 %v277
    %v317 = vunpack.c.l.b16 %v278
    %v318 = vunpack.c.l.b16 %v279
    %v319 = vunpack.c.l.b16 %v280
    %v320 = vunpack.c.l.b16 %v281
    %v321 = vunpack.c.l.b16 %v282
    %v322 = vunpack.c.l.b16 %v283
    %v323 = vunpack.c.l.b16 %v284
    %v324 = vunpack.c.l.b16 %v285
    %v325 = vunpack.c.l.b16 %v286
    %v326 = vunpack.c.l.b16 %v287
    %v327 = vunpack.c.l.b16 %v288
    %v328 = vunpack.c.l.b16 %v289
    %v329 = vunpack.c.l.b16 %v290
    %v330 = vunpack.c.l.b16 %v291
    %v331 = vunpack.c.l.b16 %v292
    %v332 = vpack.c.b16 %v317, %v316
    %v333 = vpack.c.b16 %v319, %v318
    %v334 = vpack.c.b16 %v321, %v320
    %v335 = vpack.c.b16 %v323, %v322
    %v336 = vpack.c.b16 %v325, %v324
    %v337 = vpack.c.b16 %v327, %v326
    %v338 = vpack.c.b16 %v329, %v328
    %v339 = vpack.c.b16 %v331, %v330
    %348 = vmatprep.subr.bf16.mxu0 0
    %349 = vmatpush1.bf16.msra.mxu0 %v332
    %350 = vmatprep.subr.bf16.mxu0 0
    %351 = vmatpush1.bf16.msra.mxu0 %v333
    %352 = vmatprep.subr.bf16.mxu0 0
    %353 = vmatpush1.bf16.msra.mxu0 %v334
    %354 = vmatprep.subr.bf16.mxu0 0
    %355 = vmatpush1.bf16.msra.mxu0 %v335
    %356 = vmatprep.subr.bf16.mxu0 0
    %357 = vmatpush1.bf16.msra.mxu0 %v336
    %358 = vmatprep.subr.bf16.mxu0 0
    %359 = vmatpush1.bf16.msra.mxu0 %v337
    %360 = vmatprep.subr.bf16.mxu0 0
    %361 = vmatpush1.bf16.msra.mxu0 %v338
    %362 = vmatprep.subr.bf16.mxu0 0
    %363 = vmatpush1.bf16.msra.mxu0 %v339
    %364 = vmatprep.subr.bf16.mxu0 0
    %365 = vmatpush1.bf16.msra.mxu0 0
    %366 = vmatprep.subr.bf16.mxu0 0
    %367 = vmatpush1.bf16.msra.mxu0 0
    %368 = vmatprep.subr.bf16.mxu0 0
    %369 = vmatpush1.bf16.msra.mxu0 0
    %370 = vmatprep.subr.bf16.mxu0 0
    %371 = vmatpush1.bf16.msra.mxu0 0
    %372 = vmatprep.subr.bf16.mxu0 0
    %373 = vmatpush1.bf16.msra.mxu0 0
    %374 = vmatprep.subr.bf16.mxu0 0
    %375 = vmatpush1.bf16.msra.mxu0 0
    %376 = vmatprep.subr.bf16.mxu0 0
    %377 = vmatpush1.bf16.msra.mxu0 0
    %378 = vmatprep.subr.bf16.mxu0 0
    %379 = vmatpush1.bf16.msra.mxu0 0
    %380 = vmatprep.mubr.bf16.mxu0 0
    %381 = vmatmul.mubr.bf16.gmra.mrb[0].mxu0 %v276
    %v382 = vpop.f32.mrb[0].mxu0
    %v383 = vadd.f32 %v298, %v382
    %v384 = vpop.f32.mrb[0].mxu0
    %v385 = vpop.f32.mrb[0].mxu0
    %v386 = vadd.f32 %v298, %v385
    %v387 = vpop.f32.mrb[0].mxu0
    %388 = vdwg.mxu0
    %v389 = vmul.f32 %v383, 0.5
    %v390 = vmul.f32 %v386, 0.5
    %v391 = vadd.f32 %v146, %v389
    %v392 = vadd.f32 %v147, %v390
    %v393 = vld [vmem:[#allocation14] sm:$0x1]
    %v394 = vld [vmem:[#allocation16] sm:$0x1]
    %v395 = vsel %vm150, %v391, 0.0
    %396 = vadd.xlane.f32.xlu0 %v395
    %v397 = vpop.xlane.xlu0 %396
    %v398 = vsel %vm150, %v392, 0.0
    %399 = vadd.xlane.f32.xlu0 %v398
    %v400 = vpop.xlane.xlu0 %399
    %v401 = vmul.f32 %v397, %v157
    %v402 = vmul.f32 %v400, %v157
    %v403 = vsub.f32 %v391, %v401
    %v404 = vsub.f32 %v392, %v402
    %v405 = vmul.f32 %v403, %v403
    %v406 = vmul.f32 %v404, %v404
    %v407 = vsel %vm150, %v405, 0.0
    %408 = vadd.xlane.f32.xlu0 %v407
    %v409 = vpop.xlane.xlu0 %408
    %v410 = vsel %vm150, %v406, 0.0
    %411 = vadd.xlane.f32.xlu0 %v410
    %v412 = vpop.xlane.xlu0 %411
    %v413 = vmul.f32 %v409, %v157
    %v414 = vmul.f32 %v412, %v157
    %v415 = vadd.f32 %v413, 1e-05
    %v416 = vadd.f32 %v414, 1e-05
    %v417 = vrsqrt.pop %v415
    %v418 = vrsqrt.pop %v416
    %v419 = vmul.f32 %v403, %v417
    %v420 = vmul.f32 %v404, %v418
    %v422 = vlaneseq
    %v423 = vshrl.u32 %v422, 7
    %v424 = vsub.s32 0, %v423
    %v425 = vrot.slane %v393, %v424
    %v427 = vmul.f32 %v419, %v425
    %v428 = vmul.f32 %v420, %v425
    %v430 = vlaneseq
    %v431 = vshrl.u32 %v430, 7
    %v432 = vsub.s32 0, %v431
    %v433 = vrot.slane %v394, %v432
    %v435 = vadd.f32 %v427, %v433
    %v436 = vadd.f32 %v428, %v433
    %v437 = vpack.c.bf16 %v436, %v435
    %v439 = vunpack.c.l.b16 %v437
    %v440 = vunpack.c.h.b16 %v437
    %v441 = vpack.c.b16 %v439, %v439
    %v442 = vpack.c.b16 %v440, %v440
    %vm445 = vcmask 257024
    %446 = vst.msk [vmem:[#allocation17] sm:$0xf] %vm445, %v441
    %447 = vst.msk [vmem:[#allocation17 + $0x4] sm:$0xf] %vm445, %v442
    // Predicated region
    $region74: #{conformer_encoder.14} parent=1 // pred_check
      _
    $region75: #{conformer_encoder.14} parent=1 // pred_check_branch
      %449 = sbr.rel (0) target = $region77
    $region76: #{conformer_encoder.14} parent=1 // pred_region
      %s451 = ssub.s32 128, 128
      %452 = vsyncadd [#allocation4], %s451
      %s453 = sshll.u32 [#allocation17], 4
      %s454 = int_to_ptr.vmem [resolvable:$true] %s453
      %459 = dma.vmem_to_hbm [thread:$0]  %s454, 128, %s9, [#allocation4], 64, 64, 4
    $region77: #{conformer_encoder.14} parent=1 // pred_fallthru
      _
    // Predicated region
    $region78: #{conformer_encoder.14} parent=1 // pred_check
      _
    $region79: #{conformer_encoder.14} parent=1 // pred_check_branch
      %461 = sbr.rel (0) target = $region81
    $region80: #{conformer_encoder.14} parent=1 // pred_region
      %462 = dma.done [#allocation4], 128
    $region81: #{conformer_encoder.14} parent=1 // pred_fallthru
      _
    %463 = vsyncpa [#allocation3], 1
    %464 = vsyncpa [#allocation6], 1
    %465 = vsyncpa [#allocation9], 1
    %466 = vsyncpa [#allocation12], 1
    %467 = vsyncpa [#allocation15], 1
    %468 = vsyncpa [#allocation4], 1

// kernel: conformer_encoder.19
$region0: #{conformer_encoder.19}
  #allocation0 [shape = 'u32[]', space=smem, size = 0x4, offset = 0x4, fixed_abs, tag = 'smem constant byte address 0x4 - core index']
  #allocation1 [shape = 'u32[144,128]{1,0:T(1,128)}', space=vmem, size = 0x12000, scoped, tag = 'internal scratch']
  %s0 = inlined_call_operand.hbm [shape: bf16[16,32], index: 0, kind: input, shape index: {}]
  %s1 = inlined_call_operand.hbm [shape: f32[1,32], index: 1, kind: input, shape index: {}]
  %s2 = inlined_call_operand.hbm [shape: f32[1,32], index: 2, kind: input, shape index: {}]
  %s3 = inlined_call_operand.hbm [shape: f32[16,32], index: 3, kind: output, shape index: {}]
  %s4 = sld [smem:[#allocation0]]
  $region34: #{conformer_encoder.19} parent=0
    _
  %s6 = ssub.s32 1, %s4
  %s7 = scalar_select 0, %s6, %s4
  $region1: #{conformer_encoder.19} parent=0
    #allocation2 [shape = 'u8[4096]{0}', space=vmem, size = 0x1000, scoped, tag = 'input window, operand 0, single buffered']
    #allocation3 [shape = 's32[1]{0}', space=sflag, size = 0x4, scoped, tag = 'scoped memory for conformer_encoder.19']
    #allocation4 [shape = 's32[1]{0}', space=sflag, size = 0x4, scoped, tag = 'scoped memory for conformer_encoder.19']
    #allocation5 [shape = 'u8[512]{0}', space=vmem, size = 0x400, scoped, tag = 'input window, operand 1, single buffered']
    #allocation6 [shape = 's32[1]{0}', space=sflag, size = 0x4, scoped, tag = 'scoped memory for conformer_encoder.19']
    #allocation7 [shape = 'u8[512]{0}', space=vmem, size = 0x400, scoped, tag = 'input window, operand 2, single buffered']
    #allocation8 [shape = 'u8[8192]{0}', space=vmem, size = 0x2000, scoped, tag = 'output window, operand 0, single buffered']
    %8 = vsyncpa [#allocation3], 0
    %9 = vsyncpa [#allocation6], 0
    %10 = vsyncpa [#allocation4], 0
    // Predicated region
    $region2: #{conformer_encoder.19} parent=1 // pred_check
      _
    $region3: #{conformer_encoder.19} parent=1 // pred_check_branch
      %12 = sbr.rel (0) target = $region5
    $region4: #{conformer_encoder.19} parent=1 // pred_region
      %s14 = ssub.s32 128, 128
      %15 = vsyncadd [#allocation3], %s14
      %s16 = sshll.u32 [#allocation2], 4
      %s17 = int_to_ptr.vmem [resolvable:$true] %s16
      %22 = dma.hbm_to_vmem [thread:$0]  %s0, 128, %s17, [#allocation3], 64, 64, 4
    $region5: #{conformer_encoder.19} parent=1 // pred_fallthru
      _
    // Predicated region
    $region6: #{conformer_encoder.19} parent=1 // pred_check
      _
    $region7: #{conformer_encoder.19} parent=1 // pred_check_branch
      %24 = sbr.rel (0) target = $region9
    $region8: #{conformer_encoder.19} parent=1 // pred_region
      %s26 = ssub.s32 16, 16
      %27 = vsyncadd [#allocation6], %s26
      %s29 = sshll.u32 [#allocation5], 4
      %s30 = int_to_ptr.vmem [resolvable:$true] %s29
      %32 = dma.hbm_to_vmem [thread:$0]  %s1, 16, %s30, [#allocation6]
    $region9: #{conformer_encoder.19} parent=1 // pred_fallthru
      _
    // Predicated region
    $region10: #{conformer_encoder.19} parent=1 // pred_check
      _
    $region11: #{conformer_encoder.19} parent=1 // pred_check_branch
      %34 = sbr.rel (0) target = $region13
    $region12: #{conformer_encoder.19} parent=1 // pred_region
      %s36 = ssub.s32 16, 16
      %37 = vsyncadd [#allocation6], %s36
      %s39 = sshll.u32 [#allocation7], 4
      %s40 = int_to_ptr.vmem [resolvable:$true] %s39
      %42 = dma.hbm_to_vmem [thread:$0]  %s2, 16, %s40, [#allocation6]
    $region13: #{conformer_encoder.19} parent=1 // pred_fallthru
      _
    // Predicated region
    $region14: #{conformer_encoder.19} parent=1 // pred_check
      _
    $region15: #{conformer_encoder.19} parent=1 // pred_check_branch
      %44 = sbr.rel (0) target = $region17
    $region16: #{conformer_encoder.19} parent=1 // pred_region
      %45 = dma.done [#allocation3], 128
    $region17: #{conformer_encoder.19} parent=1 // pred_fallthru
      _
    // Predicated region
    $region18: #{conformer_encoder.19} parent=1 // pred_check
      _
    $region19: #{conformer_encoder.19} parent=1 // pred_check_branch
      %47 = sbr.rel (0) target = $region21
    $region20: #{conformer_encoder.19} parent=1 // pred_region
      %48 = dma.done [#allocation6], 16
    $region21: #{conformer_encoder.19} parent=1 // pred_fallthru
      _
    // Predicated region
    $region22: #{conformer_encoder.19} parent=1 // pred_check
      _
    $region23: #{conformer_encoder.19} parent=1 // pred_check_branch
      %50 = sbr.rel (0) target = $region25
    $region24: #{conformer_encoder.19} parent=1 // pred_region
      %51 = dma.done [#allocation6], 16
    $region25: #{conformer_encoder.19} parent=1 // pred_fallthru
      _
    %v52 = vld [vmem:[#allocation2] sm:$0xf]
    %v53 = vld [vmem:[#allocation2 + $0x4] sm:$0xf]
    %v54 = vunpack.c.l.bf16 %v52
    %v55 = vunpack.c.l.bf16 %v53
    %v56 = vld [vmem:[#allocation5] sm:$0x1]
    %v57 = vld [vmem:[#allocation7] sm:$0x1]
    %vm58 = vcmask 261120
    %v59 = vsel %vm58, %v54, 0.0
    %60 = vadd.xlane.f32.xlu0 %v59
    %v61 = vpop.xlane.xlu0 %60
    %v62 = vsel %vm58, %v55, 0.0
    %63 = vadd.xlane.f32.xlu0 %v62
    %v64 = vpop.xlane.xlu0 %63
    %v65 = vrcp.pop 32.0
    %v66 = vmul.f32 %v61, %v65
    %v67 = vmul.f32 %v64, %v65
    %v68 = vsub.f32 %v54, %v66
    %v69 = vsub.f32 %v55, %v67
    %v70 = vmul.f32 %v68, %v68
    %v71 = vmul.f32 %v69, %v69
    %v72 = vsel %vm58, %v70, 0.0
    %73 = vadd.xlane.f32.xlu0 %v72
    %v74 = vpop.xlane.xlu0 %73
    %v75 = vsel %vm58, %v71, 0.0
    %76 = vadd.xlane.f32.xlu0 %v75
    %v77 = vpop.xlane.xlu0 %76
    %v78 = vmul.f32 %v74, %v65
    %v79 = vmul.f32 %v77, %v65
    %v80 = vadd.f32 %v78, 1e-05
    %v81 = vadd.f32 %v79, 1e-05
    %v82 = vrsqrt.pop %v80
    %v83 = vrsqrt.pop %v81
    %v84 = vmul.f32 %v68, %v82
    %v85 = vmul.f32 %v69, %v83
    %v87 = vlaneseq
    %v88 = vshrl.u32 %v87, 7
    %v89 = vsub.s32 0, %v88
    %v90 = vrot.slane %v56, %v89
    %v92 = vmul.f32 %v84, %v90
    %v93 = vmul.f32 %v85, %v90
    %v95 = vlaneseq
    %v96 = vshrl.u32 %v95, 7
    %v97 = vsub.s32 0, %v96
    %v98 = vrot.slane %v57, %v97
    %v100 = vadd.f32 %v92, %v98
    %v101 = vadd.f32 %v93, %v98
    %102 = vst.msk [vmem:[#allocation8] sm:$0xff] %vm58, %v100
    %103 = vst.msk [vmem:[#allocation8 + $0x8] sm:$0xff] %vm58, %v101
    // Predicated region
    $region26: #{conformer_encoder.19} parent=1 // pred_check
      _
    $region27: #{conformer_encoder.19} parent=1 // pred_check_branch
      %105 = sbr.rel (0) target = $region29
    $region28: #{conformer_encoder.19} parent=1 // pred_region
      %s107 = ssub.s32 256, 256
      %108 = vsyncadd [#allocation4], %s107
      %s109 = sshll.u32 [#allocation8], 4
      %s110 = int_to_ptr.vmem [resolvable:$true] %s109
      %115 = dma.vmem_to_hbm [thread:$0]  %s110, 256, %s3, [#allocation4], 128, 128, 8
    $region29: #{conformer_encoder.19} parent=1 // pred_fallthru
      _
    // Predicated region
    $region30: #{conformer_encoder.19} parent=1 // pred_check
      _
    $region31: #{conformer_encoder.19} parent=1 // pred_check_branch
      %117 = sbr.rel (0) target = $region33
    $region32: #{conformer_encoder.19} parent=1 // pred_region
      %118 = dma.done [#allocation4], 256
    $region33: #{conformer_encoder.19} parent=1 // pred_fallthru
      _
    %119 = vsyncpa [#allocation3], 1
    %120 = vsyncpa [#allocation6], 1
    %121 = vsyncpa [#allocation4], 1

</llo_original>
